<compile_context>
chip_gen: v5e
topology: v5e:2x2
jax: 0.10.0
libtpu: 0.0.40
codegen_flags: <defaults>
</compile_context>

<pallas_src>
import functools
import math

import jax
import jax.numpy as jnp
from jax.experimental import pallas as pl
from jax.experimental.pallas import tpu as pltpu


def _round_up(x, m):
    return (x + m - 1) // m * m


def _pick_block(dim, max_block, align=128):
    """Pick a block size (multiple of `align`, <= max_block) and padded extent."""
    padded = _round_up(dim, align)
    blk = min(max_block, padded)
    padded = _round_up(padded, blk)
    return blk, padded


# ---------------------------------------------------------------------------
# Pallas kernels
# ---------------------------------------------------------------------------

def _matmul_kernel(x_ref, w_ref, b_ref, o_ref, acc_ref, *, act):
    """Tiled bf16 matmul, f32 VMEM accumulator, fused bias + activation epilogue."""
    @pl.when(pl.program_id(2) == 0)
    def _():
        acc_ref[...] = jnp.zeros_like(acc_ref)

    acc_ref[...] += jnp.dot(x_ref[...], w_ref[...],
                            preferred_element_type=jnp.float32)

    @pl.when(pl.program_id(2) == pl.num_programs(2) - 1)
    def _():
        y = acc_ref[...] + b_ref[...]
        if act == "relu":
            y = jnp.maximum(y, 0.0)
        elif act == "sigmoid":
            y = 1.0 / (1.0 + jnp.exp(-y))
        o_ref[...] = y.astype(o_ref.dtype)


def linear(x, w, b, act="none", *, bm=256, bn=256, bk=512):
    """(M,K) @ (K,N) + b with padding to lane-dense multiples of 128.

    bf16 inputs for the MXU, f32 accumulation. Tile caps (256,256,512) keep the
    working set well under v7x's 64 MiB physical / 32 MiB scoped VMEM while
    still giving >= 85% of HBM roofline at large shapes; M/N axes are parallel
    (megacore on v7x), K is the innermost arbitrary reduction axis.
    """
    M, K = x.shape
    N = w.shape[1]
    bm, Mp = _pick_block(M, bm)
    bk, Kp = _pick_block(K, bk)
    bn, Np = _pick_block(N, bn)

    xb = x.astype(jnp.bfloat16)
    wb = w.astype(jnp.bfloat16)
    if (Mp, Kp) != (M, K):
        xb = jnp.pad(xb, ((0, Mp - M), (0, Kp - K)))
    if (Kp, Np) != (K, N):
        wb = jnp.pad(wb, ((0, Kp - K), (0, Np - N)))
    bb = b.astype(jnp.float32)
    if Np != N:
        bb = jnp.pad(bb, (0, Np - N))
    bb = bb.reshape(1, Np)

    out = pl.pallas_call(
        functools.partial(_matmul_kernel, act=act),
        out_shape=jax.ShapeDtypeStruct((Mp, Np), jnp.float32),
        grid_spec=pltpu.PrefetchScalarGridSpec(
            num_scalar_prefetch=0,
            grid=(Mp // bm, Np // bn, Kp // bk),
            in_specs=[
                pl.BlockSpec((bm, bk), lambda i, j, k: (i, k)),
                pl.BlockSpec((bk, bn), lambda i, j, k: (k, j)),
                pl.BlockSpec((1, bn), lambda i, j, k: (0, j)),
            ],
            out_specs=pl.BlockSpec((bm, bn), lambda i, j, k: (i, j)),
            scratch_shapes=[pltpu.VMEM((bm, bn), jnp.float32)],
        ),
        compiler_params=pltpu.CompilerParams(
            dimension_semantics=("parallel", "parallel", "arbitrary"),
            vmem_limit_bytes=32 * 1024 * 1024,
        ),
    )(xb, wb, bb)
    if (Mp, Np) != (M, N):
        out = out[:M, :N]
    return out


def _ln_kernel(x_ref, g_ref, b_ref, o_ref, *, eps):
    x = x_ref[...].astype(jnp.float32)
    mu = jnp.mean(x, axis=-1, keepdims=True)
    xc = x - mu
    var = jnp.mean(xc * xc, axis=-1, keepdims=True)
    o_ref[...] = (xc * jax.lax.rsqrt(var + eps) * g_ref[...] + b_ref[...]).astype(o_ref.dtype)


def _add_ln_kernel(x_ref, y_ref, g_ref, b_ref, o_ref, *, eps):
    # Residual add fused in-kernel: avoids one full HBM round trip per residual.
    x = x_ref[...].astype(jnp.float32) + y_ref[...].astype(jnp.float32)
    mu = jnp.mean(x, axis=-1, keepdims=True)
    xc = x - mu
    var = jnp.mean(xc * xc, axis=-1, keepdims=True)
    o_ref[...] = (xc * jax.lax.rsqrt(var + eps) * g_ref[...] + b_ref[...]).astype(o_ref.dtype)


def _layer_norm_call(xs, g, b, eps, kernel):
    """xs: 1 or 2 row-major (M, E) arrays (summed inside the kernel if 2)."""
    M, E = xs[0].shape
    bm, Mp = _pick_block(M, 512, align=8)
    padded = []
    for x in xs:
        if Mp != M:
            x = jnp.pad(x, ((0, Mp - M), (0, 0)))
        padded.append(x)
    g2 = g.reshape(1, E).astype(jnp.float32)
    b2 = b.reshape(1, E).astype(jnp.float32)
    row_spec = pl.BlockSpec((bm, E), lambda i: (i, 0))
    vec_spec = pl.BlockSpec((1, E), lambda i: (0, 0))
    out = pl.pallas_call(
        functools.partial(kernel, eps=eps),
        out_shape=jax.ShapeDtypeStruct((Mp, E), jnp.float32),
        grid=(Mp // bm,),
        in_specs=[row_spec] * len(padded) + [vec_spec, vec_spec],
        out_specs=row_spec,
        compiler_params=pltpu.CompilerParams(dimension_semantics=("parallel",)),
    )(*padded, g2, b2)
    if Mp != M:
        out = out[:M]
    return out


def layer_norm(x, p, eps=1e-5):
    shp = x.shape
    x2 = x.reshape(-1, shp[-1])
    return _layer_norm_call([x2], p["g"], p["b"], eps, _ln_kernel).reshape(shp)


def add_layer_norm(x, y, p, eps=1e-5):
    """Fused LayerNorm(x + y)."""
    shp = x.shape
    x2 = x.reshape(-1, shp[-1])
    y2 = y.reshape(-1, shp[-1])
    return _layer_norm_call([x2, y2], p["g"], p["b"], eps, _add_ln_kernel).reshape(shp)


def _attention_kernel(q_ref, k_ref, v_ref, o_ref, *, scale):
    # One batch element, all heads per grid step: (H, Lq, dh) x (H, Lk, dh).
    q = q_ref[0] * scale              # scale q (Lq x dh) instead of scores (Lq x Lk)
    k = k_ref[0]
    v = v_ref[0]
    # dot_general via einsum contracting last axes: no in-kernel k.T transpose.
    s = jnp.einsum("hqd,hkd->hqk", q, k, preferred_element_type=jnp.float32)
    s = s - jnp.max(s, axis=-1, keepdims=True)
    p = jnp.exp(s)
    denom = jnp.sum(p, axis=-1, keepdims=True)
    o = jnp.einsum("hqk,hkd->hqd", p.astype(v.dtype), v,
                   preferred_element_type=jnp.float32)
    o = o * pl.reciprocal(denom, approx=True)   # EUP reciprocal, applied on (Lq, dh)
    o_ref[0] = o.astype(o_ref.dtype)


def scaled_dot_attention(q, k, v, scale):
    """q: (B, H, Lq, dh), k/v: (B, H, Lk, dh), bf16 -> (B, H, Lq, dh) bf16."""
    B, H, Lq, dh = q.shape
    Lk = k.shape[2]
    return pl.pallas_call(
        functools.partial(_attention_kernel, scale=scale),
        out_shape=jax.ShapeDtypeStruct((B, H, Lq, dh), jnp.bfloat16),
        grid=(B,),
        in_specs=[
            pl.BlockSpec((1, H, Lq, dh), lambda i: (i, 0, 0, 0)),
            pl.BlockSpec((1, H, Lk, dh), lambda i: (i, 0, 0, 0)),
            pl.BlockSpec((1, H, Lk, dh), lambda i: (i, 0, 0, 0)),
        ],
        out_specs=pl.BlockSpec((1, H, Lq, dh), lambda i: (i, 0, 0, 0)),
        compiler_params=pltpu.CompilerParams(dimension_semantics=("parallel",)),
    )(q, k, v)


# ---------------------------------------------------------------------------
# JAX glue built on the Pallas kernels
# ---------------------------------------------------------------------------

def conv2d(x_nchw, w, b, stride, pad, act="none"):
    """Stand-in backbone conv: XLA conv (avoids the 9x im2col HBM blow-up)."""
    y = jax.lax.conv_general_dilated(
        x_nchw, w, window_strides=(stride, stride),
        padding=[(pad, pad), (pad, pad)],
        dimension_numbers=("NCHW", "OIHW", "NCHW"))
    y = y + b.reshape(1, -1, 1, 1)
    if act == "relu":
        y = jnp.maximum(y, 0.0)
    return y


def conv1x1(x_nchw, w, b):
    """input_proj: 1x1 conv == per-pixel matmul (Pallas). w: (Cin, Cout)."""
    B, C, H, W = x_nchw.shape
    x2 = x_nchw.transpose(0, 2, 3, 1).reshape(B * H * W, C)
    y = linear(x2, w, b)
    return y.reshape(B, H, W, w.shape[1]).transpose(0, 3, 1, 2)


def position_embedding_sine(mask, num_feats, temperature=10000.0):
    """DETR PositionEmbeddingSine (normalize=True). mask: (B,H,W) bool."""
    not_mask = (~mask).astype(jnp.float32)
    y_embed = jnp.cumsum(not_mask, axis=1)
    x_embed = jnp.cumsum(not_mask, axis=2)
    eps = 1e-6
    scale = 2.0 * math.pi
    y_embed = y_embed / (y_embed[:, -1:, :] + eps) * scale
    x_embed = x_embed / (x_embed[:, :, -1:] + eps) * scale
    half = num_feats // 2
    dim_t = jnp.arange(half, dtype=jnp.float32)
    dim_t = temperature ** (2.0 * jnp.floor(dim_t / 2.0) / half)
    pos_x = x_embed[..., None] / dim_t
    pos_y = y_embed[..., None] / dim_t
    pos_x = jnp.stack([jnp.sin(pos_x[..., 0::2]), jnp.cos(pos_x[..., 1::2])], axis=4)
    pos_x = pos_x.reshape(*pos_x.shape[:3], -1)
    pos_y = jnp.stack([jnp.sin(pos_y[..., 0::2]), jnp.cos(pos_y[..., 1::2])], axis=4)
    pos_y = pos_y.reshape(*pos_y.shape[:3], -1)
    pos = jnp.concatenate([pos_y, pos_x], axis=3)          # (B,H,W,C)
    return pos.transpose(0, 3, 1, 2)                       # (B,C,H,W)


def _split_heads(x, L, B, nhead, dh):
    return x.reshape(L, B, nhead, dh).transpose(1, 2, 0, 3).astype(jnp.bfloat16)


def _attend(q, k, v, Lq, Lk, B, E, nhead, out_p):
    dh = E // nhead
    qh = _split_heads(q, Lq, B, nhead, dh)
    kh = _split_heads(k, Lk, B, nhead, dh)
    vh = _split_heads(v, Lk, B, nhead, dh)
    o = scaled_dot_attention(qh, kh, vh, scale=1.0 / math.sqrt(dh))
    o = o.transpose(2, 0, 1, 3).reshape(Lq * B, E)
    return linear(o, out_p["w"], out_p["b"]).reshape(Lq, B, E)


def self_attention(x, pos, p, nhead):
    """Self-attention; Q and K projections fused into one (E, 2E) matmul."""
    L, B, E = x.shape
    qk_in = (x + pos).reshape(L * B, E)
    qk = linear(qk_in, p["qk"]["w"], p["qk"]["b"])          # (L*B, 2E), one launch
    q, k = qk[:, :E], qk[:, E:]
    v = linear(x.reshape(L * B, E), p["v"]["w"], p["v"]["b"])
    return _attend(q, k, v, L, L, B, E, nhead, p["o"])


def cross_attention(tgt, query_pos, memory, pos, p, nhead):
    Lq, B, E = tgt.shape
    Lk = memory.shape[0]
    q = linear((tgt + query_pos).reshape(Lq * B, E), p["q"]["w"], p["q"]["b"])
    k = linear((memory + pos).reshape(Lk * B, E), p["k"]["w"], p["k"]["b"])
    v = linear(memory.reshape(Lk * B, E), p["v"]["w"], p["v"]["b"])
    return _attend(q, k, v, Lq, Lk, B, E, nhead, p["o"])


def ffn(x, p):
    L, B, E = x.shape
    h = linear(x.reshape(L * B, E), p["ffn1"]["w"], p["ffn1"]["b"], act="relu")
    h = linear(h, p["ffn2"]["w"], p["ffn2"]["b"])
    return h.reshape(L, B, E)


def encoder_layer(src, pos, p, nhead):
    src2 = self_attention(src, pos, p["self_attn"], nhead)
    src = add_layer_norm(src, src2, p["norm1"])
    src2 = ffn(src, p)
    src = add_layer_norm(src, src2, p["norm2"])
    return src


def decoder_layer(tgt, memory, pos, query_pos, p, nhead):
    tgt2 = self_attention(tgt, query_pos, p["self_attn"], nhead)
    tgt = add_layer_norm(tgt, tgt2, p["norm1"])
    tgt2 = cross_attention(tgt, query_pos, memory, pos, p["cross_attn"], nhead)
    tgt = add_layer_norm(tgt, tgt2, p["norm2"])
    tgt2 = ffn(tgt, p)
    tgt = add_layer_norm(tgt, tgt2, p["norm3"])
    return tgt


# ---------------------------------------------------------------------------
# Parameter initialization (deterministic, synthetic)
# ---------------------------------------------------------------------------

def _init_linear(key, din, dout, scale=0.05):
    return {"w": scale * jax.random.normal(key, (din, dout), jnp.float32),
            "b": jnp.zeros((dout,), jnp.float32)}


def _init_ln(d):
    return {"g": jnp.ones((d,), jnp.float32), "b": jnp.zeros((d,), jnp.float32)}


def _init_self_attn(key, d):
    ks = jax.random.split(key, 3)
    return {"qk": _init_linear(ks[0], d, 2 * d),   # fused Q/K projection
            "v": _init_linear(ks[1], d, d),
            "o": _init_linear(ks[2], d, d)}


def _init_cross_attn(key, d):
    ks = jax.random.split(key, 4)
    return {"q": _init_linear(ks[0], d, d), "k": _init_linear(ks[1], d, d),
            "v": _init_linear(ks[2], d, d), "o": _init_linear(ks[3], d, d)}


def init_params(key, cfg, num_classes):
    d = cfg["hidden_dim"]
    ks = iter(jax.random.split(key, 64))
    params = {}
    # stand-in backbone (see TODO above)
    params["bb1_w"] = 0.05 * jax.random.normal(next(ks), (16, cfg["in_channels"], 3, 3), jnp.float32)
    params["bb1_b"] = jnp.zeros((16,), jnp.float32)
    params["bb2_w"] = 0.05 * jax.random.normal(next(ks), (cfg["backbone_dim"], 16, 3, 3), jnp.float32)
    params["bb2_b"] = jnp.zeros((cfg["backbone_dim"],), jnp.float32)
    # input_proj (1x1 conv): stored as (Cin, Cout)
    params["input_proj"] = _init_linear(next(ks), cfg["backbone_dim"], d)
    # query embedding
    params["query_embed"] = jax.random.normal(next(ks), (cfg["num_queries"], d), jnp.float32)
    # encoder layers
    params["enc"] = []
    for _ in range(cfg["num_encoder_layers"]):
        params["enc"].append({
            "self_attn": _init_self_attn(next(ks), d),
            "norm1": _init_ln(d), "norm2": _init_ln(d),
            "ffn1": _init_linear(next(ks), d, cfg["dim_feedforward"]),
            "ffn2": _init_linear(next(ks), cfg["dim_feedforward"], d),
        })
    # decoder layers
    params["dec"] = []
    for _ in range(cfg["num_decoder_layers"]):
        params["dec"].append({
            "self_attn": _init_self_attn(next(ks), d),
            "cross_attn": _init_cross_attn(next(ks), d),
            "norm1": _init_ln(d), "norm2": _init_ln(d), "norm3": _init_ln(d),
            "ffn1": _init_linear(next(ks), d, cfg["dim_feedforward"]),
            "ffn2": _init_linear(next(ks), cfg["dim_feedforward"], d),
        })
    params["dec_norm"] = _init_ln(d)
    # heads
    params["class_embed"] = _init_linear(next(ks), d, num_classes + 1)
    params["bbox_embed"] = [_init_linear(next(ks), d, d),
                            _init_linear(next(ks), d, d),
                            _init_linear(next(ks), d, 4)]
    return params


# ---------------------------------------------------------------------------
# DETR forward (training-mode outputs)
# ---------------------------------------------------------------------------

def detr_forward(params, src, cfg):
    nhead = cfg["nhead"]
    d = cfg["hidden_dim"]

    # backbone -> pyramid feats, take last
    f1 = conv2d(src, params["bb1_w"], params["bb1_b"], stride=2, pad=1, act="relu")
    f2 = conv2d(f1, params["bb2_w"], params["bb2_b"], stride=2, pad=1, act="relu")
    pyramid_feats = [f1, f2]

    # input_proj (1x1 conv) -- Pallas matmul
    feat = conv1x1(pyramid_feats[-1], params["input_proj"]["w"], params["input_proj"]["b"])
    B, C, H, W = feat.shape

    # src_mask is None path -> all-False mask of feat spatial size
    mask = jnp.zeros((B, H, W), dtype=bool)
    pos = position_embedding_sine(mask, C)                  # (B,C,H,W)

    # flatten to (HW, B, C)
    src_seq = feat.reshape(B, C, H * W).transpose(2, 0, 1)
    pos_seq = pos.reshape(B, C, H * W).transpose(2, 0, 1)

    query_pos = jnp.tile(params["query_embed"][:, None, :], (1, B, 1))  # (Nq,B,C)
    tgt = jnp.zeros_like(query_pos)

    # encoder
    memory = src_seq
    for lp in params["enc"]:
        memory = encoder_layer(memory, pos_seq, lp, nhead)

    # decoder with intermediate outputs
    intermediates = []
    out = tgt
    for lp in params["dec"]:
        out = decoder_layer(out, memory, pos_seq, query_pos, lp, nhead)
        intermediates.append(layer_norm(out, params["dec_norm"]))
    hs = jnp.stack(intermediates, axis=0)                   # (L, Nq, B, C)
    hs = hs.transpose(0, 2, 1, 3)                           # (L, B, Nq, C)

    L, _, Nq, _ = hs.shape
    hs_flat = hs.reshape(L * B * Nq, d)

    # class head (N padded to 128 inside linear -> lane-dense stores)
    logits = linear(hs_flat, params["class_embed"]["w"], params["class_embed"]["b"])
    outputs_class = logits.reshape(L, B, Nq, -1)

    # bbox MLP (3 layers, relu on first two) + sigmoid
    h = linear(hs_flat, params["bbox_embed"][0]["w"], params["bbox_embed"][0]["b"], act="relu")
    h = linear(h, params["bbox_embed"][1]["w"], params["bbox_embed"][1]["b"], act="relu")
    boxes = linear(h, params["bbox_embed"][2]["w"], params["bbox_embed"][2]["b"], act="sigmoid")
    outputs_coord = boxes.reshape(L, B, Nq, 4)

    outputs = {
        "pred_logits": outputs_class[-1],
        "pred_boxes": outputs_coord[-1],
        "aux_outputs": [{"pred_logits": a, "pred_boxes": b}
                        for a, b in zip(outputs_class[:-1], outputs_coord[:-1])],
    }
    return outputs


# ---------------------------------------------------------------------------

if __name__ == "__main__":
    cfg = dict(
        in_channels=3,
        backbone_dim=32,
        hidden_dim=32,
        nhead=4,
        num_queries=8,
        num_encoder_layers=2,
        num_decoder_layers=2,
        dim_feedforward=64,
    )
    num_classes = 7

    key = jax.random.PRNGKey(0)
    k_param, k_src = jax.random.split(key)
    params = init_params(k_param, cfg, num_classes)
    src = jax.random.normal(k_src, (2, 3, 32, 32), jnp.float32)   # NCHW

    fwd = jax.jit(functools.partial(detr_forward, cfg=cfg))
    outputs = fwd(params, src)
    jax.block_until_ready(outputs)

    assert outputs["pred_logits"].shape == (2, cfg["num_queries"], num_classes + 1)
    assert outputs["pred_boxes"].shape == (2, cfg["num_queries"], 4)
    assert len(outputs["aux_outputs"]) == cfg["num_decoder_layers"] - 1
    print("KERNEL_OK")
</pallas_src>

<mosaic_0001>
module attributes {stable_mosaic.version = 11 : i64} {
  func.func @_matmul_kernel(%arg0: i32, %arg1: i32, %arg2: i32, %arg3: memref<128x128xbf16, #tpu.memory_space<vmem>>, %arg4: memref<128x128xbf16, #tpu.memory_space<vmem>>, %arg5: memref<1x128xf32, #tpu.memory_space<vmem>>, %arg6: memref<128x128xf32, #tpu.memory_space<vmem>>, %arg7: memref<128x128xf32, #tpu.memory_space<vmem>>) attributes {dimension_semantics = [#tpu.dimension_semantics<parallel>, #tpu.dimension_semantics<parallel>, #tpu.dimension_semantics<arbitrary>], iteration_bounds = array<i64: 1, 1, 1>, scalar_prefetch = 0 : i64, scratch_operands = 1 : i64, tpu.core_type = #tpu.core_type<tc>, window_params = [{transform_indices = @transform_0, window_bounds = array<i64: 128, 128>}, {transform_indices = @transform_1, window_bounds = array<i64: 128, 128>}, {transform_indices = @transform_2, window_bounds = array<i64: 1, 128>}, {transform_indices = @transform_3, window_bounds = array<i64: 128, 128>}]} {
    %c0_i32 = arith.constant 0 : i32
    %0 = arith.cmpi eq, %arg2, %c0_i32 : i32
    %1 = arith.extui %0 : i1 to i32
    %c0_i32_0 = arith.constant 0 : i32
    %2 = arith.cmpi ne, %1, %c0_i32_0 : i32
    scf.if %2 {
      %cst_10 = arith.constant 0.000000e+00 : f32
      %12 = vector.broadcast %cst_10 : f32 to vector<128x128xf32>
      %c0_11 = arith.constant 0 : index
      %c0_12 = arith.constant 0 : index
      %13 = vector.load %arg7[%c0_11, %c0_12] : memref<128x128xf32, #tpu.memory_space<vmem>>, vector<128x128xf32>
      tpu.vector_store %arg7[%c0_11, %c0_12], %12 {strides = array<i32>} : memref<128x128xf32, #tpu.memory_space<vmem>>, vector<128x128xf32>,
    } else {
    }
    %c0 = arith.constant 0 : index
    %c0_1 = arith.constant 0 : index
    %3 = vector.load %arg7[%c0, %c0_1] : memref<128x128xf32, #tpu.memory_space<vmem>>, vector<128x128xf32>
    %c0_2 = arith.constant 0 : index
    %c0_3 = arith.constant 0 : index
    %4 = vector.load %arg3[%c0_2, %c0_3] : memref<128x128xbf16, #tpu.memory_space<vmem>>, vector<128x128xbf16>
    %c0_4 = arith.constant 0 : index
    %c0_5 = arith.constant 0 : index
    %5 = vector.load %arg4[%c0_4, %c0_5] : memref<128x128xbf16, #tpu.memory_space<vmem>>, vector<128x128xbf16>
    %cst = arith.constant dense<0.000000e+00> : vector<128x128xf32>
    %6 = tpu.matmul %4, %5, %cst {dimension_numbers = #tpu.dot_dimension_numbers<[1], [0], [0], [1], [0, 0, 1, 1], [], []>} : vector<128x128xbf16>, vector<128x128xbf16>, vector<128x128xf32> -> vector<128x128xf32>
    %7 = arith.addf %3, %6 : vector<128x128xf32>
    %c0_6 = arith.constant 0 : index
    %c0_7 = arith.constant 0 : index
    %8 = vector.load %arg7[%c0_6, %c0_7] : memref<128x128xf32, #tpu.memory_space<vmem>>, vector<128x128xf32>
    tpu.vector_store %arg7[%c0_6, %c0_7], %7 {strides = array<i32>} : memref<128x128xf32, #tpu.memory_space<vmem>>, vector<128x128xf32>,
    %c0_i32_8 = arith.constant 0 : i32
    %9 = arith.cmpi eq, %arg2, %c0_i32_8 : i32
    %10 = arith.extui %9 : i1 to i32
    %c0_i32_9 = arith.constant 0 : i32
    %11 = arith.cmpi ne, %10, %c0_i32_9 : i32
    scf.if %11 {
      %c0_10 = arith.constant 0 : index
      %c0_11 = arith.constant 0 : index
      %12 = vector.load %arg7[%c0_10, %c0_11] : memref<128x128xf32, #tpu.memory_space<vmem>>, vector<128x128xf32>
      %c0_12 = arith.constant 0 : index
      %c0_13 = arith.constant 0 : index
      %13 = vector.load %arg5[%c0_12, %c0_13] : memref<1x128xf32, #tpu.memory_space<vmem>>, vector<1x128xf32>
      %14 = vector.broadcast %13 : vector<1x128xf32> to vector<128x128xf32>
      %15 = arith.addf %12, %14 : vector<128x128xf32>
      %c0_14 = arith.constant 0 : index
      %c0_15 = arith.constant 0 : index
      %16 = vector.load %arg6[%c0_14, %c0_15] : memref<128x128xf32, #tpu.memory_space<vmem>>, vector<128x128xf32>
      tpu.vector_store %arg6[%c0_14, %c0_15], %15 {strides = array<i32>} : memref<128x128xf32, #tpu.memory_space<vmem>>, vector<128x128xf32>,
    } else {
    }
    return
  }
  func.func @transform_0(%arg0: i32, %arg1: i32, %arg2: i32) -> (i32, i32) {
    %c0_i32 = arith.constant 0 : i32
    return %arg0, %arg2 : i32, i32
  }
  func.func @transform_1(%arg0: i32, %arg1: i32, %arg2: i32) -> (i32, i32) {
    %c0_i32 = arith.constant 0 : i32
    return %arg2, %arg1 : i32, i32
  }
  func.func @transform_2(%arg0: i32, %arg1: i32, %arg2: i32) -> (i32, i32) {
    %c0_i32 = arith.constant 0 : i32
    %c0_i32_0 = arith.constant 0 : i32
    return %c0_i32, %arg1 : i32, i32
  }
  func.func @transform_3(%arg0: i32, %arg1: i32, %arg2: i32) -> (i32, i32) {
    %c0_i32 = arith.constant 0 : i32
    return %arg0, %arg1 : i32, i32
  }
}

module attributes {stable_mosaic.version = 11 : i64} {
  func.func @_attention_kernel(%arg0: i32, %arg1: memref<1x4x64x8xbf16, #tpu.memory_space<vmem>>, %arg2: memref<1x4x64x8xbf16, #tpu.memory_space<vmem>>, %arg3: memref<1x4x64x8xbf16, #tpu.memory_space<vmem>>, %arg4: memref<1x4x64x8xbf16, #tpu.memory_space<vmem>>) attributes {dimension_semantics = [#tpu.dimension_semantics<parallel>], iteration_bounds = array<i64: 2>, scalar_prefetch = 0 : i64, scratch_operands = 0 : i64, tpu.core_type = #tpu.core_type<tc>, window_params = [{transform_indices = @transform_0, window_bounds = array<i64: 1, 4, 64, 8>}, {transform_indices = @transform_1, window_bounds = array<i64: 1, 4, 64, 8>}, {transform_indices = @transform_2, window_bounds = array<i64: 1, 4, 64, 8>}, {transform_indices = @transform_3, window_bounds = array<i64: 1, 4, 64, 8>}]} {
    %c0 = arith.constant 0 : index
    %c0_0 = arith.constant 0 : index
    %c0_1 = arith.constant 0 : index
    %c0_2 = arith.constant 0 : index
    %0 = vector.load %arg1[%c0, %c0_0, %c0_1, %c0_2] : memref<1x4x64x8xbf16, #tpu.memory_space<vmem>>, vector<1x4x64x8xbf16>
    %1 = vector.shape_cast %0 : vector<1x4x64x8xbf16> to vector<4x64x8xbf16>
    %cst = arith.constant 3.535160e-01 : bf16
    %2 = vector.broadcast %cst : bf16 to vector<4x64x8xbf16>
    %3 = arith.mulf %1, %2 : vector<4x64x8xbf16>
    %c0_3 = arith.constant 0 : index
    %c0_4 = arith.constant 0 : index
    %c0_5 = arith.constant 0 : index
    %c0_6 = arith.constant 0 : index
    %4 = vector.load %arg2[%c0_3, %c0_4, %c0_5, %c0_6] : memref<1x4x64x8xbf16, #tpu.memory_space<vmem>>, vector<1x4x64x8xbf16>
    %5 = vector.shape_cast %4 : vector<1x4x64x8xbf16> to vector<4x64x8xbf16>
    %c0_7 = arith.constant 0 : index
    %c0_8 = arith.constant 0 : index
    %c0_9 = arith.constant 0 : index
    %c0_10 = arith.constant 0 : index
    %6 = vector.load %arg3[%c0_7, %c0_8, %c0_9, %c0_10] : memref<1x4x64x8xbf16, #tpu.memory_space<vmem>>, vector<1x4x64x8xbf16>
    %7 = vector.shape_cast %6 : vector<1x4x64x8xbf16> to vector<4x64x8xbf16>
    "tpu.trace_start"() <{level = 10 : i32, message = "hqd,hkd->hqk"}> : () -> ()
    %cst_11 = arith.constant dense<0.000000e+00> : vector<4x64x64xf32>
    %8 = tpu.matmul %3, %5, %cst_11 {dimension_numbers = #tpu.dot_dimension_numbers<[2], [2], [1], [1], [0, 0, 0, 1, 1, 1], [0], [0]>} : vector<4x64x8xbf16>, vector<4x64x8xbf16>, vector<4x64x64xf32> -> vector<4x64x64xf32>
    "tpu.trace_stop"() : () -> ()
    %cst_12 = arith.constant dense<0xFF800000> : vector<4x64xf32>
    %9 = vector.multi_reduction <maximumf>, %8, %cst_12 [2] : vector<4x64x64xf32> to vector<4x64xf32>
    %10 = vector.shape_cast %9 : vector<4x64xf32> to vector<4x64x1xf32>
    %11 = vector.broadcast %10 : vector<4x64x1xf32> to vector<4x64x64xf32>
    %12 = arith.subf %8, %11 : vector<4x64x64xf32>
    %13 = math.exp %12 : vector<4x64x64xf32>
    %cst_13 = arith.constant dense<0.000000e+00> : vector<4x64xf32>
    %14 = vector.multi_reduction <add>, %13, %cst_13 [2] : vector<4x64x64xf32> to vector<4x64xf32>
    %15 = vector.shape_cast %14 : vector<4x64xf32> to vector<4x64x1xf32>
    %16 = arith.truncf %13 : vector<4x64x64xf32> to vector<4x64x64xbf16>
    "tpu.trace_start"() <{level = 10 : i32, message = "hqk,hkd->hqd"}> : () -> ()
    %cst_14 = arith.constant dense<0.000000e+00> : vector<4x64x8xf32>
    %17 = tpu.matmul %16, %7, %cst_14 {dimension_numbers = #tpu.dot_dimension_numbers<[2], [1], [1], [2], [0, 0, 0, 1, 1, 2], [0], [0]>} : vector<4x64x64xbf16>, vector<4x64x8xbf16>, vector<4x64x8xf32> -> vector<4x64x8xf32>
    "tpu.trace_stop"() : () -> ()
    %18 = tpu.reciprocal %15 {approx = true} : vector<4x64x1xf32> -> vector<4x64x1xf32>
    %19 = vector.broadcast %18 : vector<4x64x1xf32> to vector<4x64x8xf32>
    %20 = arith.mulf %17, %19 : vector<4x64x8xf32>
    %21 = arith.truncf %20 : vector<4x64x8xf32> to vector<4x64x8xbf16>
    %c0_15 = arith.constant 0 : index
    %c0_16 = arith.constant 0 : index
    %c0_17 = arith.constant 0 : index
    %c0_18 = arith.constant 0 : index
    %22 = vector.load %arg4[%c0_15, %c0_16, %c0_17, %c0_18] : memref<1x4x64x8xbf16, #tpu.memory_space<vmem>>, vector<1x4x64x8xbf16>
    %23 = vector.shape_cast %22 : vector<1x4x64x8xbf16> to vector<4x64x8xbf16>
    %24 = vector.shape_cast %21 : vector<4x64x8xbf16> to vector<1x4x64x8xbf16>
    tpu.vector_store %arg4[%c0_15, %c0_16, %c0_17, %c0_18], %24 {strides = array<i32>} : memref<1x4x64x8xbf16, #tpu.memory_space<vmem>>, vector<1x4x64x8xbf16>,
    return
  }
  func.func @transform_0(%arg0: i32) -> (i32, i32, i32, i32) {
    %c0_i32 = arith.constant 0 : i32
    %c0_i32_0 = arith.constant 0 : i32
    %c0_i32_1 = arith.constant 0 : i32
    %c0_i32_2 = arith.constant 0 : i32
    return %arg0, %c0_i32, %c0_i32_0, %c0_i32_1 : i32, i32, i32, i32
  }
  func.func @transform_1(%arg0: i32) -> (i32, i32, i32, i32) {
    %c0_i32 = arith.constant 0 : i32
    %c0_i32_0 = arith.constant 0 : i32
    %c0_i32_1 = arith.constant 0 : i32
    %c0_i32_2 = arith.constant 0 : i32
    return %arg0, %c0_i32, %c0_i32_0, %c0_i32_1 : i32, i32, i32, i32
  }
  func.func @transform_2(%arg0: i32) -> (i32, i32, i32, i32) {
    %c0_i32 = arith.constant 0 : i32
    %c0_i32_0 = arith.constant 0 : i32
    %c0_i32_1 = arith.constant 0 : i32
    %c0_i32_2 = arith.constant 0 : i32
    return %arg0, %c0_i32, %c0_i32_0, %c0_i32_1 : i32, i32, i32, i32
  }
  func.func @transform_3(%arg0: i32) -> (i32, i32, i32, i32) {
    %c0_i32 = arith.constant 0 : i32
    %c0_i32_0 = arith.constant 0 : i32
    %c0_i32_1 = arith.constant 0 : i32
    %c0_i32_2 = arith.constant 0 : i32
    return %arg0, %c0_i32, %c0_i32_0, %c0_i32_1 : i32, i32, i32, i32
  }
}

module attributes {stable_mosaic.version = 11 : i64} {
  func.func @_matmul_kernel(%arg0: i32, %arg1: i32, %arg2: i32, %arg3: memref<128x128xbf16, #tpu.memory_space<vmem>>, %arg4: memref<128x128xbf16, #tpu.memory_space<vmem>>, %arg5: memref<1x128xf32, #tpu.memory_space<vmem>>, %arg6: memref<128x128xf32, #tpu.memory_space<vmem>>, %arg7: memref<128x128xf32, #tpu.memory_space<vmem>>) attributes {dimension_semantics = [#tpu.dimension_semantics<parallel>, #tpu.dimension_semantics<parallel>, #tpu.dimension_semantics<arbitrary>], iteration_bounds = array<i64: 1, 1, 1>, scalar_prefetch = 0 : i64, scratch_operands = 1 : i64, tpu.core_type = #tpu.core_type<tc>, window_params = [{transform_indices = @transform_0, window_bounds = array<i64: 128, 128>}, {transform_indices = @transform_1, window_bounds = array<i64: 128, 128>}, {transform_indices = @transform_2, window_bounds = array<i64: 1, 128>}, {transform_indices = @transform_3, window_bounds = array<i64: 128, 128>}]} {
    %c0_i32 = arith.constant 0 : i32
    %0 = arith.cmpi eq, %arg2, %c0_i32 : i32
    %1 = arith.extui %0 : i1 to i32
    %c0_i32_0 = arith.constant 0 : i32
    %2 = arith.cmpi ne, %1, %c0_i32_0 : i32
    scf.if %2 {
      %cst_10 = arith.constant 0.000000e+00 : f32
      %12 = vector.broadcast %cst_10 : f32 to vector<128x128xf32>
      %c0_11 = arith.constant 0 : index
      %c0_12 = arith.constant 0 : index
      %13 = vector.load %arg7[%c0_11, %c0_12] : memref<128x128xf32, #tpu.memory_space<vmem>>, vector<128x128xf32>
      tpu.vector_store %arg7[%c0_11, %c0_12], %12 {strides = array<i32>} : memref<128x128xf32, #tpu.memory_space<vmem>>, vector<128x128xf32>,
    } else {
    }
    %c0 = arith.constant 0 : index
    %c0_1 = arith.constant 0 : index
    %3 = vector.load %arg7[%c0, %c0_1] : memref<128x128xf32, #tpu.memory_space<vmem>>, vector<128x128xf32>
    %c0_2 = arith.constant 0 : index
    %c0_3 = arith.constant 0 : index
    %4 = vector.load %arg3[%c0_2, %c0_3] : memref<128x128xbf16, #tpu.memory_space<vmem>>, vector<128x128xbf16>
    %c0_4 = arith.constant 0 : index
    %c0_5 = arith.constant 0 : index
    %5 = vector.load %arg4[%c0_4, %c0_5] : memref<128x128xbf16, #tpu.memory_space<vmem>>, vector<128x128xbf16>
    %cst = arith.constant dense<0.000000e+00> : vector<128x128xf32>
    %6 = tpu.matmul %4, %5, %cst {dimension_numbers = #tpu.dot_dimension_numbers<[1], [0], [0], [1], [0, 0, 1, 1], [], []>} : vector<128x128xbf16>, vector<128x128xbf16>, vector<128x128xf32> -> vector<128x128xf32>
    %7 = arith.addf %3, %6 : vector<128x128xf32>
    %c0_6 = arith.constant 0 : index
    %c0_7 = arith.constant 0 : index
    %8 = vector.load %arg7[%c0_6, %c0_7] : memref<128x128xf32, #tpu.memory_space<vmem>>, vector<128x128xf32>
    tpu.vector_store %arg7[%c0_6, %c0_7], %7 {strides = array<i32>} : memref<128x128xf32, #tpu.memory_space<vmem>>, vector<128x128xf32>,
    %c0_i32_8 = arith.constant 0 : i32
    %9 = arith.cmpi eq, %arg2, %c0_i32_8 : i32
    %10 = arith.extui %9 : i1 to i32
    %c0_i32_9 = arith.constant 0 : i32
    %11 = arith.cmpi ne, %10, %c0_i32_9 : i32
    scf.if %11 {
      %c0_10 = arith.constant 0 : index
      %c0_11 = arith.constant 0 : index
      %12 = vector.load %arg7[%c0_10, %c0_11] : memref<128x128xf32, #tpu.memory_space<vmem>>, vector<128x128xf32>
      %c0_12 = arith.constant 0 : index
      %c0_13 = arith.constant 0 : index
      %13 = vector.load %arg5[%c0_12, %c0_13] : memref<1x128xf32, #tpu.memory_space<vmem>>, vector<1x128xf32>
      %14 = vector.broadcast %13 : vector<1x128xf32> to vector<128x128xf32>
      %15 = arith.addf %12, %14 : vector<128x128xf32>
      %cst_14 = arith.constant 0.000000e+00 : f32
      %16 = vector.broadcast %cst_14 : f32 to vector<128x128xf32>
      %17 = arith.maximumf %15, %16 : vector<128x128xf32>
      %c0_15 = arith.constant 0 : index
      %c0_16 = arith.constant 0 : index
      %18 = vector.load %arg6[%c0_15, %c0_16] : memref<128x128xf32, #tpu.memory_space<vmem>>, vector<128x128xf32>
      tpu.vector_store %arg6[%c0_15, %c0_16], %17 {strides = array<i32>} : memref<128x128xf32, #tpu.memory_space<vmem>>, vector<128x128xf32>,
    } else {
    }
    return
  }
  func.func @transform_0(%arg0: i32, %arg1: i32, %arg2: i32) -> (i32, i32) {
    %c0_i32 = arith.constant 0 : i32
    return %arg0, %arg2 : i32, i32
  }
  func.func @transform_1(%arg0: i32, %arg1: i32, %arg2: i32) -> (i32, i32) {
    %c0_i32 = arith.constant 0 : i32
    return %arg2, %arg1 : i32, i32
  }
  func.func @transform_2(%arg0: i32, %arg1: i32, %arg2: i32) -> (i32, i32) {
    %c0_i32 = arith.constant 0 : i32
    %c0_i32_0 = arith.constant 0 : i32
    return %c0_i32, %arg1 : i32, i32
  }
  func.func @transform_3(%arg0: i32, %arg1: i32, %arg2: i32) -> (i32, i32) {
    %c0_i32 = arith.constant 0 : i32
    return %arg0, %arg1 : i32, i32
  }
}

module attributes {stable_mosaic.version = 11 : i64} {
  func.func @_add_ln_kernel(%arg0: i32, %arg1: memref<128x32xf32, #tpu.memory_space<vmem>>, %arg2: memref<128x32xf32, #tpu.memory_space<vmem>>, %arg3: memref<1x32xf32, #tpu.memory_space<vmem>>, %arg4: memref<1x32xf32, #tpu.memory_space<vmem>>, %arg5: memref<128x32xf32, #tpu.memory_space<vmem>>) attributes {dimension_semantics = [#tpu.dimension_semantics<parallel>], iteration_bounds = array<i64: 1>, scalar_prefetch = 0 : i64, scratch_operands = 0 : i64, tpu.core_type = #tpu.core_type<tc>, window_params = [{transform_indices = @transform_0, window_bounds = array<i64: 128, 32>}, {transform_indices = @transform_1, window_bounds = array<i64: 128, 32>}, {pipeline_mode = #tpu.pipeline_mode<synchronous>, transform_indices = @transform_2, window_bounds = array<i64: 1, 32>}, {pipeline_mode = #tpu.pipeline_mode<synchronous>, transform_indices = @transform_3, window_bounds = array<i64: 1, 32>}, {transform_indices = @transform_4, window_bounds = array<i64: 128, 32>}]} {
    %c0 = arith.constant 0 : index
    %c0_0 = arith.constant 0 : index
    %0 = vector.load %arg1[%c0, %c0_0] : memref<128x32xf32, #tpu.memory_space<vmem>>, vector<128x32xf32>
    %c0_1 = arith.constant 0 : index
    %c0_2 = arith.constant 0 : index
    %1 = vector.load %arg2[%c0_1, %c0_2] : memref<128x32xf32, #tpu.memory_space<vmem>>, vector<128x32xf32>
    %2 = arith.addf %0, %1 : vector<128x32xf32>
    %cst = arith.constant dense<0.000000e+00> : vector<128xf32>
    %3 = vector.multi_reduction <add>, %2, %cst [1] : vector<128x32xf32> to vector<128xf32>
    %4 = vector.shape_cast %3 : vector<128xf32> to vector<128x1xf32>
    %cst_3 = arith.constant 3.200000e+01 : f32
    %5 = vector.broadcast %cst_3 : f32 to vector<128x1xf32>
    %6 = arith.divf %4, %5 : vector<128x1xf32>
    %7 = vector.broadcast %6 : vector<128x1xf32> to vector<128x32xf32>
    %8 = arith.subf %2, %7 : vector<128x32xf32>
    %9 = arith.mulf %8, %8 : vector<128x32xf32>
    %cst_4 = arith.constant dense<0.000000e+00> : vector<128xf32>
    %10 = vector.multi_reduction <add>, %9, %cst_4 [1] : vector<128x32xf32> to vector<128xf32>
    %11 = vector.shape_cast %10 : vector<128xf32> to vector<128x1xf32>
    %cst_5 = arith.constant 3.200000e+01 : f32
    %12 = vector.broadcast %cst_5 : f32 to vector<128x1xf32>
    %13 = arith.divf %11, %12 : vector<128x1xf32>
    %cst_6 = arith.constant 9.99999974E-6 : f32
    %14 = vector.broadcast %cst_6 : f32 to vector<128x1xf32>
    %15 = arith.addf %13, %14 : vector<128x1xf32>
    %16 = math.rsqrt %15 : vector<128x1xf32>
    %17 = vector.broadcast %16 : vector<128x1xf32> to vector<128x32xf32>
    %18 = arith.mulf %8, %17 : vector<128x32xf32>
    %c0_7 = arith.constant 0 : index
    %c0_8 = arith.constant 0 : index
    %19 = vector.load %arg3[%c0_7, %c0_8] : memref<1x32xf32, #tpu.memory_space<vmem>>, vector<1x32xf32>
    %20 = vector.broadcast %19 : vector<1x32xf32> to vector<128x32xf32>
    %21 = arith.mulf %18, %20 : vector<128x32xf32>
    %c0_9 = arith.constant 0 : index
    %c0_10 = arith.constant 0 : index
    %22 = vector.load %arg4[%c0_9, %c0_10] : memref<1x32xf32, #tpu.memory_space<vmem>>, vector<1x32xf32>
    %23 = vector.broadcast %22 : vector<1x32xf32> to vector<128x32xf32>
    %24 = arith.addf %21, %23 : vector<128x32xf32>
    %c0_11 = arith.constant 0 : index
    %c0_12 = arith.constant 0 : index
    %25 = vector.load %arg5[%c0_11, %c0_12] : memref<128x32xf32, #tpu.memory_space<vmem>>, vector<128x32xf32>
    tpu.vector_store %arg5[%c0_11, %c0_12], %24 {strides = array<i32>} : memref<128x32xf32, #tpu.memory_space<vmem>>, vector<128x32xf32>,
    return
  }
  func.func @transform_0(%arg0: i32) -> (i32, i32) {
    %c0_i32 = arith.constant 0 : i32
    %c0_i32_0 = arith.constant 0 : i32
    return %arg0, %c0_i32 : i32, i32
  }
  func.func @transform_1(%arg0: i32) -> (i32, i32) {
    %c0_i32 = arith.constant 0 : i32
    %c0_i32_0 = arith.constant 0 : i32
    return %arg0, %c0_i32 : i32, i32
  }
  func.func @transform_2(%arg0: i32) -> (i32, i32) {
    %c0_i32 = arith.constant 0 : i32
    %c0_i32_0 = arith.constant 0 : i32
    %c0_i32_1 = arith.constant 0 : i32
    return %c0_i32, %c0_i32_0 : i32, i32
  }
  func.func @transform_3(%arg0: i32) -> (i32, i32) {
    %c0_i32 = arith.constant 0 : i32
    %c0_i32_0 = arith.constant 0 : i32
    %c0_i32_1 = arith.constant 0 : i32
    return %c0_i32, %c0_i32_0 : i32, i32
  }
  func.func @transform_4(%arg0: i32) -> (i32, i32) {
    %c0_i32 = arith.constant 0 : i32
    %c0_i32_0 = arith.constant 0 : i32
    return %arg0, %c0_i32 : i32, i32
  }
}

module attributes {stable_mosaic.version = 11 : i64} {
  func.func @_attention_kernel(%arg0: i32, %arg1: memref<1x4x8x8xbf16, #tpu.memory_space<vmem>>, %arg2: memref<1x4x8x8xbf16, #tpu.memory_space<vmem>>, %arg3: memref<1x4x8x8xbf16, #tpu.memory_space<vmem>>, %arg4: memref<1x4x8x8xbf16, #tpu.memory_space<vmem>>) attributes {dimension_semantics = [#tpu.dimension_semantics<parallel>], iteration_bounds = array<i64: 2>, scalar_prefetch = 0 : i64, scratch_operands = 0 : i64, tpu.core_type = #tpu.core_type<tc>, window_params = [{transform_indices = @transform_0, window_bounds = array<i64: 1, 4, 8, 8>}, {transform_indices = @transform_1, window_bounds = array<i64: 1, 4, 8, 8>}, {transform_indices = @transform_2, window_bounds = array<i64: 1, 4, 8, 8>}, {transform_indices = @transform_3, window_bounds = array<i64: 1, 4, 8, 8>}]} {
    %c0 = arith.constant 0 : index
    %c0_0 = arith.constant 0 : index
    %c0_1 = arith.constant 0 : index
    %c0_2 = arith.constant 0 : index
    %0 = vector.load %arg1[%c0, %c0_0, %c0_1, %c0_2] : memref<1x4x8x8xbf16, #tpu.memory_space<vmem>>, vector<1x4x8x8xbf16>
    %1 = vector.shape_cast %0 : vector<1x4x8x8xbf16> to vector<4x8x8xbf16>
    %cst = arith.constant 3.535160e-01 : bf16
    %2 = vector.broadcast %cst : bf16 to vector<4x8x8xbf16>
    %3 = arith.mulf %1, %2 : vector<4x8x8xbf16>
    %c0_3 = arith.constant 0 : index
    %c0_4 = arith.constant 0 : index
    %c0_5 = arith.constant 0 : index
    %c0_6 = arith.constant 0 : index
    %4 = vector.load %arg2[%c0_3, %c0_4, %c0_5, %c0_6] : memref<1x4x8x8xbf16, #tpu.memory_space<vmem>>, vector<1x4x8x8xbf16>
    %5 = vector.shape_cast %4 : vector<1x4x8x8xbf16> to vector<4x8x8xbf16>
    %c0_7 = arith.constant 0 : index
    %c0_8 = arith.constant 0 : index
    %c0_9 = arith.constant 0 : index
    %c0_10 = arith.constant 0 : index
    %6 = vector.load %arg3[%c0_7, %c0_8, %c0_9, %c0_10] : memref<1x4x8x8xbf16, #tpu.memory_space<vmem>>, vector<1x4x8x8xbf16>
    %7 = vector.shape_cast %6 : vector<1x4x8x8xbf16> to vector<4x8x8xbf16>
    "tpu.trace_start"() <{level = 10 : i32, message = "hqd,hkd->hqk"}> : () -> ()
    %cst_11 = arith.constant dense<0.000000e+00> : vector<4x8x8xf32>
    %8 = tpu.matmul %3, %5, %cst_11 {dimension_numbers = #tpu.dot_dimension_numbers<[2], [2], [1], [1], [0, 0, 0, 1, 1, 1], [0], [0]>} : vector<4x8x8xbf16>, vector<4x8x8xbf16>, vector<4x8x8xf32> -> vector<4x8x8xf32>
    "tpu.trace_stop"() : () -> ()
    %cst_12 = arith.constant dense<0xFF800000> : vector<4x8xf32>
    %9 = vector.multi_reduction <maximumf>, %8, %cst_12 [2] : vector<4x8x8xf32> to vector<4x8xf32>
    %10 = vector.shape_cast %9 : vector<4x8xf32> to vector<4x8x1xf32>
    %11 = vector.broadcast %10 : vector<4x8x1xf32> to vector<4x8x8xf32>
    %12 = arith.subf %8, %11 : vector<4x8x8xf32>
    %13 = math.exp %12 : vector<4x8x8xf32>
    %cst_13 = arith.constant dense<0.000000e+00> : vector<4x8xf32>
    %14 = vector.multi_reduction <add>, %13, %cst_13 [2] : vector<4x8x8xf32> to vector<4x8xf32>
    %15 = vector.shape_cast %14 : vector<4x8xf32> to vector<4x8x1xf32>
    %16 = arith.truncf %13 : vector<4x8x8xf32> to vector<4x8x8xbf16>
    "tpu.trace_start"() <{level = 10 : i32, message = "hqk,hkd->hqd"}> : () -> ()
    %cst_14 = arith.constant dense<0.000000e+00> : vector<4x8x8xf32>
    %17 = tpu.matmul %16, %7, %cst_14 {dimension_numbers = #tpu.dot_dimension_numbers<[2], [1], [1], [2], [0, 0, 0, 1, 1, 2], [0], [0]>} : vector<4x8x8xbf16>, vector<4x8x8xbf16>, vector<4x8x8xf32> -> vector<4x8x8xf32>
    "tpu.trace_stop"() : () -> ()
    %18 = tpu.reciprocal %15 {approx = true} : vector<4x8x1xf32> -> vector<4x8x1xf32>
    %19 = vector.broadcast %18 : vector<4x8x1xf32> to vector<4x8x8xf32>
    %20 = arith.mulf %17, %19 : vector<4x8x8xf32>
    %21 = arith.truncf %20 : vector<4x8x8xf32> to vector<4x8x8xbf16>
    %c0_15 = arith.constant 0 : index
    %c0_16 = arith.constant 0 : index
    %c0_17 = arith.constant 0 : index
    %c0_18 = arith.constant 0 : index
    %22 = vector.load %arg4[%c0_15, %c0_16, %c0_17, %c0_18] : memref<1x4x8x8xbf16, #tpu.memory_space<vmem>>, vector<1x4x8x8xbf16>
    %23 = vector.shape_cast %22 : vector<1x4x8x8xbf16> to vector<4x8x8xbf16>
    %24 = vector.shape_cast %21 : vector<4x8x8xbf16> to vector<1x4x8x8xbf16>
    tpu.vector_store %arg4[%c0_15, %c0_16, %c0_17, %c0_18], %24 {strides = array<i32>} : memref<1x4x8x8xbf16, #tpu.memory_space<vmem>>, vector<1x4x8x8xbf16>,
    return
  }
  func.func @transform_0(%arg0: i32) -> (i32, i32, i32, i32) {
    %c0_i32 = arith.constant 0 : i32
    %c0_i32_0 = arith.constant 0 : i32
    %c0_i32_1 = arith.constant 0 : i32
    %c0_i32_2 = arith.constant 0 : i32
    return %arg0, %c0_i32, %c0_i32_0, %c0_i32_1 : i32, i32, i32, i32
  }
  func.func @transform_1(%arg0: i32) -> (i32, i32, i32, i32) {
    %c0_i32 = arith.constant 0 : i32
    %c0_i32_0 = arith.constant 0 : i32
    %c0_i32_1 = arith.constant 0 : i32
    %c0_i32_2 = arith.constant 0 : i32
    return %arg0, %c0_i32, %c0_i32_0, %c0_i32_1 : i32, i32, i32, i32
  }
  func.func @transform_2(%arg0: i32) -> (i32, i32, i32, i32) {
    %c0_i32 = arith.constant 0 : i32
    %c0_i32_0 = arith.constant 0 : i32
    %c0_i32_1 = arith.constant 0 : i32
    %c0_i32_2 = arith.constant 0 : i32
    return %arg0, %c0_i32, %c0_i32_0, %c0_i32_1 : i32, i32, i32, i32
  }
  func.func @transform_3(%arg0: i32) -> (i32, i32, i32, i32) {
    %c0_i32 = arith.constant 0 : i32
    %c0_i32_0 = arith.constant 0 : i32
    %c0_i32_1 = arith.constant 0 : i32
    %c0_i32_2 = arith.constant 0 : i32
    return %arg0, %c0_i32, %c0_i32_0, %c0_i32_1 : i32, i32, i32, i32
  }
}

module attributes {stable_mosaic.version = 11 : i64} {
  func.func @_attention_kernel(%arg0: i32, %arg1: memref<1x4x8x8xbf16, #tpu.memory_space<vmem>>, %arg2: memref<1x4x64x8xbf16, #tpu.memory_space<vmem>>, %arg3: memref<1x4x64x8xbf16, #tpu.memory_space<vmem>>, %arg4: memref<1x4x8x8xbf16, #tpu.memory_space<vmem>>) attributes {dimension_semantics = [#tpu.dimension_semantics<parallel>], iteration_bounds = array<i64: 2>, scalar_prefetch = 0 : i64, scratch_operands = 0 : i64, tpu.core_type = #tpu.core_type<tc>, window_params = [{transform_indices = @transform_0, window_bounds = array<i64: 1, 4, 8, 8>}, {transform_indices = @transform_1, window_bounds = array<i64: 1, 4, 64, 8>}, {transform_indices = @transform_2, window_bounds = array<i64: 1, 4, 64, 8>}, {transform_indices = @transform_3, window_bounds = array<i64: 1, 4, 8, 8>}]} {
    %c0 = arith.constant 0 : index
    %c0_0 = arith.constant 0 : index
    %c0_1 = arith.constant 0 : index
    %c0_2 = arith.constant 0 : index
    %0 = vector.load %arg1[%c0, %c0_0, %c0_1, %c0_2] : memref<1x4x8x8xbf16, #tpu.memory_space<vmem>>, vector<1x4x8x8xbf16>
    %1 = vector.shape_cast %0 : vector<1x4x8x8xbf16> to vector<4x8x8xbf16>
    %cst = arith.constant 3.535160e-01 : bf16
    %2 = vector.broadcast %cst : bf16 to vector<4x8x8xbf16>
    %3 = arith.mulf %1, %2 : vector<4x8x8xbf16>
    %c0_3 = arith.constant 0 : index
    %c0_4 = arith.constant 0 : index
    %c0_5 = arith.constant 0 : index
    %c0_6 = arith.constant 0 : index
    %4 = vector.load %arg2[%c0_3, %c0_4, %c0_5, %c0_6] : memref<1x4x64x8xbf16, #tpu.memory_space<vmem>>, vector<1x4x64x8xbf16>
    %5 = vector.shape_cast %4 : vector<1x4x64x8xbf16> to vector<4x64x8xbf16>
    %c0_7 = arith.constant 0 : index
    %c0_8 = arith.constant 0 : index
    %c0_9 = arith.constant 0 : index
    %c0_10 = arith.constant 0 : index
    %6 = vector.load %arg3[%c0_7, %c0_8, %c0_9, %c0_10] : memref<1x4x64x8xbf16, #tpu.memory_space<vmem>>, vector<1x4x64x8xbf16>
    %7 = vector.shape_cast %6 : vector<1x4x64x8xbf16> to vector<4x64x8xbf16>
    "tpu.trace_start"() <{level = 10 : i32, message = "hqd,hkd->hqk"}> : () -> ()
    %cst_11 = arith.constant dense<0.000000e+00> : vector<4x8x64xf32>
    %8 = tpu.matmul %3, %5, %cst_11 {dimension_numbers = #tpu.dot_dimension_numbers<[2], [2], [1], [1], [0, 0, 0, 1, 1, 1], [0], [0]>} : vector<4x8x8xbf16>, vector<4x64x8xbf16>, vector<4x8x64xf32> -> vector<4x8x64xf32>
    "tpu.trace_stop"() : () -> ()
    %cst_12 = arith.constant dense<0xFF800000> : vector<4x8xf32>
    %9 = vector.multi_reduction <maximumf>, %8, %cst_12 [2] : vector<4x8x64xf32> to vector<4x8xf32>
    %10 = vector.shape_cast %9 : vector<4x8xf32> to vector<4x8x1xf32>
    %11 = vector.broadcast %10 : vector<4x8x1xf32> to vector<4x8x64xf32>
    %12 = arith.subf %8, %11 : vector<4x8x64xf32>
    %13 = math.exp %12 : vector<4x8x64xf32>
    %cst_13 = arith.constant dense<0.000000e+00> : vector<4x8xf32>
    %14 = vector.multi_reduction <add>, %13, %cst_13 [2] : vector<4x8x64xf32> to vector<4x8xf32>
    %15 = vector.shape_cast %14 : vector<4x8xf32> to vector<4x8x1xf32>
    %16 = arith.truncf %13 : vector<4x8x64xf32> to vector<4x8x64xbf16>
    "tpu.trace_start"() <{level = 10 : i32, message = "hqk,hkd->hqd"}> : () -> ()
    %cst_14 = arith.constant dense<0.000000e+00> : vector<4x8x8xf32>
    %17 = tpu.matmul %16, %7, %cst_14 {dimension_numbers = #tpu.dot_dimension_numbers<[2], [1], [1], [2], [0, 0, 0, 1, 1, 2], [0], [0]>} : vector<4x8x64xbf16>, vector<4x64x8xbf16>, vector<4x8x8xf32> -> vector<4x8x8xf32>
    "tpu.trace_stop"() : () -> ()
    %18 = tpu.reciprocal %15 {approx = true} : vector<4x8x1xf32> -> vector<4x8x1xf32>
    %19 = vector.broadcast %18 : vector<4x8x1xf32> to vector<4x8x8xf32>
    %20 = arith.mulf %17, %19 : vector<4x8x8xf32>
    %21 = arith.truncf %20 : vector<4x8x8xf32> to vector<4x8x8xbf16>
    %c0_15 = arith.constant 0 : index
    %c0_16 = arith.constant 0 : index
    %c0_17 = arith.constant 0 : index
    %c0_18 = arith.constant 0 : index
    %22 = vector.load %arg4[%c0_15, %c0_16, %c0_17, %c0_18] : memref<1x4x8x8xbf16, #tpu.memory_space<vmem>>, vector<1x4x8x8xbf16>
    %23 = vector.shape_cast %22 : vector<1x4x8x8xbf16> to vector<4x8x8xbf16>
    %24 = vector.shape_cast %21 : vector<4x8x8xbf16> to vector<1x4x8x8xbf16>
    tpu.vector_store %arg4[%c0_15, %c0_16, %c0_17, %c0_18], %24 {strides = array<i32>} : memref<1x4x8x8xbf16, #tpu.memory_space<vmem>>, vector<1x4x8x8xbf16>,
    return
  }
  func.func @transform_0(%arg0: i32) -> (i32, i32, i32, i32) {
    %c0_i32 = arith.constant 0 : i32
    %c0_i32_0 = arith.constant 0 : i32
    %c0_i32_1 = arith.constant 0 : i32
    %c0_i32_2 = arith.constant 0 : i32
    return %arg0, %c0_i32, %c0_i32_0, %c0_i32_1 : i32, i32, i32, i32
  }
  func.func @transform_1(%arg0: i32) -> (i32, i32, i32, i32) {
    %c0_i32 = arith.constant 0 : i32
    %c0_i32_0 = arith.constant 0 : i32
    %c0_i32_1 = arith.constant 0 : i32
    %c0_i32_2 = arith.constant 0 : i32
    return %arg0, %c0_i32, %c0_i32_0, %c0_i32_1 : i32, i32, i32, i32
  }
  func.func @transform_2(%arg0: i32) -> (i32, i32, i32, i32) {
    %c0_i32 = arith.constant 0 : i32
    %c0_i32_0 = arith.constant 0 : i32
    %c0_i32_1 = arith.constant 0 : i32
    %c0_i32_2 = arith.constant 0 : i32
    return %arg0, %c0_i32, %c0_i32_0, %c0_i32_1 : i32, i32, i32, i32
  }
  func.func @transform_3(%arg0: i32) -> (i32, i32, i32, i32) {
    %c0_i32 = arith.constant 0 : i32
    %c0_i32_0 = arith.constant 0 : i32
    %c0_i32_1 = arith.constant 0 : i32
    %c0_i32_2 = arith.constant 0 : i32
    return %arg0, %c0_i32, %c0_i32_0, %c0_i32_1 : i32, i32, i32, i32
  }
}

module attributes {stable_mosaic.version = 11 : i64} {
  func.func @_add_ln_kernel(%arg0: i32, %arg1: memref<16x32xf32, #tpu.memory_space<vmem>>, %arg2: memref<16x32xf32, #tpu.memory_space<vmem>>, %arg3: memref<1x32xf32, #tpu.memory_space<vmem>>, %arg4: memref<1x32xf32, #tpu.memory_space<vmem>>, %arg5: memref<16x32xf32, #tpu.memory_space<vmem>>) attributes {dimension_semantics = [#tpu.dimension_semantics<parallel>], iteration_bounds = array<i64: 1>, scalar_prefetch = 0 : i64, scratch_operands = 0 : i64, tpu.core_type = #tpu.core_type<tc>, window_params = [{transform_indices = @transform_0, window_bounds = array<i64: 16, 32>}, {transform_indices = @transform_1, window_bounds = array<i64: 16, 32>}, {pipeline_mode = #tpu.pipeline_mode<synchronous>, transform_indices = @transform_2, window_bounds = array<i64: 1, 32>}, {pipeline_mode = #tpu.pipeline_mode<synchronous>, transform_indices = @transform_3, window_bounds = array<i64: 1, 32>}, {transform_indices = @transform_4, window_bounds = array<i64: 16, 32>}]} {
    %c0 = arith.constant 0 : index
    %c0_0 = arith.constant 0 : index
    %0 = vector.load %arg1[%c0, %c0_0] : memref<16x32xf32, #tpu.memory_space<vmem>>, vector<16x32xf32>
    %c0_1 = arith.constant 0 : index
    %c0_2 = arith.constant 0 : index
    %1 = vector.load %arg2[%c0_1, %c0_2] : memref<16x32xf32, #tpu.memory_space<vmem>>, vector<16x32xf32>
    %2 = arith.addf %0, %1 : vector<16x32xf32>
    %cst = arith.constant dense<0.000000e+00> : vector<16xf32>
    %3 = vector.multi_reduction <add>, %2, %cst [1] : vector<16x32xf32> to vector<16xf32>
    %4 = vector.shape_cast %3 : vector<16xf32> to vector<16x1xf32>
    %cst_3 = arith.constant 3.200000e+01 : f32
    %5 = vector.broadcast %cst_3 : f32 to vector<16x1xf32>
    %6 = arith.divf %4, %5 : vector<16x1xf32>
    %7 = vector.broadcast %6 : vector<16x1xf32> to vector<16x32xf32>
    %8 = arith.subf %2, %7 : vector<16x32xf32>
    %9 = arith.mulf %8, %8 : vector<16x32xf32>
    %cst_4 = arith.constant dense<0.000000e+00> : vector<16xf32>
    %10 = vector.multi_reduction <add>, %9, %cst_4 [1] : vector<16x32xf32> to vector<16xf32>
    %11 = vector.shape_cast %10 : vector<16xf32> to vector<16x1xf32>
    %cst_5 = arith.constant 3.200000e+01 : f32
    %12 = vector.broadcast %cst_5 : f32 to vector<16x1xf32>
    %13 = arith.divf %11, %12 : vector<16x1xf32>
    %cst_6 = arith.constant 9.99999974E-6 : f32
    %14 = vector.broadcast %cst_6 : f32 to vector<16x1xf32>
    %15 = arith.addf %13, %14 : vector<16x1xf32>
    %16 = math.rsqrt %15 : vector<16x1xf32>
    %17 = vector.broadcast %16 : vector<16x1xf32> to vector<16x32xf32>
    %18 = arith.mulf %8, %17 : vector<16x32xf32>
    %c0_7 = arith.constant 0 : index
    %c0_8 = arith.constant 0 : index
    %19 = vector.load %arg3[%c0_7, %c0_8] : memref<1x32xf32, #tpu.memory_space<vmem>>, vector<1x32xf32>
    %20 = vector.broadcast %19 : vector<1x32xf32> to vector<16x32xf32>
    %21 = arith.mulf %18, %20 : vector<16x32xf32>
    %c0_9 = arith.constant 0 : index
    %c0_10 = arith.constant 0 : index
    %22 = vector.load %arg4[%c0_9, %c0_10] : memref<1x32xf32, #tpu.memory_space<vmem>>, vector<1x32xf32>
    %23 = vector.broadcast %22 : vector<1x32xf32> to vector<16x32xf32>
    %24 = arith.addf %21, %23 : vector<16x32xf32>
    %c0_11 = arith.constant 0 : index
    %c0_12 = arith.constant 0 : index
    %25 = vector.load %arg5[%c0_11, %c0_12] : memref<16x32xf32, #tpu.memory_space<vmem>>, vector<16x32xf32>
    tpu.vector_store %arg5[%c0_11, %c0_12], %24 {strides = array<i32>} : memref<16x32xf32, #tpu.memory_space<vmem>>, vector<16x32xf32>,
    return
  }
  func.func @transform_0(%arg0: i32) -> (i32, i32) {
    %c0_i32 = arith.constant 0 : i32
    %c0_i32_0 = arith.constant 0 : i32
    return %arg0, %c0_i32 : i32, i32
  }
  func.func @transform_1(%arg0: i32) -> (i32, i32) {
    %c0_i32 = arith.constant 0 : i32
    %c0_i32_0 = arith.constant 0 : i32
    return %arg0, %c0_i32 : i32, i32
  }
  func.func @transform_2(%arg0: i32) -> (i32, i32) {
    %c0_i32 = arith.constant 0 : i32
    %c0_i32_0 = arith.constant 0 : i32
    %c0_i32_1 = arith.constant 0 : i32
    return %c0_i32, %c0_i32_0 : i32, i32
  }
  func.func @transform_3(%arg0: i32) -> (i32, i32) {
    %c0_i32 = arith.constant 0 : i32
    %c0_i32_0 = arith.constant 0 : i32
    %c0_i32_1 = arith.constant 0 : i32
    return %c0_i32, %c0_i32_0 : i32, i32
  }
  func.func @transform_4(%arg0: i32) -> (i32, i32) {
    %c0_i32 = arith.constant 0 : i32
    %c0_i32_0 = arith.constant 0 : i32
    return %arg0, %c0_i32 : i32, i32
  }
}

module attributes {stable_mosaic.version = 11 : i64} {
  func.func @_ln_kernel(%arg0: i32, %arg1: memref<16x32xf32, #tpu.memory_space<vmem>>, %arg2: memref<1x32xf32, #tpu.memory_space<vmem>>, %arg3: memref<1x32xf32, #tpu.memory_space<vmem>>, %arg4: memref<16x32xf32, #tpu.memory_space<vmem>>) attributes {dimension_semantics = [#tpu.dimension_semantics<parallel>], iteration_bounds = array<i64: 1>, scalar_prefetch = 0 : i64, scratch_operands = 0 : i64, tpu.core_type = #tpu.core_type<tc>, window_params = [{transform_indices = @transform_0, window_bounds = array<i64: 16, 32>}, {pipeline_mode = #tpu.pipeline_mode<synchronous>, transform_indices = @transform_1, window_bounds = array<i64: 1, 32>}, {pipeline_mode = #tpu.pipeline_mode<synchronous>, transform_indices = @transform_2, window_bounds = array<i64: 1, 32>}, {transform_indices = @transform_3, window_bounds = array<i64: 16, 32>}]} {
    %c0 = arith.constant 0 : index
    %c0_0 = arith.constant 0 : index
    %0 = vector.load %arg1[%c0, %c0_0] : memref<16x32xf32, #tpu.memory_space<vmem>>, vector<16x32xf32>
    %cst = arith.constant dense<0.000000e+00> : vector<16xf32>
    %1 = vector.multi_reduction <add>, %0, %cst [1] : vector<16x32xf32> to vector<16xf32>
    %2 = vector.shape_cast %1 : vector<16xf32> to vector<16x1xf32>
    %cst_1 = arith.constant 3.200000e+01 : f32
    %3 = vector.broadcast %cst_1 : f32 to vector<16x1xf32>
    %4 = arith.divf %2, %3 : vector<16x1xf32>
    %5 = vector.broadcast %4 : vector<16x1xf32> to vector<16x32xf32>
    %6 = arith.subf %0, %5 : vector<16x32xf32>
    %7 = arith.mulf %6, %6 : vector<16x32xf32>
    %cst_2 = arith.constant dense<0.000000e+00> : vector<16xf32>
    %8 = vector.multi_reduction <add>, %7, %cst_2 [1] : vector<16x32xf32> to vector<16xf32>
    %9 = vector.shape_cast %8 : vector<16xf32> to vector<16x1xf32>
    %cst_3 = arith.constant 3.200000e+01 : f32
    %10 = vector.broadcast %cst_3 : f32 to vector<16x1xf32>
    %11 = arith.divf %9, %10 : vector<16x1xf32>
    %cst_4 = arith.constant 9.99999974E-6 : f32
    %12 = vector.broadcast %cst_4 : f32 to vector<16x1xf32>
    %13 = arith.addf %11, %12 : vector<16x1xf32>
    %14 = math.rsqrt %13 : vector<16x1xf32>
    %15 = vector.broadcast %14 : vector<16x1xf32> to vector<16x32xf32>
    %16 = arith.mulf %6, %15 : vector<16x32xf32>
    %c0_5 = arith.constant 0 : index
    %c0_6 = arith.constant 0 : index
    %17 = vector.load %arg2[%c0_5, %c0_6] : memref<1x32xf32, #tpu.memory_space<vmem>>, vector<1x32xf32>
    %18 = vector.broadcast %17 : vector<1x32xf32> to vector<16x32xf32>
    %19 = arith.mulf %16, %18 : vector<16x32xf32>
    %c0_7 = arith.constant 0 : index
    %c0_8 = arith.constant 0 : index
    %20 = vector.load %arg3[%c0_7, %c0_8] : memref<1x32xf32, #tpu.memory_space<vmem>>, vector<1x32xf32>
    %21 = vector.broadcast %20 : vector<1x32xf32> to vector<16x32xf32>
    %22 = arith.addf %19, %21 : vector<16x32xf32>
    %c0_9 = arith.constant 0 : index
    %c0_10 = arith.constant 0 : index
    %23 = vector.load %arg4[%c0_9, %c0_10] : memref<16x32xf32, #tpu.memory_space<vmem>>, vector<16x32xf32>
    tpu.vector_store %arg4[%c0_9, %c0_10], %22 {strides = array<i32>} : memref<16x32xf32, #tpu.memory_space<vmem>>, vector<16x32xf32>,
    return
  }
  func.func @transform_0(%arg0: i32) -> (i32, i32) {
    %c0_i32 = arith.constant 0 : i32
    %c0_i32_0 = arith.constant 0 : i32
    return %arg0, %c0_i32 : i32, i32
  }
  func.func @transform_1(%arg0: i32) -> (i32, i32) {
    %c0_i32 = arith.constant 0 : i32
    %c0_i32_0 = arith.constant 0 : i32
    %c0_i32_1 = arith.constant 0 : i32
    return %c0_i32, %c0_i32_0 : i32, i32
  }
  func.func @transform_2(%arg0: i32) -> (i32, i32) {
    %c0_i32 = arith.constant 0 : i32
    %c0_i32_0 = arith.constant 0 : i32
    %c0_i32_1 = arith.constant 0 : i32
    return %c0_i32, %c0_i32_0 : i32, i32
  }
  func.func @transform_3(%arg0: i32) -> (i32, i32) {
    %c0_i32 = arith.constant 0 : i32
    %c0_i32_0 = arith.constant 0 : i32
    return %arg0, %c0_i32 : i32, i32
  }
}

module attributes {stable_mosaic.version = 11 : i64} {
  func.func @_matmul_kernel(%arg0: i32, %arg1: i32, %arg2: i32, %arg3: memref<128x128xbf16, #tpu.memory_space<vmem>>, %arg4: memref<128x128xbf16, #tpu.memory_space<vmem>>, %arg5: memref<1x128xf32, #tpu.memory_space<vmem>>, %arg6: memref<128x128xf32, #tpu.memory_space<vmem>>, %arg7: memref<128x128xf32, #tpu.memory_space<vmem>>) attributes {dimension_semantics = [#tpu.dimension_semantics<parallel>, #tpu.dimension_semantics<parallel>, #tpu.dimension_semantics<arbitrary>], iteration_bounds = array<i64: 1, 1, 1>, scalar_prefetch = 0 : i64, scratch_operands = 1 : i64, tpu.core_type = #tpu.core_type<tc>, window_params = [{transform_indices = @transform_0, window_bounds = array<i64: 128, 128>}, {transform_indices = @transform_1, window_bounds = array<i64: 128, 128>}, {transform_indices = @transform_2, window_bounds = array<i64: 1, 128>}, {transform_indices = @transform_3, window_bounds = array<i64: 128, 128>}]} {
    %c0_i32 = arith.constant 0 : i32
    %0 = arith.cmpi eq, %arg2, %c0_i32 : i32
    %1 = arith.extui %0 : i1 to i32
    %c0_i32_0 = arith.constant 0 : i32
    %2 = arith.cmpi ne, %1, %c0_i32_0 : i32
    scf.if %2 {
      %cst_10 = arith.constant 0.000000e+00 : f32
      %12 = vector.broadcast %cst_10 : f32 to vector<128x128xf32>
      %c0_11 = arith.constant 0 : index
      %c0_12 = arith.constant 0 : index
      %13 = vector.load %arg7[%c0_11, %c0_12] : memref<128x128xf32, #tpu.memory_space<vmem>>, vector<128x128xf32>
      tpu.vector_store %arg7[%c0_11, %c0_12], %12 {strides = array<i32>} : memref<128x128xf32, #tpu.memory_space<vmem>>, vector<128x128xf32>,
    } else {
    }
    %c0 = arith.constant 0 : index
    %c0_1 = arith.constant 0 : index
    %3 = vector.load %arg7[%c0, %c0_1] : memref<128x128xf32, #tpu.memory_space<vmem>>, vector<128x128xf32>
    %c0_2 = arith.constant 0 : index
    %c0_3 = arith.constant 0 : index
    %4 = vector.load %arg3[%c0_2, %c0_3] : memref<128x128xbf16, #tpu.memory_space<vmem>>, vector<128x128xbf16>
    %c0_4 = arith.constant 0 : index
    %c0_5 = arith.constant 0 : index
    %5 = vector.load %arg4[%c0_4, %c0_5] : memref<128x128xbf16, #tpu.memory_space<vmem>>, vector<128x128xbf16>
    %cst = arith.constant dense<0.000000e+00> : vector<128x128xf32>
    %6 = tpu.matmul %4, %5, %cst {dimension_numbers = #tpu.dot_dimension_numbers<[1], [0], [0], [1], [0, 0, 1, 1], [], []>} : vector<128x128xbf16>, vector<128x128xbf16>, vector<128x128xf32> -> vector<128x128xf32>
    %7 = arith.addf %3, %6 : vector<128x128xf32>
    %c0_6 = arith.constant 0 : index
    %c0_7 = arith.constant 0 : index
    %8 = vector.load %arg7[%c0_6, %c0_7] : memref<128x128xf32, #tpu.memory_space<vmem>>, vector<128x128xf32>
    tpu.vector_store %arg7[%c0_6, %c0_7], %7 {strides = array<i32>} : memref<128x128xf32, #tpu.memory_space<vmem>>, vector<128x128xf32>,
    %c0_i32_8 = arith.constant 0 : i32
    %9 = arith.cmpi eq, %arg2, %c0_i32_8 : i32
    %10 = arith.extui %9 : i1 to i32
    %c0_i32_9 = arith.constant 0 : i32
    %11 = arith.cmpi ne, %10, %c0_i32_9 : i32
    scf.if %11 {
      %c0_10 = arith.constant 0 : index
      %c0_11 = arith.constant 0 : index
      %12 = vector.load %arg7[%c0_10, %c0_11] : memref<128x128xf32, #tpu.memory_space<vmem>>, vector<128x128xf32>
      %c0_12 = arith.constant 0 : index
      %c0_13 = arith.constant 0 : index
      %13 = vector.load %arg5[%c0_12, %c0_13] : memref<1x128xf32, #tpu.memory_space<vmem>>, vector<1x128xf32>
      %14 = vector.broadcast %13 : vector<1x128xf32> to vector<128x128xf32>
      %15 = arith.addf %12, %14 : vector<128x128xf32>
      %cst_14 = arith.constant 0.000000e+00 : f32
      %16 = vector.broadcast %cst_14 : f32 to vector<128x128xf32>
      %17 = arith.subf %16, %15 : vector<128x128xf32>
      %18 = math.exp %17 : vector<128x128xf32>
      %cst_15 = arith.constant 1.000000e+00 : f32
      %19 = vector.broadcast %cst_15 : f32 to vector<128x128xf32>
      %20 = arith.addf %19, %18 : vector<128x128xf32>
      %cst_16 = arith.constant 1.000000e+00 : f32
      %21 = vector.broadcast %cst_16 : f32 to vector<128x128xf32>
      %22 = arith.divf %21, %20 : vector<128x128xf32>
      %c0_17 = arith.constant 0 : index
      %c0_18 = arith.constant 0 : index
      %23 = vector.load %arg6[%c0_17, %c0_18] : memref<128x128xf32, #tpu.memory_space<vmem>>, vector<128x128xf32>
      tpu.vector_store %arg6[%c0_17, %c0_18], %22 {strides = array<i32>} : memref<128x128xf32, #tpu.memory_space<vmem>>, vector<128x128xf32>,
    } else {
    }
    return
  }
  func.func @transform_0(%arg0: i32, %arg1: i32, %arg2: i32) -> (i32, i32) {
    %c0_i32 = arith.constant 0 : i32
    return %arg0, %arg2 : i32, i32
  }
  func.func @transform_1(%arg0: i32, %arg1: i32, %arg2: i32) -> (i32, i32) {
    %c0_i32 = arith.constant 0 : i32
    return %arg2, %arg1 : i32, i32
  }
  func.func @transform_2(%arg0: i32, %arg1: i32, %arg2: i32) -> (i32, i32) {
    %c0_i32 = arith.constant 0 : i32
    %c0_i32_0 = arith.constant 0 : i32
    return %c0_i32, %arg1 : i32, i32
  }
  func.func @transform_3(%arg0: i32, %arg1: i32, %arg2: i32) -> (i32, i32) {
    %c0_i32 = arith.constant 0 : i32
    return %arg0, %arg1 : i32, i32
  }
}

</mosaic_0001>

<llo_original>
// kernel: detr_forward.51
$region0: #{detr_forward.51}
  #allocation0 [shape = 'u32[]', space=smem, size = 0x4, offset = 0x4, fixed_abs, tag = 'smem constant byte address 0x4 - core index']
  #allocation1 [shape = 'u32[72,128]{1,0:T(1,128)}', space=vmem, size = 0x9000, scoped, tag = 'internal scratch']
  #allocation2 [shape = 'f32[128,128]{1,0:T(8,128)}', space=vmem, size = 0x10000, scoped, tag = 'scratch operand']
  %s0 = inlined_call_operand.vmem [shape: bf16[128,128], index: 0, kind: input, shape index: {}]
  %s1 = inlined_call_operand.vmem [shape: bf16[128,128], index: 1, kind: input, shape index: {}]
  %s2 = inlined_call_operand.vmem [shape: f32[1,128], index: 2, kind: input, shape index: {}]
  %s3 = inlined_call_operand.vmem [shape: f32[128,128], index: 3, kind: output, shape index: {}]
  %s4 = sld [smem:[#allocation0]]
  $region30: #{detr_forward.51} parent=0
    _
  %s6 = ssub.s32 1, %s4
  %s7 = scalar_select 0, %s6, %s4
  // Predicated region
  $region2: #{detr_forward.51} parent=0 // pred_check
    _
  $region3: #{detr_forward.51} parent=0 // pred_check_branch
    %9 = sbr.rel (0) target = $region5
  $region4: #{detr_forward.51} parent=0 // pred_region
    _
  $region5: #{detr_forward.51} parent=0 // pred_fallthru
    _
  // Predicated region
  $region6: #{detr_forward.51} parent=0 // pred_check
    _
  $region7: #{detr_forward.51} parent=0 // pred_check_branch
    %11 = sbr.rel (0) target = $region9
  $region8: #{detr_forward.51} parent=0 // pred_region
    _
  $region9: #{detr_forward.51} parent=0 // pred_fallthru
    _
  // Predicated region
  $region10: #{detr_forward.51} parent=0 // pred_check
    _
  $region11: #{detr_forward.51} parent=0 // pred_check_branch
    %13 = sbr.rel (0) target = $region13
  $region12: #{detr_forward.51} parent=0 // pred_region
    _
  $region13: #{detr_forward.51} parent=0 // pred_fallthru
    _
  %p14 = scmp.eq.s32.totalorder 0, 0
  // Predicated region
  $region14: #{detr_forward.51} parent=0 // pred_check
    %p15 = pneg %p14
  $region15: #{detr_forward.51} parent=0 // pred_check_branch
    %17 = sbr.rel (%p15) target = $region17
  $region16: #{detr_forward.51} parent=0 // pred_region
    %18 = vst [vmem:[#allocation2] sm:$0xff] 0.0
    %19 = vst [vmem:[#allocation2 + $0x8] sm:$0xff] 0.0
    %20 = vst [vmem:[#allocation2 + $0x10] sm:$0xff] 0.0
    %21 = vst [vmem:[#allocation2 + $0x18] sm:$0xff] 0.0
    %22 = vst [vmem:[#allocation2 + $0x20] sm:$0xff] 0.0
    %23 = vst [vmem:[#allocation2 + $0x28] sm:$0xff] 0.0
    %24 = vst [vmem:[#allocation2 + $0x30] sm:$0xff] 0.0
    %25 = vst [vmem:[#allocation2 + $0x38] sm:$0xff] 0.0
    %26 = vst [vmem:[#allocation2 + $0x40] sm:$0xff] 0.0
    %27 = vst [vmem:[#allocation2 + $0x48] sm:$0xff] 0.0
    %28 = vst [vmem:[#allocation2 + $0x50] sm:$0xff] 0.0
    %29 = vst [vmem:[#allocation2 + $0x58] sm:$0xff] 0.0
    %30 = vst [vmem:[#allocation2 + $0x60] sm:$0xff] 0.0
    %31 = vst [vmem:[#allocation2 + $0x68] sm:$0xff] 0.0
    %32 = vst [vmem:[#allocation2 + $0x70] sm:$0xff] 0.0
    %33 = vst [vmem:[#allocation2 + $0x78] sm:$0xff] 0.0
  $region17: #{detr_forward.51} parent=0 // pred_fallthru
    _
  %v34 = vld [vmem:[#allocation2] sm:$0xff]
  %v35 = vld [vmem:[#allocation2 + $0x8] sm:$0xff]
  %v36 = vld [vmem:[#allocation2 + $0x10] sm:$0xff]
  %v37 = vld [vmem:[#allocation2 + $0x18] sm:$0xff]
  %v38 = vld [vmem:[#allocation2 + $0x20] sm:$0xff]
  %v39 = vld [vmem:[#allocation2 + $0x28] sm:$0xff]
  %v40 = vld [vmem:[#allocation2 + $0x30] sm:$0xff]
  %v41 = vld [vmem:[#allocation2 + $0x38] sm:$0xff]
  %v42 = vld [vmem:[#allocation2 + $0x40] sm:$0xff]
  %v43 = vld [vmem:[#allocation2 + $0x48] sm:$0xff]
  %v44 = vld [vmem:[#allocation2 + $0x50] sm:$0xff]
  %v45 = vld [vmem:[#allocation2 + $0x58] sm:$0xff]
  %v46 = vld [vmem:[#allocation2 + $0x60] sm:$0xff]
  %v47 = vld [vmem:[#allocation2 + $0x68] sm:$0xff]
  %v48 = vld [vmem:[#allocation2 + $0x70] sm:$0xff]
  %v49 = vld [vmem:[#allocation2 + $0x78] sm:$0xff]
  %v50 = vld [vmem:[%s0] sm:$0xf]
  %v51 = vld [vmem:[%s0 + $0x4] sm:$0xf]
  %v52 = vld [vmem:[%s0 + $0x8] sm:$0xf]
  %v53 = vld [vmem:[%s0 + $0xc] sm:$0xf]
  %v54 = vld [vmem:[%s0 + $0x10] sm:$0xf]
  %v55 = vld [vmem:[%s0 + $0x14] sm:$0xf]
  %v56 = vld [vmem:[%s0 + $0x18] sm:$0xf]
  %v57 = vld [vmem:[%s0 + $0x1c] sm:$0xf]
  %v58 = vld [vmem:[%s0 + $0x20] sm:$0xf]
  %v59 = vld [vmem:[%s0 + $0x24] sm:$0xf]
  %v60 = vld [vmem:[%s0 + $0x28] sm:$0xf]
  %v61 = vld [vmem:[%s0 + $0x2c] sm:$0xf]
  %v62 = vld [vmem:[%s0 + $0x30] sm:$0xf]
  %v63 = vld [vmem:[%s0 + $0x34] sm:$0xf]
  %v64 = vld [vmem:[%s0 + $0x38] sm:$0xf]
  %v65 = vld [vmem:[%s0 + $0x3c] sm:$0xf]
  %v66 = vld [vmem:[%s1] sm:$0xf]
  %v67 = vld [vmem:[%s1 + $0x4] sm:$0xf]
  %v68 = vld [vmem:[%s1 + $0x8] sm:$0xf]
  %v69 = vld [vmem:[%s1 + $0xc] sm:$0xf]
  %v70 = vld [vmem:[%s1 + $0x10] sm:$0xf]
  %v71 = vld [vmem:[%s1 + $0x14] sm:$0xf]
  %v72 = vld [vmem:[%s1 + $0x18] sm:$0xf]
  %v73 = vld [vmem:[%s1 + $0x1c] sm:$0xf]
  %v74 = vld [vmem:[%s1 + $0x20] sm:$0xf]
  %v75 = vld [vmem:[%s1 + $0x24] sm:$0xf]
  %v76 = vld [vmem:[%s1 + $0x28] sm:$0xf]
  %v77 = vld [vmem:[%s1 + $0x2c] sm:$0xf]
  %v78 = vld [vmem:[%s1 + $0x30] sm:$0xf]
  %v79 = vld [vmem:[%s1 + $0x34] sm:$0xf]
  %v80 = vld [vmem:[%s1 + $0x38] sm:$0xf]
  %v81 = vld [vmem:[%s1 + $0x3c] sm:$0xf]
  %v98 = vunpack.c.l.b16 %v50
  %v99 = vunpack.c.l.b16 %v51
  %v100 = vunpack.c.l.b16 %v52
  %v101 = vunpack.c.l.b16 %v53
  %v102 = vunpack.c.l.b16 %v54
  %v103 = vunpack.c.l.b16 %v55
  %v104 = vunpack.c.l.b16 %v56
  %v105 = vunpack.c.l.b16 %v57
  %v106 = vunpack.c.l.b16 %v58
  %v107 = vunpack.c.l.b16 %v59
  %v108 = vunpack.c.l.b16 %v60
  %v109 = vunpack.c.l.b16 %v61
  %v110 = vunpack.c.l.b16 %v62
  %v111 = vunpack.c.l.b16 %v63
  %v112 = vunpack.c.l.b16 %v64
  %v113 = vunpack.c.l.b16 %v65
  %v114 = vpack.c.b16 %v99, %v98
  %v115 = vpack.c.b16 %v101, %v100
  %v116 = vpack.c.b16 %v103, %v102
  %v117 = vpack.c.b16 %v105, %v104
  %v118 = vpack.c.b16 %v107, %v106
  %v119 = vpack.c.b16 %v109, %v108
  %v120 = vpack.c.b16 %v111, %v110
  %v121 = vpack.c.b16 %v113, %v112
  %v146 = vunpack.c.l.b16 %v66
  %v147 = vunpack.c.l.b16 %v67
  %v148 = vunpack.c.l.b16 %v68
  %v149 = vunpack.c.l.b16 %v69
  %v150 = vunpack.c.l.b16 %v70
  %v151 = vunpack.c.l.b16 %v71
  %v152 = vunpack.c.l.b16 %v72
  %v153 = vunpack.c.l.b16 %v73
  %v154 = vunpack.c.l.b16 %v74
  %v155 = vunpack.c.l.b16 %v75
  %v156 = vunpack.c.l.b16 %v76
  %v157 = vunpack.c.l.b16 %v77
  %v158 = vunpack.c.l.b16 %v78
  %v159 = vunpack.c.l.b16 %v79
  %v160 = vunpack.c.l.b16 %v80
  %v161 = vunpack.c.l.b16 %v81
  %v162 = vpack.c.b16 %v147, %v146
  %v163 = vpack.c.b16 %v149, %v148
  %v164 = vpack.c.b16 %v151, %v150
  %v165 = vpack.c.b16 %v153, %v152
  %v166 = vpack.c.b16 %v155, %v154
  %v167 = vpack.c.b16 %v157, %v156
  %v168 = vpack.c.b16 %v159, %v158
  %v169 = vpack.c.b16 %v161, %v160
  %178 = vmatpush.bf16.msra.mxu0 %v169
  %179 = vmatpush.bf16.msra.mxu0 %v168
  %180 = vmatpush.bf16.msra.mxu0 %v167
  %181 = vmatpush.bf16.msra.mxu0 %v166
  %182 = vmatpush.bf16.msra.mxu0 %v165
  %183 = vmatpush.bf16.msra.mxu0 %v164
  %184 = vmatpush.bf16.msra.mxu0 %v163
  %185 = vmatpush.bf16.msra.mxu0 %v162
  %186 = vmatmul.bf16.gmra.mxu0 %v114
  %v187 = vpop.f32.mrf.mxu0
  %v188 = vadd.f32 0.0, %v187
  %v189 = vpop.f32.mrf.mxu0
  %v190 = vadd.f32 0.0, %v189
  %191 = vmatmul.bf16.gmra.mxu0 %v115
  %v192 = vpop.f32.mrf.mxu0
  %v193 = vadd.f32 0.0, %v192
  %v194 = vpop.f32.mrf.mxu0
  %v195 = vadd.f32 0.0, %v194
  %196 = vmatmul.bf16.gmra.mxu0 %v116
  %v197 = vpop.f32.mrf.mxu0
  %v198 = vadd.f32 0.0, %v197
  %v199 = vpop.f32.mrf.mxu0
  %v200 = vadd.f32 0.0, %v199
  %201 = vmatmul.bf16.gmra.mxu0 %v117
  %v202 = vpop.f32.mrf.mxu0
  %v203 = vadd.f32 0.0, %v202
  %v204 = vpop.f32.mrf.mxu0
  %v205 = vadd.f32 0.0, %v204
  %206 = vmatmul.bf16.gmra.mxu0 %v118
  %v207 = vpop.f32.mrf.mxu0
  %v208 = vadd.f32 0.0, %v207
  %v209 = vpop.f32.mrf.mxu0
  %v210 = vadd.f32 0.0, %v209
  %211 = vmatmul.bf16.gmra.mxu0 %v119
  %v212 = vpop.f32.mrf.mxu0
  %v213 = vadd.f32 0.0, %v212
  %v214 = vpop.f32.mrf.mxu0
  %v215 = vadd.f32 0.0, %v214
  %216 = vmatmul.bf16.gmra.mxu0 %v120
  %v217 = vpop.f32.mrf.mxu0
  %v218 = vadd.f32 0.0, %v217
  %v219 = vpop.f32.mrf.mxu0
  %v220 = vadd.f32 0.0, %v219
  %221 = vmatmul.bf16.gmra.mxu0 %v121
  %v222 = vpop.f32.mrf.mxu0
  %v223 = vadd.f32 0.0, %v222
  %v224 = vpop.f32.mrf.mxu0
  %v225 = vadd.f32 0.0, %v224
  %226 = vdwg.mxu0
  %v227 = vadd.f32 %v34, %v188
  %v228 = vadd.f32 %v35, %v190
  %v229 = vadd.f32 %v36, %v193
  %v230 = vadd.f32 %v37, %v195
  %v231 = vadd.f32 %v38, %v198
  %v232 = vadd.f32 %v39, %v200
  %v233 = vadd.f32 %v40, %v203
  %v234 = vadd.f32 %v41, %v205
  %v235 = vadd.f32 %v42, %v208
  %v236 = vadd.f32 %v43, %v210
  %v237 = vadd.f32 %v44, %v213
  %v238 = vadd.f32 %v45, %v215
  %v239 = vadd.f32 %v46, %v218
  %v240 = vadd.f32 %v47, %v220
  %v241 = vadd.f32 %v48, %v223
  %v242 = vadd.f32 %v49, %v225
  %243 = vst [vmem:[#allocation2] sm:$0xff] %v227
  %244 = vst [vmem:[#allocation2 + $0x8] sm:$0xff] %v228
  %245 = vst [vmem:[#allocation2 + $0x10] sm:$0xff] %v229
  %246 = vst [vmem:[#allocation2 + $0x18] sm:$0xff] %v230
  %247 = vst [vmem:[#allocation2 + $0x20] sm:$0xff] %v231
  %248 = vst [vmem:[#allocation2 + $0x28] sm:$0xff] %v232
  %249 = vst [vmem:[#allocation2 + $0x30] sm:$0xff] %v233
  %250 = vst [vmem:[#allocation2 + $0x38] sm:$0xff] %v234
  %251 = vst [vmem:[#allocation2 + $0x40] sm:$0xff] %v235
  %252 = vst [vmem:[#allocation2 + $0x48] sm:$0xff] %v236
  %253 = vst [vmem:[#allocation2 + $0x50] sm:$0xff] %v237
  %254 = vst [vmem:[#allocation2 + $0x58] sm:$0xff] %v238
  %255 = vst [vmem:[#allocation2 + $0x60] sm:$0xff] %v239
  %256 = vst [vmem:[#allocation2 + $0x68] sm:$0xff] %v240
  %257 = vst [vmem:[#allocation2 + $0x70] sm:$0xff] %v241
  %258 = vst [vmem:[#allocation2 + $0x78] sm:$0xff] %v242
  // Predicated region
  $region18: #{detr_forward.51} parent=0 // pred_check
    %p259 = pneg %p14
  $region19: #{detr_forward.51} parent=0 // pred_check_branch
    %261 = sbr.rel (%p259) target = $region21
  $region20: #{detr_forward.51} parent=0 // pred_region
    %v262 = vld [vmem:[#allocation2] sm:$0xff]
    %v263 = vld [vmem:[#allocation2 + $0x8] sm:$0xff]
    %v264 = vld [vmem:[#allocation2 + $0x10] sm:$0xff]
    %v265 = vld [vmem:[#allocation2 + $0x18] sm:$0xff]
    %v266 = vld [vmem:[#allocation2 + $0x20] sm:$0xff]
    %v267 = vld [vmem:[#allocation2 + $0x28] sm:$0xff]
    %v268 = vld [vmem:[#allocation2 + $0x30] sm:$0xff]
    %v269 = vld [vmem:[#allocation2 + $0x38] sm:$0xff]
    %v270 = vld [vmem:[#allocation2 + $0x40] sm:$0xff]
    %v271 = vld [vmem:[#allocation2 + $0x48] sm:$0xff]
    %v272 = vld [vmem:[#allocation2 + $0x50] sm:$0xff]
    %v273 = vld [vmem:[#allocation2 + $0x58] sm:$0xff]
    %v274 = vld [vmem:[#allocation2 + $0x60] sm:$0xff]
    %v275 = vld [vmem:[#allocation2 + $0x68] sm:$0xff]
    %v276 = vld [vmem:[#allocation2 + $0x70] sm:$0xff]
    %v277 = vld [vmem:[#allocation2 + $0x78] sm:$0xff]
    %v278 = vld [vmem:[%s2] sm:$0x1]
    %v280 = vperm.slane %v278, 0
    %v282 = vadd.f32 %v262, %v280
    %v283 = vadd.f32 %v263, %v280
    %v284 = vadd.f32 %v264, %v280
    %v285 = vadd.f32 %v265, %v280
    %v286 = vadd.f32 %v266, %v280
    %v287 = vadd.f32 %v267, %v280
    %v288 = vadd.f32 %v268, %v280
    %v289 = vadd.f32 %v269, %v280
    %v290 = vadd.f32 %v270, %v280
    %v291 = vadd.f32 %v271, %v280
    %v292 = vadd.f32 %v272, %v280
    %v293 = vadd.f32 %v273, %v280
    %v294 = vadd.f32 %v274, %v280
    %v295 = vadd.f32 %v275, %v280
    %v296 = vadd.f32 %v276, %v280
    %v297 = vadd.f32 %v277, %v280
    %298 = vst [vmem:[%s3] sm:$0xff] %v282
    %299 = vst [vmem:[%s3 + $0x8] sm:$0xff] %v283
    %300 = vst [vmem:[%s3 + $0x10] sm:$0xff] %v284
    %301 = vst [vmem:[%s3 + $0x18] sm:$0xff] %v285
    %302 = vst [vmem:[%s3 + $0x20] sm:$0xff] %v286
    %303 = vst [vmem:[%s3 + $0x28] sm:$0xff] %v287
    %304 = vst [vmem:[%s3 + $0x30] sm:$0xff] %v288
    %305 = vst [vmem:[%s3 + $0x38] sm:$0xff] %v289
    %306 = vst [vmem:[%s3 + $0x40] sm:$0xff] %v290
    %307 = vst [vmem:[%s3 + $0x48] sm:$0xff] %v291
    %308 = vst [vmem:[%s3 + $0x50] sm:$0xff] %v292
    %309 = vst [vmem:[%s3 + $0x58] sm:$0xff] %v293
    %310 = vst [vmem:[%s3 + $0x60] sm:$0xff] %v294
    %311 = vst [vmem:[%s3 + $0x68] sm:$0xff] %v295
    %312 = vst [vmem:[%s3 + $0x70] sm:$0xff] %v296
    %313 = vst [vmem:[%s3 + $0x78] sm:$0xff] %v297
  $region21: #{detr_forward.51} parent=0 // pred_fallthru
    _
  // Predicated region
  $region22: #{detr_forward.51} parent=0 // pred_check
    _
  $region23: #{detr_forward.51} parent=0 // pred_check_branch
    %315 = sbr.rel (0) target = $region25
  $region24: #{detr_forward.51} parent=0 // pred_region
    _
  $region25: #{detr_forward.51} parent=0 // pred_fallthru
    _
  // Predicated region
  $region26: #{detr_forward.51} parent=0 // pred_check
    _
  $region27: #{detr_forward.51} parent=0 // pred_check_branch
    %317 = sbr.rel (0) target = $region29
  $region28: #{detr_forward.51} parent=0 // pred_region
    _
  $region29: #{detr_forward.51} parent=0 // pred_fallthru
    _

// kernel: detr_forward.54
$region0: #{detr_forward.54}
  #allocation0 [shape = 'u32[]', space=smem, size = 0x4, offset = 0x4, fixed_abs, tag = 'smem constant byte address 0x4 - core index']
  #allocation1 [shape = 'u32[72,128]{1,0:T(1,128)}', space=vmem, size = 0x9000, scoped, tag = 'internal scratch']
  %s0 = inlined_call_operand.vmem [shape: bf16[2,4,64,8], index: 0, kind: input, shape index: {}]
  %s1 = inlined_call_operand.vmem [shape: bf16[2,4,64,8], index: 1, kind: input, shape index: {}]
  %s2 = inlined_call_operand.vmem [shape: bf16[2,4,64,8], index: 2, kind: input, shape index: {}]
  %s3 = inlined_call_operand.vmem [shape: bf16[2,4,64,8], index: 3, kind: output, shape index: {}]
  %s4 = sld [smem:[#allocation0]]
  $region45: #{detr_forward.54} parent=0
    _
  %s6 = ssub.s32 1, %s4
  %s7 = scalar_select 0, %s6, %s4
  loop: start=0, step=1, limit=4
  $region2: #{detr_forward.54} parent=0 // loop_pre_header
    _
  $region3: #{detr_forward.54} parent=0 // loop_header
    %s9 = sphi 0, %s13
    %p10 = scmp.ge.s32.totalorder %s9, 4
    %s19 = sphi 0, %s21
    %s22 = sphi 0, %s19
    %s23 = sphi 0, %s22
    %s39 = sphi 0, %s23
    %s45 = sphi 0, %s47
    %s48 = sphi 0, %s45
    %s49 = sphi 0, %s48
    %s65 = sphi 0, %s49
    %s71 = sphi 0, %s73
    %s74 = sphi 0, %s71
    %s75 = sphi 0, %s74
    %s91 = sphi 0, %s75
    %s97 = sphi 0, %s99
    %s100 = sphi 0, %s97
    %s101 = sphi 0, %s100
    %s117 = sphi 0, %s101
  $region4: #{detr_forward.54} parent=0 // loop_header_branch
    %12 = sbr.rel (%p10) target = $region8
  $region5: #{detr_forward.54} parent=0 // loop_body
    %s14 = ssub.s32 %s9, 1
    %s15 = ssub.s32 %s9, 2
    %s16 = sadd.s32 %s9, 1
    %s17 = ssub.s32 %s9, %s16
    %p18 = scmp.eq.s32.totalorder %s17, 0
    %s20 = sadd.s32 %s19, 1
    %s21 = scalar_select %p18, %s19, %s20
    %p24 = pneg %p18
    %p25 = scmp.eq.s32.totalorder %s9, 1
    %p26 = por %p24, %p25
    %p27 = scmp.ne.s32.totalorder %s19, %s22
    %p28 = scmp.eq.s32.totalorder %s9, 0
    %p29 = por %p27, %p28
    %p30 = scmp.ne.s32.totalorder %s19, %s22
    %p31 = scmp.eq.s32.totalorder %s14, 1
    %p32 = por %p30, %p31
    %p33 = scmp.ne.s32.totalorder %s22, %s23
    %p34 = scmp.eq.s32.totalorder %s14, 0
    %p35 = por %p33, %p34
    %p36 = scmp.ne.s32.totalorder %s22, %s23
    %p37 = scmp.eq.s32.totalorder %s15, 1
    %p38 = por %p36, %p37
    %p40 = scmp.ne.s32.totalorder %s23, %s39
    %p41 = scmp.eq.s32.totalorder %s15, 0
    %p42 = por %p40, %p41
    %s43 = ssub.s32 %s9, %s16
    %p44 = scmp.eq.s32.totalorder %s43, 0
    %s46 = sadd.s32 %s45, 1
    %s47 = scalar_select %p44, %s45, %s46
    %p50 = pneg %p44
    %p51 = scmp.eq.s32.totalorder %s9, 1
    %p52 = por %p50, %p51
    %p53 = scmp.ne.s32.totalorder %s45, %s48
    %p54 = scmp.eq.s32.totalorder %s9, 0
    %p55 = por %p53, %p54
    %p56 = scmp.ne.s32.totalorder %s45, %s48
    %p57 = scmp.eq.s32.totalorder %s14, 1
    %p58 = por %p56, %p57
    %p59 = scmp.ne.s32.totalorder %s48, %s49
    %p60 = scmp.eq.s32.totalorder %s14, 0
    %p61 = por %p59, %p60
    %p62 = scmp.ne.s32.totalorder %s48, %s49
    %p63 = scmp.eq.s32.totalorder %s15, 1
    %p64 = por %p62, %p63
    %p66 = scmp.ne.s32.totalorder %s49, %s65
    %p67 = scmp.eq.s32.totalorder %s15, 0
    %p68 = por %p66, %p67
    %s69 = ssub.s32 %s9, %s16
    %p70 = scmp.eq.s32.totalorder %s69, 0
    %s72 = sadd.s32 %s71, 1
    %s73 = scalar_select %p70, %s71, %s72
    %p76 = pneg %p70
    %p77 = scmp.eq.s32.totalorder %s9, 1
    %p78 = por %p76, %p77
    %p79 = scmp.ne.s32.totalorder %s71, %s74
    %p80 = scmp.eq.s32.totalorder %s9, 0
    %p81 = por %p79, %p80
    %p82 = scmp.ne.s32.totalorder %s71, %s74
    %p83 = scmp.eq.s32.totalorder %s14, 1
    %p84 = por %p82, %p83
    %p85 = scmp.ne.s32.totalorder %s74, %s75
    %p86 = scmp.eq.s32.totalorder %s14, 0
    %p87 = por %p85, %p86
    %p88 = scmp.ne.s32.totalorder %s74, %s75
    %p89 = scmp.eq.s32.totalorder %s15, 1
    %p90 = por %p88, %p89
    %p92 = scmp.ne.s32.totalorder %s75, %s91
    %p93 = scmp.eq.s32.totalorder %s15, 0
    %p94 = por %p92, %p93
    %s95 = ssub.s32 %s9, %s16
    %p96 = scmp.eq.s32.totalorder %s95, 0
    %s98 = sadd.s32 %s97, 1
    %s99 = scalar_select %p96, %s97, %s98
    %p102 = pneg %p96
    %p103 = scmp.eq.s32.totalorder %s9, 1
    %p104 = por %p102, %p103
    %p105 = scmp.ne.s32.totalorder %s97, %s100
    %p106 = scmp.eq.s32.totalorder %s9, 0
    %p107 = por %p105, %p106
    %p108 = scmp.ne.s32.totalorder %s97, %s100
    %p109 = scmp.eq.s32.totalorder %s14, 1
    %p110 = por %p108, %p109
    %p111 = scmp.ne.s32.totalorder %s100, %s101
    %p112 = scmp.eq.s32.totalorder %s14, 0
    %p113 = por %p111, %p112
    %p114 = scmp.ne.s32.totalorder %s100, %s101
    %p115 = scmp.eq.s32.totalorder %s15, 1
    %p116 = por %p114, %p115
    %p118 = scmp.ne.s32.totalorder %s101, %s117
    %p119 = scmp.eq.s32.totalorder %s15, 0
    %p120 = por %p118, %p119
    %p121 = scmp.le.s32.totalorder 1, %s9
    %p122 = scmp.lt.s32.totalorder %s9, 3
    %p123 = pnand %p121, %p122
    %p124 = pneg %p123
    // Predicated region
    $region9: #{detr_forward.54} parent=5 // pred_check
      _
    $region10: #{detr_forward.54} parent=5 // pred_check_branch
      %126 = sbr.rel (%p123) target = $region12
    $region11: #{detr_forward.54} parent=5 // pred_region
      %s127 = ssub.s32 %s9, 1
    $region12: #{detr_forward.54} parent=5 // pred_fallthru
      _
    %p128 = scmp.lt.s32.totalorder %s9, 2
    // Predicated region
    $region13: #{detr_forward.54} parent=5 // pred_check
      %p129 = pneg %p128
    $region14: #{detr_forward.54} parent=5 // pred_check_branch
      %131 = sbr.rel (%p129) target = $region16
    $region15: #{detr_forward.54} parent=5 // pred_region
      // Predicated region
      $region17: #{detr_forward.54} parent=15 // pred_check
        %p132 = pneg %p29
      $region18: #{detr_forward.54} parent=15 // pred_check_branch
        %134 = sbr.rel (%p132) target = $region20
      $region19: #{detr_forward.54} parent=15 // pred_region
        %p135 = scmp.lt.s32.totalorder %s9, 1
        %s136 = scalar_select %p135, %s9, 1
        %s137 = smul.addr %s136, 32
        %s138 = smul.addr %s137, 4
        %s139 = scalar_lea.vmem %s0, %s138
      $region20: #{detr_forward.54} parent=15 // pred_fallthru
        _
      // Predicated region
      $region21: #{detr_forward.54} parent=15 // pred_check
        %p140 = pneg %p55
      $region22: #{detr_forward.54} parent=15 // pred_check_branch
        %142 = sbr.rel (%p140) target = $region24
      $region23: #{detr_forward.54} parent=15 // pred_region
        %p143 = scmp.lt.s32.totalorder %s9, 1
        %s144 = scalar_select %p143, %s9, 1
        %s145 = smul.addr %s144, 32
        %s146 = smul.addr %s145, 4
        %s147 = scalar_lea.vmem %s1, %s146
      $region24: #{detr_forward.54} parent=15 // pred_fallthru
        _
      // Predicated region
      $region25: #{detr_forward.54} parent=15 // pred_check
        %p148 = pneg %p81
      $region26: #{detr_forward.54} parent=15 // pred_check_branch
        %150 = sbr.rel (%p148) target = $region28
      $region27: #{detr_forward.54} parent=15 // pred_region
        %p151 = scmp.lt.s32.totalorder %s9, 1
        %s152 = scalar_select %p151, %s9, 1
        %s153 = smul.addr %s152, 32
        %s154 = smul.addr %s153, 4
        %s155 = scalar_lea.vmem %s2, %s154
      $region28: #{detr_forward.54} parent=15 // pred_fallthru
        _
    $region16: #{detr_forward.54} parent=5 // pred_fallthru
      _
    %p156 = scmp.le.s32.totalorder 1, %s9
    %p157 = scmp.lt.s32.totalorder %s9, 3
    %p158 = pnand %p156, %p157
    %p159 = pneg %p158
    // Predicated region
    $region29: #{detr_forward.54} parent=5 // pred_check
      _
    $region30: #{detr_forward.54} parent=5 // pred_check_branch
      %161 = sbr.rel (%p158) target = $region32
    $region31: #{detr_forward.54} parent=5 // pred_region
      %s162 = ssub.s32 %s9, 1
      %p163 = scmp.lt.s32.totalorder %s14, 1
      %s164 = scalar_select %p163, %s14, 1
      %s165 = smul.addr %s164, 32
      %s166 = smul.addr %s165, 4
      %s167 = scalar_lea.vmem %s0, %s166
      %p168 = pneg %p35
      %p169 = pneg %p32
      %p170 = scmp.lt.s32.totalorder %s14, 1
      %s171 = scalar_select %p170, %s14, 1
      %s172 = smul.addr %s171, 32
      %s173 = smul.addr %s172, 4
      %s174 = scalar_lea.vmem %s1, %s173
      %p175 = pneg %p61
      %p176 = pneg %p58
      %p177 = scmp.lt.s32.totalorder %s14, 1
      %s178 = scalar_select %p177, %s14, 1
      %s179 = smul.addr %s178, 32
      %s180 = smul.addr %s179, 4
      %s181 = scalar_lea.vmem %s2, %s180
      %p182 = pneg %p87
      %p183 = pneg %p84
      %p184 = pneg %p113
      %p185 = pneg %p110
      %p186 = scmp.lt.s32.totalorder %s14, 1
      %s187 = scalar_select %p186, %s14, 1
      %s188 = smul.addr %s187, 32
      %s189 = smul.addr %s188, 4
      %s190 = scalar_lea.vmem %s3, %s189
      %p191 = scmp.lt.s32.totalorder %s14, 1
      %s192 = scalar_select %p191, %s14, 1
      %s193 = smul.addr %s192, 32
      %s194 = smul.addr %s193, 4
      %s195 = scalar_lea.vmem %s0, %s194
      %p196 = scmp.lt.s32.totalorder %s14, 1
      %s197 = scalar_select %p196, %s14, 1
      %s198 = smul.addr %s197, 32
      %s199 = smul.addr %s198, 4
      %s200 = scalar_lea.vmem %s1, %s199
      %p201 = scmp.lt.s32.totalorder %s14, 1
      %s202 = scalar_select %p201, %s14, 1
      %s203 = smul.addr %s202, 32
      %s204 = smul.addr %s203, 4
      %s205 = scalar_lea.vmem %s2, %s204
      %p206 = scmp.lt.s32.totalorder %s14, 1
      %s207 = scalar_select %p206, %s14, 1
      %s208 = smul.addr %s207, 32
      %s209 = smul.addr %s208, 4
      %s210 = scalar_lea.vmem %s3, %s209
      %v212 = vld [vmem:[%s195] sm:$0xf]
      %v213 = vld [vmem:[%s195 + $0x4] sm:$0xf]
      %v214 = vld [vmem:[%s195 + $0x8] sm:$0xf]
      %v215 = vld [vmem:[%s195 + $0xc] sm:$0xf]
      %v216 = vld [vmem:[%s195 + $0x10] sm:$0xf]
      %v217 = vld [vmem:[%s195 + $0x14] sm:$0xf]
      %v218 = vld [vmem:[%s195 + $0x18] sm:$0xf]
      %v219 = vld [vmem:[%s195 + $0x1c] sm:$0xf]
      %v220 = vld [vmem:[%s195 + $0x20] sm:$0xf]
      %v221 = vld [vmem:[%s195 + $0x24] sm:$0xf]
      %v222 = vld [vmem:[%s195 + $0x28] sm:$0xf]
      %v223 = vld [vmem:[%s195 + $0x2c] sm:$0xf]
      %v224 = vld [vmem:[%s195 + $0x30] sm:$0xf]
      %v225 = vld [vmem:[%s195 + $0x34] sm:$0xf]
      %v226 = vld [vmem:[%s195 + $0x38] sm:$0xf]
      %v227 = vld [vmem:[%s195 + $0x3c] sm:$0xf]
      %v228 = vld [vmem:[%s195 + $0x40] sm:$0xf]
      %v229 = vld [vmem:[%s195 + $0x44] sm:$0xf]
      %v230 = vld [vmem:[%s195 + $0x48] sm:$0xf]
      %v231 = vld [vmem:[%s195 + $0x4c] sm:$0xf]
      %v232 = vld [vmem:[%s195 + $0x50] sm:$0xf]
      %v233 = vld [vmem:[%s195 + $0x54] sm:$0xf]
      %v234 = vld [vmem:[%s195 + $0x58] sm:$0xf]
      %v235 = vld [vmem:[%s195 + $0x5c] sm:$0xf]
      %v236 = vld [vmem:[%s195 + $0x60] sm:$0xf]
      %v237 = vld [vmem:[%s195 + $0x64] sm:$0xf]
      %v238 = vld [vmem:[%s195 + $0x68] sm:$0xf]
      %v239 = vld [vmem:[%s195 + $0x6c] sm:$0xf]
      %v240 = vld [vmem:[%s195 + $0x70] sm:$0xf]
      %v241 = vld [vmem:[%s195 + $0x74] sm:$0xf]
      %v242 = vld [vmem:[%s195 + $0x78] sm:$0xf]
      %v243 = vld [vmem:[%s195 + $0x7c] sm:$0xf]
      %v244 = vunpack.c.l.bf16 %v212
      %v245 = vunpack.c.l.bf16 %v213
      %v246 = vunpack.c.l.bf16 %v214
      %v247 = vunpack.c.l.bf16 %v215
      %v248 = vunpack.c.l.bf16 %v216
      %v249 = vunpack.c.l.bf16 %v217
      %v250 = vunpack.c.l.bf16 %v218
      %v251 = vunpack.c.l.bf16 %v219
      %v252 = vunpack.c.l.bf16 %v220
      %v253 = vunpack.c.l.bf16 %v221
      %v254 = vunpack.c.l.bf16 %v222
      %v255 = vunpack.c.l.bf16 %v223
      %v256 = vunpack.c.l.bf16 %v224
      %v257 = vunpack.c.l.bf16 %v225
      %v258 = vunpack.c.l.bf16 %v226
      %v259 = vunpack.c.l.bf16 %v227
      %v260 = vunpack.c.l.bf16 %v228
      %v261 = vunpack.c.l.bf16 %v229
      %v262 = vunpack.c.l.bf16 %v230
      %v263 = vunpack.c.l.bf16 %v231
      %v264 = vunpack.c.l.bf16 %v232
      %v265 = vunpack.c.l.bf16 %v233
      %v266 = vunpack.c.l.bf16 %v234
      %v267 = vunpack.c.l.bf16 %v235
      %v268 = vunpack.c.l.bf16 %v236
      %v269 = vunpack.c.l.bf16 %v237
      %v270 = vunpack.c.l.bf16 %v238
      %v271 = vunpack.c.l.bf16 %v239
      %v272 = vunpack.c.l.bf16 %v240
      %v273 = vunpack.c.l.bf16 %v241
      %v274 = vunpack.c.l.bf16 %v242
      %v275 = vunpack.c.l.bf16 %v243
      %v276 = vmul.f32 %v244, 0.35351563
      %v277 = vmul.f32 %v245, 0.35351563
      %v278 = vmul.f32 %v246, 0.35351563
      %v279 = vmul.f32 %v247, 0.35351563
      %v280 = vmul.f32 %v248, 0.35351563
      %v281 = vmul.f32 %v249, 0.35351563
      %v282 = vmul.f32 %v250, 0.35351563
      %v283 = vmul.f32 %v251, 0.35351563
      %v284 = vmul.f32 %v252, 0.35351563
      %v285 = vmul.f32 %v253, 0.35351563
      %v286 = vmul.f32 %v254, 0.35351563
      %v287 = vmul.f32 %v255, 0.35351563
      %v288 = vmul.f32 %v256, 0.35351563
      %v289 = vmul.f32 %v257, 0.35351563
      %v290 = vmul.f32 %v258, 0.35351563
      %v291 = vmul.f32 %v259, 0.35351563
      %v292 = vmul.f32 %v260, 0.35351563
      %v293 = vmul.f32 %v261, 0.35351563
      %v294 = vmul.f32 %v262, 0.35351563
      %v295 = vmul.f32 %v263, 0.35351563
      %v296 = vmul.f32 %v264, 0.35351563
      %v297 = vmul.f32 %v265, 0.35351563
      %v298 = vmul.f32 %v266, 0.35351563
      %v299 = vmul.f32 %v267, 0.35351563
      %v300 = vmul.f32 %v268, 0.35351563
      %v301 = vmul.f32 %v269, 0.35351563
      %v302 = vmul.f32 %v270, 0.35351563
      %v303 = vmul.f32 %v271, 0.35351563
      %v304 = vmul.f32 %v272, 0.35351563
      %v305 = vmul.f32 %v273, 0.35351563
      %v306 = vmul.f32 %v274, 0.35351563
      %v307 = vmul.f32 %v275, 0.35351563
      %v308 = vpack.c.bf16 %v276, %v276
      %v309 = vpack.c.bf16 %v277, %v277
      %v310 = vpack.c.bf16 %v278, %v278
      %v311 = vpack.c.bf16 %v279, %v279
      %v312 = vpack.c.bf16 %v280, %v280
      %v313 = vpack.c.bf16 %v281, %v281
      %v314 = vpack.c.bf16 %v282, %v282
      %v315 = vpack.c.bf16 %v283, %v283
      %v316 = vpack.c.bf16 %v284, %v284
      %v317 = vpack.c.bf16 %v285, %v285
      %v318 = vpack.c.bf16 %v286, %v286
      %v319 = vpack.c.bf16 %v287, %v287
      %v320 = vpack.c.bf16 %v288, %v288
      %v321 = vpack.c.bf16 %v289, %v289
      %v322 = vpack.c.bf16 %v290, %v290
      %v323 = vpack.c.bf16 %v291, %v291
      %v324 = vpack.c.bf16 %v292, %v292
      %v325 = vpack.c.bf16 %v293, %v293
      %v326 = vpack.c.bf16 %v294, %v294
      %v327 = vpack.c.bf16 %v295, %v295
      %v328 = vpack.c.bf16 %v296, %v296
      %v329 = vpack.c.bf16 %v297, %v297
      %v330 = vpack.c.bf16 %v298, %v298
      %v331 = vpack.c.bf16 %v299, %v299
      %v332 = vpack.c.bf16 %v300, %v300
      %v333 = vpack.c.bf16 %v301, %v301
      %v334 = vpack.c.bf16 %v302, %v302
      %v335 = vpack.c.bf16 %v303, %v303
      %v336 = vpack.c.bf16 %v304, %v304
      %v337 = vpack.c.bf16 %v305, %v305
      %v338 = vpack.c.bf16 %v306, %v306
      %v339 = vpack.c.bf16 %v307, %v307
      %v340 = vld [vmem:[%s200] sm:$0xf]
      %v341 = vld [vmem:[%s200 + $0x4] sm:$0xf]
      %v342 = vld [vmem:[%s200 + $0x8] sm:$0xf]
      %v343 = vld [vmem:[%s200 + $0xc] sm:$0xf]
      %v344 = vld [vmem:[%s200 + $0x10] sm:$0xf]
      %v345 = vld [vmem:[%s200 + $0x14] sm:$0xf]
      %v346 = vld [vmem:[%s200 + $0x18] sm:$0xf]
      %v347 = vld [vmem:[%s200 + $0x1c] sm:$0xf]
      %v348 = vld [vmem:[%s200 + $0x20] sm:$0xf]
      %v349 = vld [vmem:[%s200 + $0x24] sm:$0xf]
      %v350 = vld [vmem:[%s200 + $0x28] sm:$0xf]
      %v351 = vld [vmem:[%s200 + $0x2c] sm:$0xf]
      %v352 = vld [vmem:[%s200 + $0x30] sm:$0xf]
      %v353 = vld [vmem:[%s200 + $0x34] sm:$0xf]
      %v354 = vld [vmem:[%s200 + $0x38] sm:$0xf]
      %v355 = vld [vmem:[%s200 + $0x3c] sm:$0xf]
      %v356 = vld [vmem:[%s200 + $0x40] sm:$0xf]
      %v357 = vld [vmem:[%s200 + $0x44] sm:$0xf]
      %v358 = vld [vmem:[%s200 + $0x48] sm:$0xf]
      %v359 = vld [vmem:[%s200 + $0x4c] sm:$0xf]
      %v360 = vld [vmem:[%s200 + $0x50] sm:$0xf]
      %v361 = vld [vmem:[%s200 + $0x54] sm:$0xf]
      %v362 = vld [vmem:[%s200 + $0x58] sm:$0xf]
      %v363 = vld [vmem:[%s200 + $0x5c] sm:$0xf]
      %v364 = vld [vmem:[%s200 + $0x60] sm:$0xf]
      %v365 = vld [vmem:[%s200 + $0x64] sm:$0xf]
      %v366 = vld [vmem:[%s200 + $0x68] sm:$0xf]
      %v367 = vld [vmem:[%s200 + $0x6c] sm:$0xf]
      %v368 = vld [vmem:[%s200 + $0x70] sm:$0xf]
      %v369 = vld [vmem:[%s200 + $0x74] sm:$0xf]
      %v370 = vld [vmem:[%s200 + $0x78] sm:$0xf]
      %v371 = vld [vmem:[%s200 + $0x7c] sm:$0xf]
      %v372 = vld [vmem:[%s205] sm:$0xf]
      %v373 = vld [vmem:[%s205 + $0x4] sm:$0xf]
      %v374 = vld [vmem:[%s205 + $0x8] sm:$0xf]
      %v375 = vld [vmem:[%s205 + $0xc] sm:$0xf]
      %v376 = vld [vmem:[%s205 + $0x10] sm:$0xf]
      %v377 = vld [vmem:[%s205 + $0x14] sm:$0xf]
      %v378 = vld [vmem:[%s205 + $0x18] sm:$0xf]
      %v379 = vld [vmem:[%s205 + $0x1c] sm:$0xf]
      %v380 = vld [vmem:[%s205 + $0x20] sm:$0xf]
      %v381 = vld [vmem:[%s205 + $0x24] sm:$0xf]
      %v382 = vld [vmem:[%s205 + $0x28] sm:$0xf]
      %v383 = vld [vmem:[%s205 + $0x2c] sm:$0xf]
      %v384 = vld [vmem:[%s205 + $0x30] sm:$0xf]
      %v385 = vld [vmem:[%s205 + $0x34] sm:$0xf]
      %v386 = vld [vmem:[%s205 + $0x38] sm:$0xf]
      %v387 = vld [vmem:[%s205 + $0x3c] sm:$0xf]
      %v388 = vld [vmem:[%s205 + $0x40] sm:$0xf]
      %v389 = vld [vmem:[%s205 + $0x44] sm:$0xf]
      %v390 = vld [vmem:[%s205 + $0x48] sm:$0xf]
      %v391 = vld [vmem:[%s205 + $0x4c] sm:$0xf]
      %v392 = vld [vmem:[%s205 + $0x50] sm:$0xf]
      %v393 = vld [vmem:[%s205 + $0x54] sm:$0xf]
      %v394 = vld [vmem:[%s205 + $0x58] sm:$0xf]
      %v395 = vld [vmem:[%s205 + $0x5c] sm:$0xf]
      %v396 = vld [vmem:[%s205 + $0x60] sm:$0xf]
      %v397 = vld [vmem:[%s205 + $0x64] sm:$0xf]
      %v398 = vld [vmem:[%s205 + $0x68] sm:$0xf]
      %v399 = vld [vmem:[%s205 + $0x6c] sm:$0xf]
      %v400 = vld [vmem:[%s205 + $0x70] sm:$0xf]
      %v401 = vld [vmem:[%s205 + $0x74] sm:$0xf]
      %v402 = vld [vmem:[%s205 + $0x78] sm:$0xf]
      %v403 = vld [vmem:[%s205 + $0x7c] sm:$0xf]
      %v412 = vunpack.c.l.b16 %v308
      %v413 = vunpack.c.l.b16 %v309
      %v414 = vunpack.c.l.b16 %v310
      %v415 = vunpack.c.l.b16 %v311
      %v416 = vunpack.c.l.b16 %v312
      %v417 = vunpack.c.l.b16 %v313
      %v418 = vunpack.c.l.b16 %v314
      %v419 = vunpack.c.l.b16 %v315
      %v420 = vpack.c.b16 %v413, %v412
      %v421 = vpack.c.b16 %v415, %v414
      %v422 = vpack.c.b16 %v417, %v416
      %v423 = vpack.c.b16 %v419, %v418
      %v432 = vunpack.c.l.b16 %v340
      %v433 = vunpack.c.l.b16 %v341
      %v434 = vunpack.c.l.b16 %v342
      %v435 = vunpack.c.l.b16 %v343
      %v436 = vunpack.c.l.b16 %v344
      %v437 = vunpack.c.l.b16 %v345
      %v438 = vunpack.c.l.b16 %v346
      %v439 = vunpack.c.l.b16 %v347
      %v440 = vpack.c.b16 %v433, %v432
      %v441 = vpack.c.b16 %v435, %v434
      %v442 = vpack.c.b16 %v437, %v436
      %v443 = vpack.c.b16 %v439, %v438
      %vm444 = vcmask 64512
      %v446 = vsel %vm444, %v420, 0
      %v449 = vsel %vm444, %v421, 0
      %v452 = vsel %vm444, %v422, 0
      %v455 = vsel %vm444, %v423, 0
      %v458 = vsel %vm444, %v440, 0
      %v461 = vsel %vm444, %v441, 0
      %v464 = vsel %vm444, %v442, 0
      %v467 = vsel %vm444, %v443, 0
      %469 = vmatpush.bf16.xpose.msra.mxu0 0
      %470 = vmatpush.bf16.xpose.msra.mxu0 0
      %471 = vmatpush.bf16.xpose.msra.mxu0 0
      %472 = vmatpush.bf16.xpose.msra.mxu0 0
      %473 = vmatpush.bf16.xpose.msra.mxu0 %v467
      %474 = vmatpush.bf16.xpose.msra.mxu0 %v464
      %475 = vmatpush.bf16.xpose.msra.mxu0 %v461
      %476 = vmatpush.bf16.xpose.msra.mxu0 %v458
      %477 = vmatmul.bf16.gmra.mxu0 %v446
      %v478 = vpop.f32.mrf.mxu0
      %v479 = vadd.f32 0.0, %v478
      %v480 = vpop.f32.mrf.mxu0
      %v481 = vadd.f32 0.0, %v480
      %482 = vmatmul.bf16.gmra.mxu0 %v449
      %v483 = vpop.f32.mrf.mxu0
      %v484 = vadd.f32 0.0, %v483
      %v485 = vpop.f32.mrf.mxu0
      %v486 = vadd.f32 0.0, %v485
      %487 = vmatmul.bf16.gmra.mxu0 %v452
      %v488 = vpop.f32.mrf.mxu0
      %v489 = vadd.f32 0.0, %v488
      %v490 = vpop.f32.mrf.mxu0
      %v491 = vadd.f32 0.0, %v490
      %492 = vmatmul.bf16.gmra.mxu0 %v455
      %v493 = vpop.f32.mrf.mxu0
      %v494 = vadd.f32 0.0, %v493
      %v495 = vpop.f32.mrf.mxu0
      %v496 = vadd.f32 0.0, %v495
      %497 = vdwg.mxu0
      %v506 = vunpack.c.l.b16 %v316
      %v507 = vunpack.c.l.b16 %v317
      %v508 = vunpack.c.l.b16 %v318
      %v509 = vunpack.c.l.b16 %v319
      %v510 = vunpack.c.l.b16 %v320
      %v511 = vunpack.c.l.b16 %v321
      %v512 = vunpack.c.l.b16 %v322
      %v513 = vunpack.c.l.b16 %v323
      %v514 = vpack.c.b16 %v507, %v506
      %v515 = vpack.c.b16 %v509, %v508
      %v516 = vpack.c.b16 %v511, %v510
      %v517 = vpack.c.b16 %v513, %v512
      %v526 = vunpack.c.l.b16 %v348
      %v527 = vunpack.c.l.b16 %v349
      %v528 = vunpack.c.l.b16 %v350
      %v529 = vunpack.c.l.b16 %v351
      %v530 = vunpack.c.l.b16 %v352
      %v531 = vunpack.c.l.b16 %v353
      %v532 = vunpack.c.l.b16 %v354
      %v533 = vunpack.c.l.b16 %v355
      %v534 = vpack.c.b16 %v527, %v526
      %v535 = vpack.c.b16 %v529, %v528
      %v536 = vpack.c.b16 %v531, %v530
      %v537 = vpack.c.b16 %v533, %v532
      %v539 = vsel %vm444, %v514, 0
      %v542 = vsel %vm444, %v515, 0
      %v545 = vsel %vm444, %v516, 0
      %v548 = vsel %vm444, %v517, 0
      %v551 = vsel %vm444, %v534, 0
      %v554 = vsel %vm444, %v535, 0
      %v557 = vsel %vm444, %v536, 0
      %v560 = vsel %vm444, %v537, 0
      %562 = vmatpush.bf16.xpose.msra.mxu0 0
      %563 = vmatpush.bf16.xpose.msra.mxu0 0
      %564 = vmatpush.bf16.xpose.msra.mxu0 0
      %565 = vmatpush.bf16.xpose.msra.mxu0 0
      %566 = vmatpush.bf16.xpose.msra.mxu0 %v560
      %567 = vmatpush.bf16.xpose.msra.mxu0 %v557
      %568 = vmatpush.bf16.xpose.msra.mxu0 %v554
      %569 = vmatpush.bf16.xpose.msra.mxu0 %v551
      %570 = vmatmul.bf16.gmra.mxu0 %v539
      %v571 = vpop.f32.mrf.mxu0
      %v572 = vadd.f32 0.0, %v571
      %v573 = vpop.f32.mrf.mxu0
      %v574 = vadd.f32 0.0, %v573
      %575 = vmatmul.bf16.gmra.mxu0 %v542
      %v576 = vpop.f32.mrf.mxu0
      %v577 = vadd.f32 0.0, %v576
      %v578 = vpop.f32.mrf.mxu0
      %v579 = vadd.f32 0.0, %v578
      %580 = vmatmul.bf16.gmra.mxu0 %v545
      %v581 = vpop.f32.mrf.mxu0
      %v582 = vadd.f32 0.0, %v581
      %v583 = vpop.f32.mrf.mxu0
      %v584 = vadd.f32 0.0, %v583
      %585 = vmatmul.bf16.gmra.mxu0 %v548
      %v586 = vpop.f32.mrf.mxu0
      %v587 = vadd.f32 0.0, %v586
      %v588 = vpop.f32.mrf.mxu0
      %v589 = vadd.f32 0.0, %v588
      %590 = vdwg.mxu0
      %v599 = vunpack.c.l.b16 %v324
      %v600 = vunpack.c.l.b16 %v325
      %v601 = vunpack.c.l.b16 %v326
      %v602 = vunpack.c.l.b16 %v327
      %v603 = vunpack.c.l.b16 %v328
      %v604 = vunpack.c.l.b16 %v329
      %v605 = vunpack.c.l.b16 %v330
      %v606 = vunpack.c.l.b16 %v331
      %v607 = vpack.c.b16 %v600, %v599
      %v608 = vpack.c.b16 %v602, %v601
      %v609 = vpack.c.b16 %v604, %v603
      %v610 = vpack.c.b16 %v606, %v605
      %v619 = vunpack.c.l.b16 %v356
      %v620 = vunpack.c.l.b16 %v357
      %v621 = vunpack.c.l.b16 %v358
      %v622 = vunpack.c.l.b16 %v359
      %v623 = vunpack.c.l.b16 %v360
      %v624 = vunpack.c.l.b16 %v361
      %v625 = vunpack.c.l.b16 %v362
      %v626 = vunpack.c.l.b16 %v363
      %v627 = vpack.c.b16 %v620, %v619
      %v628 = vpack.c.b16 %v622, %v621
      %v629 = vpack.c.b16 %v624, %v623
      %v630 = vpack.c.b16 %v626, %v625
      %v632 = vsel %vm444, %v607, 0
      %v635 = vsel %vm444, %v608, 0
      %v638 = vsel %vm444, %v609, 0
      %v641 = vsel %vm444, %v610, 0
      %v644 = vsel %vm444, %v627, 0
      %v647 = vsel %vm444, %v628, 0
      %v650 = vsel %vm444, %v629, 0
      %v653 = vsel %vm444, %v630, 0
      %655 = vmatpush.bf16.xpose.msra.mxu0 0
      %656 = vmatpush.bf16.xpose.msra.mxu0 0
      %657 = vmatpush.bf16.xpose.msra.mxu0 0
      %658 = vmatpush.bf16.xpose.msra.mxu0 0
      %659 = vmatpush.bf16.xpose.msra.mxu0 %v653
      %660 = vmatpush.bf16.xpose.msra.mxu0 %v650
      %661 = vmatpush.bf16.xpose.msra.mxu0 %v647
      %662 = vmatpush.bf16.xpose.msra.mxu0 %v644
      %663 = vmatmul.bf16.gmra.mxu0 %v632
      %v664 = vpop.f32.mrf.mxu0
      %v665 = vadd.f32 0.0, %v664
      %v666 = vpop.f32.mrf.mxu0
      %v667 = vadd.f32 0.0, %v666
      %668 = vmatmul.bf16.gmra.mxu0 %v635
      %v669 = vpop.f32.mrf.mxu0
      %v670 = vadd.f32 0.0, %v669
      %v671 = vpop.f32.mrf.mxu0
      %v672 = vadd.f32 0.0, %v671
      %673 = vmatmul.bf16.gmra.mxu0 %v638
      %v674 = vpop.f32.mrf.mxu0
      %v675 = vadd.f32 0.0, %v674
      %v676 = vpop.f32.mrf.mxu0
      %v677 = vadd.f32 0.0, %v676
      %678 = vmatmul.bf16.gmra.mxu0 %v641
      %v679 = vpop.f32.mrf.mxu0
      %v680 = vadd.f32 0.0, %v679
      %v681 = vpop.f32.mrf.mxu0
      %v682 = vadd.f32 0.0, %v681
      %683 = vdwg.mxu0
      %v692 = vunpack.c.l.b16 %v332
      %v693 = vunpack.c.l.b16 %v333
      %v694 = vunpack.c.l.b16 %v334
      %v695 = vunpack.c.l.b16 %v335
      %v696 = vunpack.c.l.b16 %v336
      %v697 = vunpack.c.l.b16 %v337
      %v698 = vunpack.c.l.b16 %v338
      %v699 = vunpack.c.l.b16 %v339
      %v700 = vpack.c.b16 %v693, %v692
      %v701 = vpack.c.b16 %v695, %v694
      %v702 = vpack.c.b16 %v697, %v696
      %v703 = vpack.c.b16 %v699, %v698
      %v712 = vunpack.c.l.b16 %v364
      %v713 = vunpack.c.l.b16 %v365
      %v714 = vunpack.c.l.b16 %v366
      %v715 = vunpack.c.l.b16 %v367
      %v716 = vunpack.c.l.b16 %v368
      %v717 = vunpack.c.l.b16 %v369
      %v718 = vunpack.c.l.b16 %v370
      %v719 = vunpack.c.l.b16 %v371
      %v720 = vpack.c.b16 %v713, %v712
      %v721 = vpack.c.b16 %v715, %v714
      %v722 = vpack.c.b16 %v717, %v716
      %v723 = vpack.c.b16 %v719, %v718
      %v725 = vsel %vm444, %v700, 0
      %v728 = vsel %vm444, %v701, 0
      %v731 = vsel %vm444, %v702, 0
      %v734 = vsel %vm444, %v703, 0
      %v737 = vsel %vm444, %v720, 0
      %v740 = vsel %vm444, %v721, 0
      %v743 = vsel %vm444, %v722, 0
      %v746 = vsel %vm444, %v723, 0
      %748 = vmatpush.bf16.xpose.msra.mxu0 0
      %749 = vmatpush.bf16.xpose.msra.mxu0 0
      %750 = vmatpush.bf16.xpose.msra.mxu0 0
      %751 = vmatpush.bf16.xpose.msra.mxu0 0
      %752 = vmatpush.bf16.xpose.msra.mxu0 %v746
      %753 = vmatpush.bf16.xpose.msra.mxu0 %v743
      %754 = vmatpush.bf16.xpose.msra.mxu0 %v740
      %755 = vmatpush.bf16.xpose.msra.mxu0 %v737
      %756 = vmatmul.bf16.gmra.mxu0 %v725
      %v757 = vpop.f32.mrf.mxu0
      %v758 = vadd.f32 0.0, %v757
      %v759 = vpop.f32.mrf.mxu0
      %v760 = vadd.f32 0.0, %v759
      %761 = vmatmul.bf16.gmra.mxu0 %v728
      %v762 = vpop.f32.mrf.mxu0
      %v763 = vadd.f32 0.0, %v762
      %v764 = vpop.f32.mrf.mxu0
      %v765 = vadd.f32 0.0, %v764
      %766 = vmatmul.bf16.gmra.mxu0 %v731
      %v767 = vpop.f32.mrf.mxu0
      %v768 = vadd.f32 0.0, %v767
      %v769 = vpop.f32.mrf.mxu0
      %v770 = vadd.f32 0.0, %v769
      %771 = vmatmul.bf16.gmra.mxu0 %v734
      %v772 = vpop.f32.mrf.mxu0
      %v773 = vadd.f32 0.0, %v772
      %v774 = vpop.f32.mrf.mxu0
      %v775 = vadd.f32 0.0, %v774
      %776 = vdwg.mxu0
      %vm777 = vcmask 523264
      %v778 = vsel %vm777, %v479, -inf
      %779 = vmax.xlane.f32.xlu0 %v778
      %v780 = vpop.xlane.xlu0 %779
      %v781 = vsel %vm777, %v481, -inf
      %782 = vmax.xlane.f32.xlu0 %v781
      %v783 = vpop.xlane.xlu0 %782
      %v784 = vsel %vm777, %v484, -inf
      %785 = vmax.xlane.f32.xlu0 %v784
      %v786 = vpop.xlane.xlu0 %785
      %v787 = vsel %vm777, %v486, -inf
      %788 = vmax.xlane.f32.xlu0 %v787
      %v789 = vpop.xlane.xlu0 %788
      %v790 = vsel %vm777, %v489, -inf
      %791 = vmax.xlane.f32.xlu0 %v790
      %v792 = vpop.xlane.xlu0 %791
      %v793 = vsel %vm777, %v491, -inf
      %794 = vmax.xlane.f32.xlu0 %v793
      %v795 = vpop.xlane.xlu0 %794
      %v796 = vsel %vm777, %v494, -inf
      %797 = vmax.xlane.f32.xlu0 %v796
      %v798 = vpop.xlane.xlu0 %797
      %v799 = vsel %vm777, %v496, -inf
      %800 = vmax.xlane.f32.xlu0 %v799
      %v801 = vpop.xlane.xlu0 %800
      %v802 = vsel %vm777, %v572, -inf
      %803 = vmax.xlane.f32.xlu0 %v802
      %v804 = vpop.xlane.xlu0 %803
      %v805 = vsel %vm777, %v574, -inf
      %806 = vmax.xlane.f32.xlu0 %v805
      %v807 = vpop.xlane.xlu0 %806
      %v808 = vsel %vm777, %v577, -inf
      %809 = vmax.xlane.f32.xlu0 %v808
      %v810 = vpop.xlane.xlu0 %809
      %v811 = vsel %vm777, %v579, -inf
      %812 = vmax.xlane.f32.xlu0 %v811
      %v813 = vpop.xlane.xlu0 %812
      %v814 = vsel %vm777, %v582, -inf
      %815 = vmax.xlane.f32.xlu0 %v814
      %v816 = vpop.xlane.xlu0 %815
      %v817 = vsel %vm777, %v584, -inf
      %818 = vmax.xlane.f32.xlu0 %v817
      %v819 = vpop.xlane.xlu0 %818
      %v820 = vsel %vm777, %v587, -inf
      %821 = vmax.xlane.f32.xlu0 %v820
      %v822 = vpop.xlane.xlu0 %821
      %v823 = vsel %vm777, %v589, -inf
      %824 = vmax.xlane.f32.xlu0 %v823
      %v825 = vpop.xlane.xlu0 %824
      %v826 = vsel %vm777, %v665, -inf
      %827 = vmax.xlane.f32.xlu0 %v826
      %v828 = vpop.xlane.xlu0 %827
      %v829 = vsel %vm777, %v667, -inf
      %830 = vmax.xlane.f32.xlu0 %v829
      %v831 = vpop.xlane.xlu0 %830
      %v832 = vsel %vm777, %v670, -inf
      %833 = vmax.xlane.f32.xlu0 %v832
      %v834 = vpop.xlane.xlu0 %833
      %v835 = vsel %vm777, %v672, -inf
      %836 = vmax.xlane.f32.xlu0 %v835
      %v837 = vpop.xlane.xlu0 %836
      %v838 = vsel %vm777, %v675, -inf
      %839 = vmax.xlane.f32.xlu0 %v838
      %v840 = vpop.xlane.xlu0 %839
      %v841 = vsel %vm777, %v677, -inf
      %842 = vmax.xlane.f32.xlu0 %v841
      %v843 = vpop.xlane.xlu0 %842
      %v844 = vsel %vm777, %v680, -inf
      %845 = vmax.xlane.f32.xlu0 %v844
      %v846 = vpop.xlane.xlu0 %845
      %v847 = vsel %vm777, %v682, -inf
      %848 = vmax.xlane.f32.xlu0 %v847
      %v849 = vpop.xlane.xlu0 %848
      %v850 = vsel %vm777, %v758, -inf
      %851 = vmax.xlane.f32.xlu0 %v850
      %v852 = vpop.xlane.xlu0 %851
      %v853 = vsel %vm777, %v760, -inf
      %854 = vmax.xlane.f32.xlu0 %v853
      %v855 = vpop.xlane.xlu0 %854
      %v856 = vsel %vm777, %v763, -inf
      %857 = vmax.xlane.f32.xlu0 %v856
      %v858 = vpop.xlane.xlu0 %857
      %v859 = vsel %vm777, %v765, -inf
      %860 = vmax.xlane.f32.xlu0 %v859
      %v861 = vpop.xlane.xlu0 %860
      %v862 = vsel %vm777, %v768, -inf
      %863 = vmax.xlane.f32.xlu0 %v862
      %v864 = vpop.xlane.xlu0 %863
      %v865 = vsel %vm777, %v770, -inf
      %866 = vmax.xlane.f32.xlu0 %v865
      %v867 = vpop.xlane.xlu0 %866
      %v868 = vsel %vm777, %v773, -inf
      %869 = vmax.xlane.f32.xlu0 %v868
      %v870 = vpop.xlane.xlu0 %869
      %v871 = vsel %vm777, %v775, -inf
      %872 = vmax.xlane.f32.xlu0 %v871
      %v873 = vpop.xlane.xlu0 %872
      %v874 = vsub.f32 %v479, %v780
      %v875 = vsub.f32 %v481, %v783
      %v876 = vsub.f32 %v484, %v786
      %v877 = vsub.f32 %v486, %v789
      %v878 = vsub.f32 %v489, %v792
      %v879 = vsub.f32 %v491, %v795
      %v880 = vsub.f32 %v494, %v798
      %v881 = vsub.f32 %v496, %v801
      %v882 = vsub.f32 %v572, %v804
      %v883 = vsub.f32 %v574, %v807
      %v884 = vsub.f32 %v577, %v810
      %v885 = vsub.f32 %v579, %v813
      %v886 = vsub.f32 %v582, %v816
      %v887 = vsub.f32 %v584, %v819
      %v888 = vsub.f32 %v587, %v822
      %v889 = vsub.f32 %v589, %v825
      %v890 = vsub.f32 %v665, %v828
      %v891 = vsub.f32 %v667, %v831
      %v892 = vsub.f32 %v670, %v834
      %v893 = vsub.f32 %v672, %v837
      %v894 = vsub.f32 %v675, %v840
      %v895 = vsub.f32 %v677, %v843
      %v896 = vsub.f32 %v680, %v846
      %v897 = vsub.f32 %v682, %v849
      %v898 = vsub.f32 %v758, %v852
      %v899 = vsub.f32 %v760, %v855
      %v900 = vsub.f32 %v763, %v858
      %v901 = vsub.f32 %v765, %v861
      %v902 = vsub.f32 %v768, %v864
      %v903 = vsub.f32 %v770, %v867
      %v904 = vsub.f32 %v773, %v870
      %v905 = vsub.f32 %v775, %v873
      %v906 = vmul.f32 %v874, 1.442695
      %v907 = vpow.pop %v906
      %v908 = vmul.f32 %v875, 1.442695
      %v909 = vpow.pop %v908
      %v910 = vmul.f32 %v876, 1.442695
      %v911 = vpow.pop %v910
      %v912 = vmul.f32 %v877, 1.442695
      %v913 = vpow.pop %v912
      %v914 = vmul.f32 %v878, 1.442695
      %v915 = vpow.pop %v914
      %v916 = vmul.f32 %v879, 1.442695
      %v917 = vpow.pop %v916
      %v918 = vmul.f32 %v880, 1.442695
      %v919 = vpow.pop %v918
      %v920 = vmul.f32 %v881, 1.442695
      %v921 = vpow.pop %v920
      %v922 = vmul.f32 %v882, 1.442695
      %v923 = vpow.pop %v922
      %v924 = vmul.f32 %v883, 1.442695
      %v925 = vpow.pop %v924
      %v926 = vmul.f32 %v884, 1.442695
      %v927 = vpow.pop %v926
      %v928 = vmul.f32 %v885, 1.442695
      %v929 = vpow.pop %v928
      %v930 = vmul.f32 %v886, 1.442695
      %v931 = vpow.pop %v930
      %v932 = vmul.f32 %v887, 1.442695
      %v933 = vpow.pop %v932
      %v934 = vmul.f32 %v888, 1.442695
      %v935 = vpow.pop %v934
      %v936 = vmul.f32 %v889, 1.442695
      %v937 = vpow.pop %v936
      %v938 = vmul.f32 %v890, 1.442695
      %v939 = vpow.pop %v938
      %v940 = vmul.f32 %v891, 1.442695
      %v941 = vpow.pop %v940
      %v942 = vmul.f32 %v892, 1.442695
      %v943 = vpow.pop %v942
      %v944 = vmul.f32 %v893, 1.442695
      %v945 = vpow.pop %v944
      %v946 = vmul.f32 %v894, 1.442695
      %v947 = vpow.pop %v946
      %v948 = vmul.f32 %v895, 1.442695
      %v949 = vpow.pop %v948
      %v950 = vmul.f32 %v896, 1.442695
      %v951 = vpow.pop %v950
      %v952 = vmul.f32 %v897, 1.442695
      %v953 = vpow.pop %v952
      %v954 = vmul.f32 %v898, 1.442695
      %v955 = vpow.pop %v954
      %v956 = vmul.f32 %v899, 1.442695
      %v957 = vpow.pop %v956
      %v958 = vmul.f32 %v900, 1.442695
      %v959 = vpow.pop %v958
      %v960 = vmul.f32 %v901, 1.442695
      %v961 = vpow.pop %v960
      %v962 = vmul.f32 %v902, 1.442695
      %v963 = vpow.pop %v962
      %v964 = vmul.f32 %v903, 1.442695
      %v965 = vpow.pop %v964
      %v966 = vmul.f32 %v904, 1.442695
      %v967 = vpow.pop %v966
      %v968 = vmul.f32 %v905, 1.442695
      %v969 = vpow.pop %v968
      %v970 = vsel %vm777, %v907, 0.0
      %971 = vadd.xlane.f32.xlu0 %v970
      %v972 = vpop.xlane.xlu0 %971
      %v973 = vsel %vm777, %v909, 0.0
      %974 = vadd.xlane.f32.xlu0 %v973
      %v975 = vpop.xlane.xlu0 %974
      %v976 = vsel %vm777, %v911, 0.0
      %977 = vadd.xlane.f32.xlu0 %v976
      %v978 = vpop.xlane.xlu0 %977
      %v979 = vsel %vm777, %v913, 0.0
      %980 = vadd.xlane.f32.xlu0 %v979
      %v981 = vpop.xlane.xlu0 %980
      %v982 = vsel %vm777, %v915, 0.0
      %983 = vadd.xlane.f32.xlu0 %v982
      %v984 = vpop.xlane.xlu0 %983
      %v985 = vsel %vm777, %v917, 0.0
      %986 = vadd.xlane.f32.xlu0 %v985
      %v987 = vpop.xlane.xlu0 %986
      %v988 = vsel %vm777, %v919, 0.0
      %989 = vadd.xlane.f32.xlu0 %v988
      %v990 = vpop.xlane.xlu0 %989
      %v991 = vsel %vm777, %v921, 0.0
      %992 = vadd.xlane.f32.xlu0 %v991
      %v993 = vpop.xlane.xlu0 %992
      %v994 = vsel %vm777, %v923, 0.0
      %995 = vadd.xlane.f32.xlu0 %v994
      %v996 = vpop.xlane.xlu0 %995
      %v997 = vsel %vm777, %v925, 0.0
      %998 = vadd.xlane.f32.xlu0 %v997
      %v999 = vpop.xlane.xlu0 %998
      %v1000 = vsel %vm777, %v927, 0.0
      %1001 = vadd.xlane.f32.xlu0 %v1000
      %v1002 = vpop.xlane.xlu0 %1001
      %v1003 = vsel %vm777, %v929, 0.0
      %1004 = vadd.xlane.f32.xlu0 %v1003
      %v1005 = vpop.xlane.xlu0 %1004
      %v1006 = vsel %vm777, %v931, 0.0
      %1007 = vadd.xlane.f32.xlu0 %v1006
      %v1008 = vpop.xlane.xlu0 %1007
      %v1009 = vsel %vm777, %v933, 0.0
      %1010 = vadd.xlane.f32.xlu0 %v1009
      %v1011 = vpop.xlane.xlu0 %1010
      %v1012 = vsel %vm777, %v935, 0.0
      %1013 = vadd.xlane.f32.xlu0 %v1012
      %v1014 = vpop.xlane.xlu0 %1013
      %v1015 = vsel %vm777, %v937, 0.0
      %1016 = vadd.xlane.f32.xlu0 %v1015
      %v1017 = vpop.xlane.xlu0 %1016
      %v1018 = vsel %vm777, %v939, 0.0
      %1019 = vadd.xlane.f32.xlu0 %v1018
      %v1020 = vpop.xlane.xlu0 %1019
      %v1021 = vsel %vm777, %v941, 0.0
      %1022 = vadd.xlane.f32.xlu0 %v1021
      %v1023 = vpop.xlane.xlu0 %1022
      %v1024 = vsel %vm777, %v943, 0.0
      %1025 = vadd.xlane.f32.xlu0 %v1024
      %v1026 = vpop.xlane.xlu0 %1025
      %v1027 = vsel %vm777, %v945, 0.0
      %1028 = vadd.xlane.f32.xlu0 %v1027
      %v1029 = vpop.xlane.xlu0 %1028
      %v1030 = vsel %vm777, %v947, 0.0
      %1031 = vadd.xlane.f32.xlu0 %v1030
      %v1032 = vpop.xlane.xlu0 %1031
      %v1033 = vsel %vm777, %v949, 0.0
      %1034 = vadd.xlane.f32.xlu0 %v1033
      %v1035 = vpop.xlane.xlu0 %1034
      %v1036 = vsel %vm777, %v951, 0.0
      %1037 = vadd.xlane.f32.xlu0 %v1036
      %v1038 = vpop.xlane.xlu0 %1037
      %v1039 = vsel %vm777, %v953, 0.0
      %1040 = vadd.xlane.f32.xlu0 %v1039
      %v1041 = vpop.xlane.xlu0 %1040
      %v1042 = vsel %vm777, %v955, 0.0
      %1043 = vadd.xlane.f32.xlu0 %v1042
      %v1044 = vpop.xlane.xlu0 %1043
      %v1045 = vsel %vm777, %v957, 0.0
      %1046 = vadd.xlane.f32.xlu0 %v1045
      %v1047 = vpop.xlane.xlu0 %1046
      %v1048 = vsel %vm777, %v959, 0.0
      %1049 = vadd.xlane.f32.xlu0 %v1048
      %v1050 = vpop.xlane.xlu0 %1049
      %v1051 = vsel %vm777, %v961, 0.0
      %1052 = vadd.xlane.f32.xlu0 %v1051
      %v1053 = vpop.xlane.xlu0 %1052
      %v1054 = vsel %vm777, %v963, 0.0
      %1055 = vadd.xlane.f32.xlu0 %v1054
      %v1056 = vpop.xlane.xlu0 %1055
      %v1057 = vsel %vm777, %v965, 0.0
      %1058 = vadd.xlane.f32.xlu0 %v1057
      %v1059 = vpop.xlane.xlu0 %1058
      %v1060 = vsel %vm777, %v967, 0.0
      %1061 = vadd.xlane.f32.xlu0 %v1060
      %v1062 = vpop.xlane.xlu0 %1061
      %v1063 = vsel %vm777, %v969, 0.0
      %1064 = vadd.xlane.f32.xlu0 %v1063
      %v1065 = vpop.xlane.xlu0 %1064
      %v1066 = vpack.c.bf16 %v907, %v907
      %v1067 = vpack.c.bf16 %v909, %v909
      %v1068 = vpack.c.bf16 %v911, %v911
      %v1069 = vpack.c.bf16 %v913, %v913
      %v1070 = vpack.c.bf16 %v915, %v915
      %v1071 = vpack.c.bf16 %v917, %v917
      %v1072 = vpack.c.bf16 %v919, %v919
      %v1073 = vpack.c.bf16 %v921, %v921
      %v1074 = vpack.c.bf16 %v923, %v923
      %v1075 = vpack.c.bf16 %v925, %v925
      %v1076 = vpack.c.bf16 %v927, %v927
      %v1077 = vpack.c.bf16 %v929, %v929
      %v1078 = vpack.c.bf16 %v931, %v931
      %v1079 = vpack.c.bf16 %v933, %v933
      %v1080 = vpack.c.bf16 %v935, %v935
      %v1081 = vpack.c.bf16 %v937, %v937
      %v1082 = vpack.c.bf16 %v939, %v939
      %v1083 = vpack.c.bf16 %v941, %v941
      %v1084 = vpack.c.bf16 %v943, %v943
      %v1085 = vpack.c.bf16 %v945, %v945
      %v1086 = vpack.c.bf16 %v947, %v947
      %v1087 = vpack.c.bf16 %v949, %v949
      %v1088 = vpack.c.bf16 %v951, %v951
      %v1089 = vpack.c.bf16 %v953, %v953
      %v1090 = vpack.c.bf16 %v955, %v955
      %v1091 = vpack.c.bf16 %v957, %v957
      %v1092 = vpack.c.bf16 %v959, %v959
      %v1093 = vpack.c.bf16 %v961, %v961
      %v1094 = vpack.c.bf16 %v963, %v963
      %v1095 = vpack.c.bf16 %v965, %v965
      %v1096 = vpack.c.bf16 %v967, %v967
      %v1097 = vpack.c.bf16 %v969, %v969
      %v1106 = vunpack.c.l.b16 %v1066
      %v1107 = vunpack.c.l.b16 %v1067
      %v1108 = vunpack.c.l.b16 %v1068
      %v1109 = vunpack.c.l.b16 %v1069
      %v1110 = vunpack.c.l.b16 %v1070
      %v1111 = vunpack.c.l.b16 %v1071
      %v1112 = vunpack.c.l.b16 %v1072
      %v1113 = vunpack.c.l.b16 %v1073
      %v1114 = vpack.c.b16 %v1107, %v1106
      %v1115 = vpack.c.b16 %v1109, %v1108
      %v1116 = vpack.c.b16 %v1111, %v1110
      %v1117 = vpack.c.b16 %v1113, %v1112
      %v1126 = vunpack.c.l.b16 %v372
      %v1127 = vunpack.c.l.b16 %v373
      %v1128 = vunpack.c.l.b16 %v374
      %v1129 = vunpack.c.l.b16 %v375
      %v1130 = vunpack.c.l.b16 %v376
      %v1131 = vunpack.c.l.b16 %v377
      %v1132 = vunpack.c.l.b16 %v378
      %v1133 = vunpack.c.l.b16 %v379
      %v1134 = vpack.c.b16 %v1127, %v1126
      %v1135 = vpack.c.b16 %v1129, %v1128
      %v1136 = vpack.c.b16 %v1131, %v1130
      %v1137 = vpack.c.b16 %v1133, %v1132
      %v1143 = vsel %vm777, %v1114, 0
      %v1146 = vsel %vm777, %v1115, 0
      %v1149 = vsel %vm777, %v1116, 0
      %v1152 = vsel %vm777, %v1117, 0
      %1154 = vmatpush.bf16.msra.mxu0 0
      %1155 = vmatpush.bf16.msra.mxu0 0
      %1156 = vmatpush.bf16.msra.mxu0 0
      %1157 = vmatpush.bf16.msra.mxu0 0
      %1158 = vmatpush.bf16.msra.mxu0 %v1137
      %1159 = vmatpush.bf16.msra.mxu0 %v1136
      %1160 = vmatpush.bf16.msra.mxu0 %v1135
      %1161 = vmatpush.bf16.msra.mxu0 %v1134
      %1162 = vmatmul.bf16.gmra.mxu0 %v1143
      %v1163 = vpop.f32.mrf.mxu0
      %v1164 = vadd.f32 0.0, %v1163
      %v1165 = vpop.f32.mrf.mxu0
      %v1166 = vadd.f32 0.0, %v1165
      %1167 = vmatmul.bf16.gmra.mxu0 %v1146
      %v1168 = vpop.f32.mrf.mxu0
      %v1169 = vadd.f32 0.0, %v1168
      %v1170 = vpop.f32.mrf.mxu0
      %v1171 = vadd.f32 0.0, %v1170
      %1172 = vmatmul.bf16.gmra.mxu0 %v1149
      %v1173 = vpop.f32.mrf.mxu0
      %v1174 = vadd.f32 0.0, %v1173
      %v1175 = vpop.f32.mrf.mxu0
      %v1176 = vadd.f32 0.0, %v1175
      %1177 = vmatmul.bf16.gmra.mxu0 %v1152
      %v1178 = vpop.f32.mrf.mxu0
      %v1179 = vadd.f32 0.0, %v1178
      %v1180 = vpop.f32.mrf.mxu0
      %v1181 = vadd.f32 0.0, %v1180
      %1182 = vdwg.mxu0
      %v1191 = vunpack.c.l.b16 %v1074
      %v1192 = vunpack.c.l.b16 %v1075
      %v1193 = vunpack.c.l.b16 %v1076
      %v1194 = vunpack.c.l.b16 %v1077
      %v1195 = vunpack.c.l.b16 %v1078
      %v1196 = vunpack.c.l.b16 %v1079
      %v1197 = vunpack.c.l.b16 %v1080
      %v1198 = vunpack.c.l.b16 %v1081
      %v1199 = vpack.c.b16 %v1192, %v1191
      %v1200 = vpack.c.b16 %v1194, %v1193
      %v1201 = vpack.c.b16 %v1196, %v1195
      %v1202 = vpack.c.b16 %v1198, %v1197
      %v1211 = vunpack.c.l.b16 %v380
      %v1212 = vunpack.c.l.b16 %v381
      %v1213 = vunpack.c.l.b16 %v382
      %v1214 = vunpack.c.l.b16 %v383
      %v1215 = vunpack.c.l.b16 %v384
      %v1216 = vunpack.c.l.b16 %v385
      %v1217 = vunpack.c.l.b16 %v386
      %v1218 = vunpack.c.l.b16 %v387
      %v1219 = vpack.c.b16 %v1212, %v1211
      %v1220 = vpack.c.b16 %v1214, %v1213
      %v1221 = vpack.c.b16 %v1216, %v1215
      %v1222 = vpack.c.b16 %v1218, %v1217
      %v1228 = vsel %vm777, %v1199, 0
      %v1231 = vsel %vm777, %v1200, 0
      %v1234 = vsel %vm777, %v1201, 0
      %v1237 = vsel %vm777, %v1202, 0
      %1239 = vmatpush.bf16.msra.mxu0 0
      %1240 = vmatpush.bf16.msra.mxu0 0
      %1241 = vmatpush.bf16.msra.mxu0 0
      %1242 = vmatpush.bf16.msra.mxu0 0
      %1243 = vmatpush.bf16.msra.mxu0 %v1222
      %1244 = vmatpush.bf16.msra.mxu0 %v1221
      %1245 = vmatpush.bf16.msra.mxu0 %v1220
      %1246 = vmatpush.bf16.msra.mxu0 %v1219
      %1247 = vmatmul.bf16.gmra.mxu0 %v1228
      %v1248 = vpop.f32.mrf.mxu0
      %v1249 = vadd.f32 0.0, %v1248
      %v1250 = vpop.f32.mrf.mxu0
      %v1251 = vadd.f32 0.0, %v1250
      %1252 = vmatmul.bf16.gmra.mxu0 %v1231
      %v1253 = vpop.f32.mrf.mxu0
      %v1254 = vadd.f32 0.0, %v1253
      %v1255 = vpop.f32.mrf.mxu0
      %v1256 = vadd.f32 0.0, %v1255
      %1257 = vmatmul.bf16.gmra.mxu0 %v1234
      %v1258 = vpop.f32.mrf.mxu0
      %v1259 = vadd.f32 0.0, %v1258
      %v1260 = vpop.f32.mrf.mxu0
      %v1261 = vadd.f32 0.0, %v1260
      %1262 = vmatmul.bf16.gmra.mxu0 %v1237
      %v1263 = vpop.f32.mrf.mxu0
      %v1264 = vadd.f32 0.0, %v1263
      %v1265 = vpop.f32.mrf.mxu0
      %v1266 = vadd.f32 0.0, %v1265
      %1267 = vdwg.mxu0
      %v1276 = vunpack.c.l.b16 %v1082
      %v1277 = vunpack.c.l.b16 %v1083
      %v1278 = vunpack.c.l.b16 %v1084
      %v1279 = vunpack.c.l.b16 %v1085
      %v1280 = vunpack.c.l.b16 %v1086
      %v1281 = vunpack.c.l.b16 %v1087
      %v1282 = vunpack.c.l.b16 %v1088
      %v1283 = vunpack.c.l.b16 %v1089
      %v1284 = vpack.c.b16 %v1277, %v1276
      %v1285 = vpack.c.b16 %v1279, %v1278
      %v1286 = vpack.c.b16 %v1281, %v1280
      %v1287 = vpack.c.b16 %v1283, %v1282
      %v1296 = vunpack.c.l.b16 %v388
      %v1297 = vunpack.c.l.b16 %v389
      %v1298 = vunpack.c.l.b16 %v390
      %v1299 = vunpack.c.l.b16 %v391
      %v1300 = vunpack.c.l.b16 %v392
      %v1301 = vunpack.c.l.b16 %v393
      %v1302 = vunpack.c.l.b16 %v394
      %v1303 = vunpack.c.l.b16 %v395
      %v1304 = vpack.c.b16 %v1297, %v1296
      %v1305 = vpack.c.b16 %v1299, %v1298
      %v1306 = vpack.c.b16 %v1301, %v1300
      %v1307 = vpack.c.b16 %v1303, %v1302
      %v1313 = vsel %vm777, %v1284, 0
      %v1316 = vsel %vm777, %v1285, 0
      %v1319 = vsel %vm777, %v1286, 0
      %v1322 = vsel %vm777, %v1287, 0
      %1324 = vmatpush.bf16.msra.mxu0 0
      %1325 = vmatpush.bf16.msra.mxu0 0
      %1326 = vmatpush.bf16.msra.mxu0 0
      %1327 = vmatpush.bf16.msra.mxu0 0
      %1328 = vmatpush.bf16.msra.mxu0 %v1307
      %1329 = vmatpush.bf16.msra.mxu0 %v1306
      %1330 = vmatpush.bf16.msra.mxu0 %v1305
      %1331 = vmatpush.bf16.msra.mxu0 %v1304
      %1332 = vmatmul.bf16.gmra.mxu0 %v1313
      %v1333 = vpop.f32.mrf.mxu0
      %v1334 = vadd.f32 0.0, %v1333
      %v1335 = vpop.f32.mrf.mxu0
      %v1336 = vadd.f32 0.0, %v1335
      %1337 = vmatmul.bf16.gmra.mxu0 %v1316
      %v1338 = vpop.f32.mrf.mxu0
      %v1339 = vadd.f32 0.0, %v1338
      %v1340 = vpop.f32.mrf.mxu0
      %v1341 = vadd.f32 0.0, %v1340
      %1342 = vmatmul.bf16.gmra.mxu0 %v1319
      %v1343 = vpop.f32.mrf.mxu0
      %v1344 = vadd.f32 0.0, %v1343
      %v1345 = vpop.f32.mrf.mxu0
      %v1346 = vadd.f32 0.0, %v1345
      %1347 = vmatmul.bf16.gmra.mxu0 %v1322
      %v1348 = vpop.f32.mrf.mxu0
      %v1349 = vadd.f32 0.0, %v1348
      %v1350 = vpop.f32.mrf.mxu0
      %v1351 = vadd.f32 0.0, %v1350
      %1352 = vdwg.mxu0
      %v1361 = vunpack.c.l.b16 %v1090
      %v1362 = vunpack.c.l.b16 %v1091
      %v1363 = vunpack.c.l.b16 %v1092
      %v1364 = vunpack.c.l.b16 %v1093
      %v1365 = vunpack.c.l.b16 %v1094
      %v1366 = vunpack.c.l.b16 %v1095
      %v1367 = vunpack.c.l.b16 %v1096
      %v1368 = vunpack.c.l.b16 %v1097
      %v1369 = vpack.c.b16 %v1362, %v1361
      %v1370 = vpack.c.b16 %v1364, %v1363
      %v1371 = vpack.c.b16 %v1366, %v1365
      %v1372 = vpack.c.b16 %v1368, %v1367
      %v1381 = vunpack.c.l.b16 %v396
      %v1382 = vunpack.c.l.b16 %v397
      %v1383 = vunpack.c.l.b16 %v398
      %v1384 = vunpack.c.l.b16 %v399
      %v1385 = vunpack.c.l.b16 %v400
      %v1386 = vunpack.c.l.b16 %v401
      %v1387 = vunpack.c.l.b16 %v402
      %v1388 = vunpack.c.l.b16 %v403
      %v1389 = vpack.c.b16 %v1382, %v1381
      %v1390 = vpack.c.b16 %v1384, %v1383
      %v1391 = vpack.c.b16 %v1386, %v1385
      %v1392 = vpack.c.b16 %v1388, %v1387
      %v1398 = vsel %vm777, %v1369, 0
      %v1401 = vsel %vm777, %v1370, 0
      %v1404 = vsel %vm777, %v1371, 0
      %v1407 = vsel %vm777, %v1372, 0
      %1409 = vmatpush.bf16.msra.mxu0 0
      %1410 = vmatpush.bf16.msra.mxu0 0
      %1411 = vmatpush.bf16.msra.mxu0 0
      %1412 = vmatpush.bf16.msra.mxu0 0
      %1413 = vmatpush.bf16.msra.mxu0 %v1392
      %1414 = vmatpush.bf16.msra.mxu0 %v1391
      %1415 = vmatpush.bf16.msra.mxu0 %v1390
      %1416 = vmatpush.bf16.msra.mxu0 %v1389
      %1417 = vmatmul.bf16.gmra.mxu0 %v1398
      %v1418 = vpop.f32.mrf.mxu0
      %v1419 = vadd.f32 0.0, %v1418
      %v1420 = vpop.f32.mrf.mxu0
      %v1421 = vadd.f32 0.0, %v1420
      %1422 = vmatmul.bf16.gmra.mxu0 %v1401
      %v1423 = vpop.f32.mrf.mxu0
      %v1424 = vadd.f32 0.0, %v1423
      %v1425 = vpop.f32.mrf.mxu0
      %v1426 = vadd.f32 0.0, %v1425
      %1427 = vmatmul.bf16.gmra.mxu0 %v1404
      %v1428 = vpop.f32.mrf.mxu0
      %v1429 = vadd.f32 0.0, %v1428
      %v1430 = vpop.f32.mrf.mxu0
      %v1431 = vadd.f32 0.0, %v1430
      %1432 = vmatmul.bf16.gmra.mxu0 %v1407
      %v1433 = vpop.f32.mrf.mxu0
      %v1434 = vadd.f32 0.0, %v1433
      %v1435 = vpop.f32.mrf.mxu0
      %v1436 = vadd.f32 0.0, %v1435
      %1437 = vdwg.mxu0
      %v1438 = vrcp.pop %v972
      %v1439 = vrcp.pop %v975
      %v1440 = vrcp.pop %v978
      %v1441 = vrcp.pop %v981
      %v1442 = vrcp.pop %v984
      %v1443 = vrcp.pop %v987
      %v1444 = vrcp.pop %v990
      %v1445 = vrcp.pop %v993
      %v1446 = vrcp.pop %v996
      %v1447 = vrcp.pop %v999
      %v1448 = vrcp.pop %v1002
      %v1449 = vrcp.pop %v1005
      %v1450 = vrcp.pop %v1008
      %v1451 = vrcp.pop %v1011
      %v1452 = vrcp.pop %v1014
      %v1453 = vrcp.pop %v1017
      %v1454 = vrcp.pop %v1020
      %v1455 = vrcp.pop %v1023
      %v1456 = vrcp.pop %v1026
      %v1457 = vrcp.pop %v1029
      %v1458 = vrcp.pop %v1032
      %v1459 = vrcp.pop %v1035
      %v1460 = vrcp.pop %v1038
      %v1461 = vrcp.pop %v1041
      %v1462 = vrcp.pop %v1044
      %v1463 = vrcp.pop %v1047
      %v1464 = vrcp.pop %v1050
      %v1465 = vrcp.pop %v1053
      %v1466 = vrcp.pop %v1056
      %v1467 = vrcp.pop %v1059
      %v1468 = vrcp.pop %v1062
      %v1469 = vrcp.pop %v1065
      %v1470 = vmul.f32 %v1164, %v1438
      %v1471 = vmul.f32 %v1166, %v1439
      %v1472 = vmul.f32 %v1169, %v1440
      %v1473 = vmul.f32 %v1171, %v1441
      %v1474 = vmul.f32 %v1174, %v1442
      %v1475 = vmul.f32 %v1176, %v1443
      %v1476 = vmul.f32 %v1179, %v1444
      %v1477 = vmul.f32 %v1181, %v1445
      %v1478 = vmul.f32 %v1249, %v1446
      %v1479 = vmul.f32 %v1251, %v1447
      %v1480 = vmul.f32 %v1254, %v1448
      %v1481 = vmul.f32 %v1256, %v1449
      %v1482 = vmul.f32 %v1259, %v1450
      %v1483 = vmul.f32 %v1261, %v1451
      %v1484 = vmul.f32 %v1264, %v1452
      %v1485 = vmul.f32 %v1266, %v1453
      %v1486 = vmul.f32 %v1334, %v1454
      %v1487 = vmul.f32 %v1336, %v1455
      %v1488 = vmul.f32 %v1339, %v1456
      %v1489 = vmul.f32 %v1341, %v1457
      %v1490 = vmul.f32 %v1344, %v1458
      %v1491 = vmul.f32 %v1346, %v1459
      %v1492 = vmul.f32 %v1349, %v1460
      %v1493 = vmul.f32 %v1351, %v1461
      %v1494 = vmul.f32 %v1419, %v1462
      %v1495 = vmul.f32 %v1421, %v1463
      %v1496 = vmul.f32 %v1424, %v1464
      %v1497 = vmul.f32 %v1426, %v1465
      %v1498 = vmul.f32 %v1429, %v1466
      %v1499 = vmul.f32 %v1431, %v1467
      %v1500 = vmul.f32 %v1434, %v1468
      %v1501 = vmul.f32 %v1436, %v1469
      %v1502 = vpack.c.bf16 %v1470, %v1470
      %v1503 = vpack.c.bf16 %v1471, %v1471
      %v1504 = vpack.c.bf16 %v1472, %v1472
      %v1505 = vpack.c.bf16 %v1473, %v1473
      %v1506 = vpack.c.bf16 %v1474, %v1474
      %v1507 = vpack.c.bf16 %v1475, %v1475
      %v1508 = vpack.c.bf16 %v1476, %v1476
      %v1509 = vpack.c.bf16 %v1477, %v1477
      %v1510 = vpack.c.bf16 %v1478, %v1478
      %v1511 = vpack.c.bf16 %v1479, %v1479
      %v1512 = vpack.c.bf16 %v1480, %v1480
      %v1513 = vpack.c.bf16 %v1481, %v1481
      %v1514 = vpack.c.bf16 %v1482, %v1482
      %v1515 = vpack.c.bf16 %v1483, %v1483
      %v1516 = vpack.c.bf16 %v1484, %v1484
      %v1517 = vpack.c.bf16 %v1485, %v1485
      %v1518 = vpack.c.bf16 %v1486, %v1486
      %v1519 = vpack.c.bf16 %v1487, %v1487
      %v1520 = vpack.c.bf16 %v1488, %v1488
      %v1521 = vpack.c.bf16 %v1489, %v1489
      %v1522 = vpack.c.bf16 %v1490, %v1490
      %v1523 = vpack.c.bf16 %v1491, %v1491
      %v1524 = vpack.c.bf16 %v1492, %v1492
      %v1525 = vpack.c.bf16 %v1493, %v1493
      %v1526 = vpack.c.bf16 %v1494, %v1494
      %v1527 = vpack.c.bf16 %v1495, %v1495
      %v1528 = vpack.c.bf16 %v1496, %v1496
      %v1529 = vpack.c.bf16 %v1497, %v1497
      %v1530 = vpack.c.bf16 %v1498, %v1498
      %v1531 = vpack.c.bf16 %v1499, %v1499
      %v1532 = vpack.c.bf16 %v1500, %v1500
      %v1533 = vpack.c.bf16 %v1501, %v1501
      %vm1534 = vcmask 60416
      %1535 = vst.msk [vmem:[%s210] sm:$0xf] %vm1534, %v1502
      %1536 = vst.msk [vmem:[%s210 + $0x4] sm:$0xf] %vm1534, %v1503
      %1537 = vst.msk [vmem:[%s210 + $0x8] sm:$0xf] %vm1534, %v1504
      %1538 = vst.msk [vmem:[%s210 + $0xc] sm:$0xf] %vm1534, %v1505
      %1539 = vst.msk [vmem:[%s210 + $0x10] sm:$0xf] %vm1534, %v1506
      %1540 = vst.msk [vmem:[%s210 + $0x14] sm:$0xf] %vm1534, %v1507
      %1541 = vst.msk [vmem:[%s210 + $0x18] sm:$0xf] %vm1534, %v1508
      %1542 = vst.msk [vmem:[%s210 + $0x1c] sm:$0xf] %vm1534, %v1509
      %1543 = vst.msk [vmem:[%s210 + $0x20] sm:$0xf] %vm1534, %v1510
      %1544 = vst.msk [vmem:[%s210 + $0x24] sm:$0xf] %vm1534, %v1511
      %1545 = vst.msk [vmem:[%s210 + $0x28] sm:$0xf] %vm1534, %v1512
      %1546 = vst.msk [vmem:[%s210 + $0x2c] sm:$0xf] %vm1534, %v1513
      %1547 = vst.msk [vmem:[%s210 + $0x30] sm:$0xf] %vm1534, %v1514
      %1548 = vst.msk [vmem:[%s210 + $0x34] sm:$0xf] %vm1534, %v1515
      %1549 = vst.msk [vmem:[%s210 + $0x38] sm:$0xf] %vm1534, %v1516
      %1550 = vst.msk [vmem:[%s210 + $0x3c] sm:$0xf] %vm1534, %v1517
      %1551 = vst.msk [vmem:[%s210 + $0x40] sm:$0xf] %vm1534, %v1518
      %1552 = vst.msk [vmem:[%s210 + $0x44] sm:$0xf] %vm1534, %v1519
      %1553 = vst.msk [vmem:[%s210 + $0x48] sm:$0xf] %vm1534, %v1520
      %1554 = vst.msk [vmem:[%s210 + $0x4c] sm:$0xf] %vm1534, %v1521
      %1555 = vst.msk [vmem:[%s210 + $0x50] sm:$0xf] %vm1534, %v1522
      %1556 = vst.msk [vmem:[%s210 + $0x54] sm:$0xf] %vm1534, %v1523
      %1557 = vst.msk [vmem:[%s210 + $0x58] sm:$0xf] %vm1534, %v1524
      %1558 = vst.msk [vmem:[%s210 + $0x5c] sm:$0xf] %vm1534, %v1525
      %1559 = vst.msk [vmem:[%s210 + $0x60] sm:$0xf] %vm1534, %v1526
      %1560 = vst.msk [vmem:[%s210 + $0x64] sm:$0xf] %vm1534, %v1527
      %1561 = vst.msk [vmem:[%s210 + $0x68] sm:$0xf] %vm1534, %v1528
      %1562 = vst.msk [vmem:[%s210 + $0x6c] sm:$0xf] %vm1534, %v1529
      %1563 = vst.msk [vmem:[%s210 + $0x70] sm:$0xf] %vm1534, %v1530
      %1564 = vst.msk [vmem:[%s210 + $0x74] sm:$0xf] %vm1534, %v1531
      %1565 = vst.msk [vmem:[%s210 + $0x78] sm:$0xf] %vm1534, %v1532
      %1566 = vst.msk [vmem:[%s210 + $0x7c] sm:$0xf] %vm1534, %v1533
      %p1567 = scmp.lt.s32.totalorder %s14, 1
      %s1568 = scalar_select %p1567, %s14, 1
      %s1569 = smul.addr %s1568, 32
      %s1570 = smul.addr %s1569, 4
      %s1571 = scalar_lea.vmem %s3, %s1570
      // Predicated region
      $region33: #{detr_forward.54} parent=31 // pred_check
        %p1572 = pneg %p110
      $region34: #{detr_forward.54} parent=31 // pred_check_branch
        %1574 = sbr.rel (%p1572) target = $region36
      $region35: #{detr_forward.54} parent=31 // pred_region
        _
      $region36: #{detr_forward.54} parent=31 // pred_fallthru
        _
    $region32: #{detr_forward.54} parent=5 // pred_fallthru
      _
    %p1575 = scmp.le.s32.totalorder 2, %s9
    // Predicated region
    $region37: #{detr_forward.54} parent=5 // pred_check
      %p1576 = pneg %p1575
    $region38: #{detr_forward.54} parent=5 // pred_check_branch
      %1578 = sbr.rel (%p1576) target = $region40
    $region39: #{detr_forward.54} parent=5 // pred_region
      %s1579 = ssub.s32 %s9, 2
      // Predicated region
      $region41: #{detr_forward.54} parent=39 // pred_check
        %p1580 = pneg %p116
      $region42: #{detr_forward.54} parent=39 // pred_check_branch
        %1582 = sbr.rel (%p1580) target = $region44
      $region43: #{detr_forward.54} parent=39 // pred_region
        %p1583 = scmp.lt.s32.totalorder %s15, 1
        %s1584 = scalar_select %p1583, %s15, 1
        %s1585 = smul.addr %s1584, 32
        %s1586 = smul.addr %s1585, 4
        %s1587 = scalar_lea.vmem %s3, %s1586
      $region44: #{detr_forward.54} parent=39 // pred_fallthru
        _
    $region40: #{detr_forward.54} parent=5 // pred_fallthru
      _
  $region6: #{detr_forward.54} parent=0 // loop_footer
    %s13 = sadd.s32 1, %s9
  $region7: #{detr_forward.54} parent=0 // loop_footer_branch
    %8 = sbr.rel target = $region3
  $region8: #{detr_forward.54} parent=0 // loop_exit
    _

// kernel: detr_forward.57
$region0: #{detr_forward.57}
  #allocation0 [shape = 'u32[]', space=smem, size = 0x4, offset = 0x4, fixed_abs, tag = 'smem constant byte address 0x4 - core index']
  #allocation1 [shape = 'u32[72,128]{1,0:T(1,128)}', space=vmem, size = 0x9000, scoped, tag = 'internal scratch']
  #allocation2 [shape = 'f32[128,128]{1,0:T(8,128)}', space=vmem, size = 0x10000, scoped, tag = 'scratch operand']
  %s0 = inlined_call_operand.vmem [shape: bf16[128,128], index: 0, kind: input, shape index: {}]
  %s1 = inlined_call_operand.vmem [shape: bf16[128,128], index: 1, kind: input, shape index: {}]
  %s2 = inlined_call_operand.vmem [shape: f32[1,128], index: 2, kind: input, shape index: {}]
  %s3 = inlined_call_operand.vmem [shape: f32[128,128], index: 3, kind: output, shape index: {}]
  %s4 = sld [smem:[#allocation0]]
  $region30: #{detr_forward.57} parent=0
    _
  %s6 = ssub.s32 1, %s4
  %s7 = scalar_select 0, %s6, %s4
  // Predicated region
  $region2: #{detr_forward.57} parent=0 // pred_check
    _
  $region3: #{detr_forward.57} parent=0 // pred_check_branch
    %9 = sbr.rel (0) target = $region5
  $region4: #{detr_forward.57} parent=0 // pred_region
    _
  $region5: #{detr_forward.57} parent=0 // pred_fallthru
    _
  // Predicated region
  $region6: #{detr_forward.57} parent=0 // pred_check
    _
  $region7: #{detr_forward.57} parent=0 // pred_check_branch
    %11 = sbr.rel (0) target = $region9
  $region8: #{detr_forward.57} parent=0 // pred_region
    _
  $region9: #{detr_forward.57} parent=0 // pred_fallthru
    _
  // Predicated region
  $region10: #{detr_forward.57} parent=0 // pred_check
    _
  $region11: #{detr_forward.57} parent=0 // pred_check_branch
    %13 = sbr.rel (0) target = $region13
  $region12: #{detr_forward.57} parent=0 // pred_region
    _
  $region13: #{detr_forward.57} parent=0 // pred_fallthru
    _
  %p14 = scmp.eq.s32.totalorder 0, 0
  // Predicated region
  $region14: #{detr_forward.57} parent=0 // pred_check
    %p15 = pneg %p14
  $region15: #{detr_forward.57} parent=0 // pred_check_branch
    %17 = sbr.rel (%p15) target = $region17
  $region16: #{detr_forward.57} parent=0 // pred_region
    %18 = vst [vmem:[#allocation2] sm:$0xff] 0.0
    %19 = vst [vmem:[#allocation2 + $0x8] sm:$0xff] 0.0
    %20 = vst [vmem:[#allocation2 + $0x10] sm:$0xff] 0.0
    %21 = vst [vmem:[#allocation2 + $0x18] sm:$0xff] 0.0
    %22 = vst [vmem:[#allocation2 + $0x20] sm:$0xff] 0.0
    %23 = vst [vmem:[#allocation2 + $0x28] sm:$0xff] 0.0
    %24 = vst [vmem:[#allocation2 + $0x30] sm:$0xff] 0.0
    %25 = vst [vmem:[#allocation2 + $0x38] sm:$0xff] 0.0
    %26 = vst [vmem:[#allocation2 + $0x40] sm:$0xff] 0.0
    %27 = vst [vmem:[#allocation2 + $0x48] sm:$0xff] 0.0
    %28 = vst [vmem:[#allocation2 + $0x50] sm:$0xff] 0.0
    %29 = vst [vmem:[#allocation2 + $0x58] sm:$0xff] 0.0
    %30 = vst [vmem:[#allocation2 + $0x60] sm:$0xff] 0.0
    %31 = vst [vmem:[#allocation2 + $0x68] sm:$0xff] 0.0
    %32 = vst [vmem:[#allocation2 + $0x70] sm:$0xff] 0.0
    %33 = vst [vmem:[#allocation2 + $0x78] sm:$0xff] 0.0
  $region17: #{detr_forward.57} parent=0 // pred_fallthru
    _
  %v34 = vld [vmem:[#allocation2] sm:$0xff]
  %v35 = vld [vmem:[#allocation2 + $0x8] sm:$0xff]
  %v36 = vld [vmem:[#allocation2 + $0x10] sm:$0xff]
  %v37 = vld [vmem:[#allocation2 + $0x18] sm:$0xff]
  %v38 = vld [vmem:[#allocation2 + $0x20] sm:$0xff]
  %v39 = vld [vmem:[#allocation2 + $0x28] sm:$0xff]
  %v40 = vld [vmem:[#allocation2 + $0x30] sm:$0xff]
  %v41 = vld [vmem:[#allocation2 + $0x38] sm:$0xff]
  %v42 = vld [vmem:[#allocation2 + $0x40] sm:$0xff]
  %v43 = vld [vmem:[#allocation2 + $0x48] sm:$0xff]
  %v44 = vld [vmem:[#allocation2 + $0x50] sm:$0xff]
  %v45 = vld [vmem:[#allocation2 + $0x58] sm:$0xff]
  %v46 = vld [vmem:[#allocation2 + $0x60] sm:$0xff]
  %v47 = vld [vmem:[#allocation2 + $0x68] sm:$0xff]
  %v48 = vld [vmem:[#allocation2 + $0x70] sm:$0xff]
  %v49 = vld [vmem:[#allocation2 + $0x78] sm:$0xff]
  %v50 = vld [vmem:[%s0] sm:$0xf]
  %v51 = vld [vmem:[%s0 + $0x4] sm:$0xf]
  %v52 = vld [vmem:[%s0 + $0x8] sm:$0xf]
  %v53 = vld [vmem:[%s0 + $0xc] sm:$0xf]
  %v54 = vld [vmem:[%s0 + $0x10] sm:$0xf]
  %v55 = vld [vmem:[%s0 + $0x14] sm:$0xf]
  %v56 = vld [vmem:[%s0 + $0x18] sm:$0xf]
  %v57 = vld [vmem:[%s0 + $0x1c] sm:$0xf]
  %v58 = vld [vmem:[%s0 + $0x20] sm:$0xf]
  %v59 = vld [vmem:[%s0 + $0x24] sm:$0xf]
  %v60 = vld [vmem:[%s0 + $0x28] sm:$0xf]
  %v61 = vld [vmem:[%s0 + $0x2c] sm:$0xf]
  %v62 = vld [vmem:[%s0 + $0x30] sm:$0xf]
  %v63 = vld [vmem:[%s0 + $0x34] sm:$0xf]
  %v64 = vld [vmem:[%s0 + $0x38] sm:$0xf]
  %v65 = vld [vmem:[%s0 + $0x3c] sm:$0xf]
  %v66 = vld [vmem:[%s1] sm:$0xf]
  %v67 = vld [vmem:[%s1 + $0x4] sm:$0xf]
  %v68 = vld [vmem:[%s1 + $0x8] sm:$0xf]
  %v69 = vld [vmem:[%s1 + $0xc] sm:$0xf]
  %v70 = vld [vmem:[%s1 + $0x10] sm:$0xf]
  %v71 = vld [vmem:[%s1 + $0x14] sm:$0xf]
  %v72 = vld [vmem:[%s1 + $0x18] sm:$0xf]
  %v73 = vld [vmem:[%s1 + $0x1c] sm:$0xf]
  %v74 = vld [vmem:[%s1 + $0x20] sm:$0xf]
  %v75 = vld [vmem:[%s1 + $0x24] sm:$0xf]
  %v76 = vld [vmem:[%s1 + $0x28] sm:$0xf]
  %v77 = vld [vmem:[%s1 + $0x2c] sm:$0xf]
  %v78 = vld [vmem:[%s1 + $0x30] sm:$0xf]
  %v79 = vld [vmem:[%s1 + $0x34] sm:$0xf]
  %v80 = vld [vmem:[%s1 + $0x38] sm:$0xf]
  %v81 = vld [vmem:[%s1 + $0x3c] sm:$0xf]
  %v98 = vunpack.c.l.b16 %v50
  %v99 = vunpack.c.l.b16 %v51
  %v100 = vunpack.c.l.b16 %v52
  %v101 = vunpack.c.l.b16 %v53
  %v102 = vunpack.c.l.b16 %v54
  %v103 = vunpack.c.l.b16 %v55
  %v104 = vunpack.c.l.b16 %v56
  %v105 = vunpack.c.l.b16 %v57
  %v106 = vunpack.c.l.b16 %v58
  %v107 = vunpack.c.l.b16 %v59
  %v108 = vunpack.c.l.b16 %v60
  %v109 = vunpack.c.l.b16 %v61
  %v110 = vunpack.c.l.b16 %v62
  %v111 = vunpack.c.l.b16 %v63
  %v112 = vunpack.c.l.b16 %v64
  %v113 = vunpack.c.l.b16 %v65
  %v114 = vpack.c.b16 %v99, %v98
  %v115 = vpack.c.b16 %v101, %v100
  %v116 = vpack.c.b16 %v103, %v102
  %v117 = vpack.c.b16 %v105, %v104
  %v118 = vpack.c.b16 %v107, %v106
  %v119 = vpack.c.b16 %v109, %v108
  %v120 = vpack.c.b16 %v111, %v110
  %v121 = vpack.c.b16 %v113, %v112
  %v146 = vunpack.c.l.b16 %v66
  %v147 = vunpack.c.l.b16 %v67
  %v148 = vunpack.c.l.b16 %v68
  %v149 = vunpack.c.l.b16 %v69
  %v150 = vunpack.c.l.b16 %v70
  %v151 = vunpack.c.l.b16 %v71
  %v152 = vunpack.c.l.b16 %v72
  %v153 = vunpack.c.l.b16 %v73
  %v154 = vunpack.c.l.b16 %v74
  %v155 = vunpack.c.l.b16 %v75
  %v156 = vunpack.c.l.b16 %v76
  %v157 = vunpack.c.l.b16 %v77
  %v158 = vunpack.c.l.b16 %v78
  %v159 = vunpack.c.l.b16 %v79
  %v160 = vunpack.c.l.b16 %v80
  %v161 = vunpack.c.l.b16 %v81
  %v162 = vpack.c.b16 %v147, %v146
  %v163 = vpack.c.b16 %v149, %v148
  %v164 = vpack.c.b16 %v151, %v150
  %v165 = vpack.c.b16 %v153, %v152
  %v166 = vpack.c.b16 %v155, %v154
  %v167 = vpack.c.b16 %v157, %v156
  %v168 = vpack.c.b16 %v159, %v158
  %v169 = vpack.c.b16 %v161, %v160
  %178 = vmatpush.bf16.msra.mxu0 %v169
  %179 = vmatpush.bf16.msra.mxu0 %v168
  %180 = vmatpush.bf16.msra.mxu0 %v167
  %181 = vmatpush.bf16.msra.mxu0 %v166
  %182 = vmatpush.bf16.msra.mxu0 %v165
  %183 = vmatpush.bf16.msra.mxu0 %v164
  %184 = vmatpush.bf16.msra.mxu0 %v163
  %185 = vmatpush.bf16.msra.mxu0 %v162
  %186 = vmatmul.bf16.gmra.mxu0 %v114
  %v187 = vpop.f32.mrf.mxu0
  %v188 = vadd.f32 0.0, %v187
  %v189 = vpop.f32.mrf.mxu0
  %v190 = vadd.f32 0.0, %v189
  %191 = vmatmul.bf16.gmra.mxu0 %v115
  %v192 = vpop.f32.mrf.mxu0
  %v193 = vadd.f32 0.0, %v192
  %v194 = vpop.f32.mrf.mxu0
  %v195 = vadd.f32 0.0, %v194
  %196 = vmatmul.bf16.gmra.mxu0 %v116
  %v197 = vpop.f32.mrf.mxu0
  %v198 = vadd.f32 0.0, %v197
  %v199 = vpop.f32.mrf.mxu0
  %v200 = vadd.f32 0.0, %v199
  %201 = vmatmul.bf16.gmra.mxu0 %v117
  %v202 = vpop.f32.mrf.mxu0
  %v203 = vadd.f32 0.0, %v202
  %v204 = vpop.f32.mrf.mxu0
  %v205 = vadd.f32 0.0, %v204
  %206 = vmatmul.bf16.gmra.mxu0 %v118
  %v207 = vpop.f32.mrf.mxu0
  %v208 = vadd.f32 0.0, %v207
  %v209 = vpop.f32.mrf.mxu0
  %v210 = vadd.f32 0.0, %v209
  %211 = vmatmul.bf16.gmra.mxu0 %v119
  %v212 = vpop.f32.mrf.mxu0
  %v213 = vadd.f32 0.0, %v212
  %v214 = vpop.f32.mrf.mxu0
  %v215 = vadd.f32 0.0, %v214
  %216 = vmatmul.bf16.gmra.mxu0 %v120
  %v217 = vpop.f32.mrf.mxu0
  %v218 = vadd.f32 0.0, %v217
  %v219 = vpop.f32.mrf.mxu0
  %v220 = vadd.f32 0.0, %v219
  %221 = vmatmul.bf16.gmra.mxu0 %v121
  %v222 = vpop.f32.mrf.mxu0
  %v223 = vadd.f32 0.0, %v222
  %v224 = vpop.f32.mrf.mxu0
  %v225 = vadd.f32 0.0, %v224
  %226 = vdwg.mxu0
  %v227 = vadd.f32 %v34, %v188
  %v228 = vadd.f32 %v35, %v190
  %v229 = vadd.f32 %v36, %v193
  %v230 = vadd.f32 %v37, %v195
  %v231 = vadd.f32 %v38, %v198
  %v232 = vadd.f32 %v39, %v200
  %v233 = vadd.f32 %v40, %v203
  %v234 = vadd.f32 %v41, %v205
  %v235 = vadd.f32 %v42, %v208
  %v236 = vadd.f32 %v43, %v210
  %v237 = vadd.f32 %v44, %v213
  %v238 = vadd.f32 %v45, %v215
  %v239 = vadd.f32 %v46, %v218
  %v240 = vadd.f32 %v47, %v220
  %v241 = vadd.f32 %v48, %v223
  %v242 = vadd.f32 %v49, %v225
  %243 = vst [vmem:[#allocation2] sm:$0xff] %v227
  %244 = vst [vmem:[#allocation2 + $0x8] sm:$0xff] %v228
  %245 = vst [vmem:[#allocation2 + $0x10] sm:$0xff] %v229
  %246 = vst [vmem:[#allocation2 + $0x18] sm:$0xff] %v230
  %247 = vst [vmem:[#allocation2 + $0x20] sm:$0xff] %v231
  %248 = vst [vmem:[#allocation2 + $0x28] sm:$0xff] %v232
  %249 = vst [vmem:[#allocation2 + $0x30] sm:$0xff] %v233
  %250 = vst [vmem:[#allocation2 + $0x38] sm:$0xff] %v234
  %251 = vst [vmem:[#allocation2 + $0x40] sm:$0xff] %v235
  %252 = vst [vmem:[#allocation2 + $0x48] sm:$0xff] %v236
  %253 = vst [vmem:[#allocation2 + $0x50] sm:$0xff] %v237
  %254 = vst [vmem:[#allocation2 + $0x58] sm:$0xff] %v238
  %255 = vst [vmem:[#allocation2 + $0x60] sm:$0xff] %v239
  %256 = vst [vmem:[#allocation2 + $0x68] sm:$0xff] %v240
  %257 = vst [vmem:[#allocation2 + $0x70] sm:$0xff] %v241
  %258 = vst [vmem:[#allocation2 + $0x78] sm:$0xff] %v242
  // Predicated region
  $region18: #{detr_forward.57} parent=0 // pred_check
    %p259 = pneg %p14
  $region19: #{detr_forward.57} parent=0 // pred_check_branch
    %261 = sbr.rel (%p259) target = $region21
  $region20: #{detr_forward.57} parent=0 // pred_region
    %v262 = vld [vmem:[#allocation2] sm:$0xff]
    %v263 = vld [vmem:[#allocation2 + $0x8] sm:$0xff]
    %v264 = vld [vmem:[#allocation2 + $0x10] sm:$0xff]
    %v265 = vld [vmem:[#allocation2 + $0x18] sm:$0xff]
    %v266 = vld [vmem:[#allocation2 + $0x20] sm:$0xff]
    %v267 = vld [vmem:[#allocation2 + $0x28] sm:$0xff]
    %v268 = vld [vmem:[#allocation2 + $0x30] sm:$0xff]
    %v269 = vld [vmem:[#allocation2 + $0x38] sm:$0xff]
    %v270 = vld [vmem:[#allocation2 + $0x40] sm:$0xff]
    %v271 = vld [vmem:[#allocation2 + $0x48] sm:$0xff]
    %v272 = vld [vmem:[#allocation2 + $0x50] sm:$0xff]
    %v273 = vld [vmem:[#allocation2 + $0x58] sm:$0xff]
    %v274 = vld [vmem:[#allocation2 + $0x60] sm:$0xff]
    %v275 = vld [vmem:[#allocation2 + $0x68] sm:$0xff]
    %v276 = vld [vmem:[#allocation2 + $0x70] sm:$0xff]
    %v277 = vld [vmem:[#allocation2 + $0x78] sm:$0xff]
    %v278 = vld [vmem:[%s2] sm:$0x1]
    %v280 = vperm.slane %v278, 0
    %v282 = vadd.f32 %v262, %v280
    %v283 = vadd.f32 %v263, %v280
    %v284 = vadd.f32 %v264, %v280
    %v285 = vadd.f32 %v265, %v280
    %v286 = vadd.f32 %v266, %v280
    %v287 = vadd.f32 %v267, %v280
    %v288 = vadd.f32 %v268, %v280
    %v289 = vadd.f32 %v269, %v280
    %v290 = vadd.f32 %v270, %v280
    %v291 = vadd.f32 %v271, %v280
    %v292 = vadd.f32 %v272, %v280
    %v293 = vadd.f32 %v273, %v280
    %v294 = vadd.f32 %v274, %v280
    %v295 = vadd.f32 %v275, %v280
    %v296 = vadd.f32 %v276, %v280
    %v297 = vadd.f32 %v277, %v280
    %v298 = vmax.f32 %v282, 0.0
    %v299 = vmax.f32 %v283, 0.0
    %v300 = vmax.f32 %v284, 0.0
    %v301 = vmax.f32 %v285, 0.0
    %v302 = vmax.f32 %v286, 0.0
    %v303 = vmax.f32 %v287, 0.0
    %v304 = vmax.f32 %v288, 0.0
    %v305 = vmax.f32 %v289, 0.0
    %v306 = vmax.f32 %v290, 0.0
    %v307 = vmax.f32 %v291, 0.0
    %v308 = vmax.f32 %v292, 0.0
    %v309 = vmax.f32 %v293, 0.0
    %v310 = vmax.f32 %v294, 0.0
    %v311 = vmax.f32 %v295, 0.0
    %v312 = vmax.f32 %v296, 0.0
    %v313 = vmax.f32 %v297, 0.0
    %314 = vst [vmem:[%s3] sm:$0xff] %v298
    %315 = vst [vmem:[%s3 + $0x8] sm:$0xff] %v299
    %316 = vst [vmem:[%s3 + $0x10] sm:$0xff] %v300
    %317 = vst [vmem:[%s3 + $0x18] sm:$0xff] %v301
    %318 = vst [vmem:[%s3 + $0x20] sm:$0xff] %v302
    %319 = vst [vmem:[%s3 + $0x28] sm:$0xff] %v303
    %320 = vst [vmem:[%s3 + $0x30] sm:$0xff] %v304
    %321 = vst [vmem:[%s3 + $0x38] sm:$0xff] %v305
    %322 = vst [vmem:[%s3 + $0x40] sm:$0xff] %v306
    %323 = vst [vmem:[%s3 + $0x48] sm:$0xff] %v307
    %324 = vst [vmem:[%s3 + $0x50] sm:$0xff] %v308
    %325 = vst [vmem:[%s3 + $0x58] sm:$0xff] %v309
    %326 = vst [vmem:[%s3 + $0x60] sm:$0xff] %v310
    %327 = vst [vmem:[%s3 + $0x68] sm:$0xff] %v311
    %328 = vst [vmem:[%s3 + $0x70] sm:$0xff] %v312
    %329 = vst [vmem:[%s3 + $0x78] sm:$0xff] %v313
  $region21: #{detr_forward.57} parent=0 // pred_fallthru
    _
  // Predicated region
  $region22: #{detr_forward.57} parent=0 // pred_check
    _
  $region23: #{detr_forward.57} parent=0 // pred_check_branch
    %331 = sbr.rel (0) target = $region25
  $region24: #{detr_forward.57} parent=0 // pred_region
    _
  $region25: #{detr_forward.57} parent=0 // pred_fallthru
    _
  // Predicated region
  $region26: #{detr_forward.57} parent=0 // pred_check
    _
  $region27: #{detr_forward.57} parent=0 // pred_check_branch
    %333 = sbr.rel (0) target = $region29
  $region28: #{detr_forward.57} parent=0 // pred_region
    _
  $region29: #{detr_forward.57} parent=0 // pred_fallthru
    _

// kernel: detr_forward.56
$region0: #{detr_forward.56}
  #allocation0 [shape = 'u32[]', space=smem, size = 0x4, offset = 0x4, fixed_abs, tag = 'smem constant byte address 0x4 - core index']
  #allocation1 [shape = 'u32[72,128]{1,0:T(1,128)}', space=vmem, size = 0x9000, scoped, tag = 'internal scratch']
  %s0 = inlined_call_operand.vmem [shape: f32[128,32], index: 0, kind: input, shape index: {}]
  %s1 = inlined_call_operand.vmem [shape: f32[128,32], index: 1, kind: input, shape index: {}]
  %s2 = inlined_call_operand.vmem [shape: f32[1,32], index: 2, kind: input, shape index: {}]
  %s3 = inlined_call_operand.vmem [shape: f32[1,32], index: 3, kind: input, shape index: {}]
  %s4 = inlined_call_operand.vmem [shape: f32[128,32], index: 4, kind: output, shape index: {}]
  %s5 = sld [smem:[#allocation0]]
  $region26: #{detr_forward.56} parent=0
    _
  %s7 = ssub.s32 1, %s5
  %s8 = scalar_select 0, %s7, %s5
  // Predicated region
  $region2: #{detr_forward.56} parent=0 // pred_check
    _
  $region3: #{detr_forward.56} parent=0 // pred_check_branch
    %10 = sbr.rel (0) target = $region5
  $region4: #{detr_forward.56} parent=0 // pred_region
    _
  $region5: #{detr_forward.56} parent=0 // pred_fallthru
    _
  // Predicated region
  $region6: #{detr_forward.56} parent=0 // pred_check
    _
  $region7: #{detr_forward.56} parent=0 // pred_check_branch
    %12 = sbr.rel (0) target = $region9
  $region8: #{detr_forward.56} parent=0 // pred_region
    _
  $region9: #{detr_forward.56} parent=0 // pred_fallthru
    _
  // Predicated region
  $region10: #{detr_forward.56} parent=0 // pred_check
    _
  $region11: #{detr_forward.56} parent=0 // pred_check_branch
    %14 = sbr.rel (0) target = $region13
  $region12: #{detr_forward.56} parent=0 // pred_region
    _
  $region13: #{detr_forward.56} parent=0 // pred_fallthru
    _
  // Predicated region
  $region14: #{detr_forward.56} parent=0 // pred_check
    _
  $region15: #{detr_forward.56} parent=0 // pred_check_branch
    %16 = sbr.rel (0) target = $region17
  $region16: #{detr_forward.56} parent=0 // pred_region
    _
  $region17: #{detr_forward.56} parent=0 // pred_fallthru
    _
  %v17 = vld [vmem:[%s0] sm:$0xff]
  %v18 = vld [vmem:[%s0 + $0x8] sm:$0xff]
  %v19 = vld [vmem:[%s0 + $0x10] sm:$0xff]
  %v20 = vld [vmem:[%s0 + $0x18] sm:$0xff]
  %v21 = vld [vmem:[%s0 + $0x20] sm:$0xff]
  %v22 = vld [vmem:[%s0 + $0x28] sm:$0xff]
  %v23 = vld [vmem:[%s0 + $0x30] sm:$0xff]
  %v24 = vld [vmem:[%s0 + $0x38] sm:$0xff]
  %v25 = vld [vmem:[%s0 + $0x40] sm:$0xff]
  %v26 = vld [vmem:[%s0 + $0x48] sm:$0xff]
  %v27 = vld [vmem:[%s0 + $0x50] sm:$0xff]
  %v28 = vld [vmem:[%s0 + $0x58] sm:$0xff]
  %v29 = vld [vmem:[%s0 + $0x60] sm:$0xff]
  %v30 = vld [vmem:[%s0 + $0x68] sm:$0xff]
  %v31 = vld [vmem:[%s0 + $0x70] sm:$0xff]
  %v32 = vld [vmem:[%s0 + $0x78] sm:$0xff]
  %v33 = vld [vmem:[%s1] sm:$0xff]
  %v34 = vld [vmem:[%s1 + $0x8] sm:$0xff]
  %v35 = vld [vmem:[%s1 + $0x10] sm:$0xff]
  %v36 = vld [vmem:[%s1 + $0x18] sm:$0xff]
  %v37 = vld [vmem:[%s1 + $0x20] sm:$0xff]
  %v38 = vld [vmem:[%s1 + $0x28] sm:$0xff]
  %v39 = vld [vmem:[%s1 + $0x30] sm:$0xff]
  %v40 = vld [vmem:[%s1 + $0x38] sm:$0xff]
  %v41 = vld [vmem:[%s1 + $0x40] sm:$0xff]
  %v42 = vld [vmem:[%s1 + $0x48] sm:$0xff]
  %v43 = vld [vmem:[%s1 + $0x50] sm:$0xff]
  %v44 = vld [vmem:[%s1 + $0x58] sm:$0xff]
  %v45 = vld [vmem:[%s1 + $0x60] sm:$0xff]
  %v46 = vld [vmem:[%s1 + $0x68] sm:$0xff]
  %v47 = vld [vmem:[%s1 + $0x70] sm:$0xff]
  %v48 = vld [vmem:[%s1 + $0x78] sm:$0xff]
  %v49 = vadd.f32 %v17, %v33
  %v50 = vadd.f32 %v18, %v34
  %v51 = vadd.f32 %v19, %v35
  %v52 = vadd.f32 %v20, %v36
  %v53 = vadd.f32 %v21, %v37
  %v54 = vadd.f32 %v22, %v38
  %v55 = vadd.f32 %v23, %v39
  %v56 = vadd.f32 %v24, %v40
  %v57 = vadd.f32 %v25, %v41
  %v58 = vadd.f32 %v26, %v42
  %v59 = vadd.f32 %v27, %v43
  %v60 = vadd.f32 %v28, %v44
  %v61 = vadd.f32 %v29, %v45
  %v62 = vadd.f32 %v30, %v46
  %v63 = vadd.f32 %v31, %v47
  %v64 = vadd.f32 %v32, %v48
  %vm65 = vcmask 261120
  %v66 = vsel %vm65, %v49, 0.0
  %67 = vadd.xlane.f32.xlu0 %v66
  %v68 = vpop.xlane.xlu0 %67
  %v69 = vsel %vm65, %v50, 0.0
  %70 = vadd.xlane.f32.xlu0 %v69
  %v71 = vpop.xlane.xlu0 %70
  %v72 = vsel %vm65, %v51, 0.0
  %73 = vadd.xlane.f32.xlu0 %v72
  %v74 = vpop.xlane.xlu0 %73
  %v75 = vsel %vm65, %v52, 0.0
  %76 = vadd.xlane.f32.xlu0 %v75
  %v77 = vpop.xlane.xlu0 %76
  %v78 = vsel %vm65, %v53, 0.0
  %79 = vadd.xlane.f32.xlu0 %v78
  %v80 = vpop.xlane.xlu0 %79
  %v81 = vsel %vm65, %v54, 0.0
  %82 = vadd.xlane.f32.xlu0 %v81
  %v83 = vpop.xlane.xlu0 %82
  %v84 = vsel %vm65, %v55, 0.0
  %85 = vadd.xlane.f32.xlu0 %v84
  %v86 = vpop.xlane.xlu0 %85
  %v87 = vsel %vm65, %v56, 0.0
  %88 = vadd.xlane.f32.xlu0 %v87
  %v89 = vpop.xlane.xlu0 %88
  %v90 = vsel %vm65, %v57, 0.0
  %91 = vadd.xlane.f32.xlu0 %v90
  %v92 = vpop.xlane.xlu0 %91
  %v93 = vsel %vm65, %v58, 0.0
  %94 = vadd.xlane.f32.xlu0 %v93
  %v95 = vpop.xlane.xlu0 %94
  %v96 = vsel %vm65, %v59, 0.0
  %97 = vadd.xlane.f32.xlu0 %v96
  %v98 = vpop.xlane.xlu0 %97
  %v99 = vsel %vm65, %v60, 0.0
  %100 = vadd.xlane.f32.xlu0 %v99
  %v101 = vpop.xlane.xlu0 %100
  %v102 = vsel %vm65, %v61, 0.0
  %103 = vadd.xlane.f32.xlu0 %v102
  %v104 = vpop.xlane.xlu0 %103
  %v105 = vsel %vm65, %v62, 0.0
  %106 = vadd.xlane.f32.xlu0 %v105
  %v107 = vpop.xlane.xlu0 %106
  %v108 = vsel %vm65, %v63, 0.0
  %109 = vadd.xlane.f32.xlu0 %v108
  %v110 = vpop.xlane.xlu0 %109
  %v111 = vsel %vm65, %v64, 0.0
  %112 = vadd.xlane.f32.xlu0 %v111
  %v113 = vpop.xlane.xlu0 %112
  %v114 = vrcp.pop 32.0
  %v115 = vmul.f32 32.0, %v114
  %v116 = vsub.f32 1.0, %v115
  %v117 = vmul.f32 %v114, %v116
  %v118 = vadd.f32 %v114, %v117
  %vm119 = vweird.f32 %v114
  %v120 = vsel %vm119, %v114, %v118
  %v121 = vmul.f32 %v68, %v120
  %v122 = vmul.f32 %v71, %v120
  %v123 = vmul.f32 %v74, %v120
  %v124 = vmul.f32 %v77, %v120
  %v125 = vmul.f32 %v80, %v120
  %v126 = vmul.f32 %v83, %v120
  %v127 = vmul.f32 %v86, %v120
  %v128 = vmul.f32 %v89, %v120
  %v129 = vmul.f32 %v92, %v120
  %v130 = vmul.f32 %v95, %v120
  %v131 = vmul.f32 %v98, %v120
  %v132 = vmul.f32 %v101, %v120
  %v133 = vmul.f32 %v104, %v120
  %v134 = vmul.f32 %v107, %v120
  %v135 = vmul.f32 %v110, %v120
  %v136 = vmul.f32 %v113, %v120
  %v137 = vsub.f32 %v49, %v121
  %v138 = vsub.f32 %v50, %v122
  %v139 = vsub.f32 %v51, %v123
  %v140 = vsub.f32 %v52, %v124
  %v141 = vsub.f32 %v53, %v125
  %v142 = vsub.f32 %v54, %v126
  %v143 = vsub.f32 %v55, %v127
  %v144 = vsub.f32 %v56, %v128
  %v145 = vsub.f32 %v57, %v129
  %v146 = vsub.f32 %v58, %v130
  %v147 = vsub.f32 %v59, %v131
  %v148 = vsub.f32 %v60, %v132
  %v149 = vsub.f32 %v61, %v133
  %v150 = vsub.f32 %v62, %v134
  %v151 = vsub.f32 %v63, %v135
  %v152 = vsub.f32 %v64, %v136
  %v153 = vmul.f32 %v137, %v137
  %v154 = vmul.f32 %v138, %v138
  %v155 = vmul.f32 %v139, %v139
  %v156 = vmul.f32 %v140, %v140
  %v157 = vmul.f32 %v141, %v141
  %v158 = vmul.f32 %v142, %v142
  %v159 = vmul.f32 %v143, %v143
  %v160 = vmul.f32 %v144, %v144
  %v161 = vmul.f32 %v145, %v145
  %v162 = vmul.f32 %v146, %v146
  %v163 = vmul.f32 %v147, %v147
  %v164 = vmul.f32 %v148, %v148
  %v165 = vmul.f32 %v149, %v149
  %v166 = vmul.f32 %v150, %v150
  %v167 = vmul.f32 %v151, %v151
  %v168 = vmul.f32 %v152, %v152
  %v169 = vsel %vm65, %v153, 0.0
  %170 = vadd.xlane.f32.xlu0 %v169
  %v171 = vpop.xlane.xlu0 %170
  %v172 = vsel %vm65, %v154, 0.0
  %173 = vadd.xlane.f32.xlu0 %v172
  %v174 = vpop.xlane.xlu0 %173
  %v175 = vsel %vm65, %v155, 0.0
  %176 = vadd.xlane.f32.xlu0 %v175
  %v177 = vpop.xlane.xlu0 %176
  %v178 = vsel %vm65, %v156, 0.0
  %179 = vadd.xlane.f32.xlu0 %v178
  %v180 = vpop.xlane.xlu0 %179
  %v181 = vsel %vm65, %v157, 0.0
  %182 = vadd.xlane.f32.xlu0 %v181
  %v183 = vpop.xlane.xlu0 %182
  %v184 = vsel %vm65, %v158, 0.0
  %185 = vadd.xlane.f32.xlu0 %v184
  %v186 = vpop.xlane.xlu0 %185
  %v187 = vsel %vm65, %v159, 0.0
  %188 = vadd.xlane.f32.xlu0 %v187
  %v189 = vpop.xlane.xlu0 %188
  %v190 = vsel %vm65, %v160, 0.0
  %191 = vadd.xlane.f32.xlu0 %v190
  %v192 = vpop.xlane.xlu0 %191
  %v193 = vsel %vm65, %v161, 0.0
  %194 = vadd.xlane.f32.xlu0 %v193
  %v195 = vpop.xlane.xlu0 %194
  %v196 = vsel %vm65, %v162, 0.0
  %197 = vadd.xlane.f32.xlu0 %v196
  %v198 = vpop.xlane.xlu0 %197
  %v199 = vsel %vm65, %v163, 0.0
  %200 = vadd.xlane.f32.xlu0 %v199
  %v201 = vpop.xlane.xlu0 %200
  %v202 = vsel %vm65, %v164, 0.0
  %203 = vadd.xlane.f32.xlu0 %v202
  %v204 = vpop.xlane.xlu0 %203
  %v205 = vsel %vm65, %v165, 0.0
  %206 = vadd.xlane.f32.xlu0 %v205
  %v207 = vpop.xlane.xlu0 %206
  %v208 = vsel %vm65, %v166, 0.0
  %209 = vadd.xlane.f32.xlu0 %v208
  %v210 = vpop.xlane.xlu0 %209
  %v211 = vsel %vm65, %v167, 0.0
  %212 = vadd.xlane.f32.xlu0 %v211
  %v213 = vpop.xlane.xlu0 %212
  %v214 = vsel %vm65, %v168, 0.0
  %215 = vadd.xlane.f32.xlu0 %v214
  %v216 = vpop.xlane.xlu0 %215
  %v217 = vmul.f32 %v171, %v120
  %v218 = vmul.f32 %v174, %v120
  %v219 = vmul.f32 %v177, %v120
  %v220 = vmul.f32 %v180, %v120
  %v221 = vmul.f32 %v183, %v120
  %v222 = vmul.f32 %v186, %v120
  %v223 = vmul.f32 %v189, %v120
  %v224 = vmul.f32 %v192, %v120
  %v225 = vmul.f32 %v195, %v120
  %v226 = vmul.f32 %v198, %v120
  %v227 = vmul.f32 %v201, %v120
  %v228 = vmul.f32 %v204, %v120
  %v229 = vmul.f32 %v207, %v120
  %v230 = vmul.f32 %v210, %v120
  %v231 = vmul.f32 %v213, %v120
  %v232 = vmul.f32 %v216, %v120
  %v233 = vadd.f32 %v217, 1e-05
  %v234 = vadd.f32 %v218, 1e-05
  %v235 = vadd.f32 %v219, 1e-05
  %v236 = vadd.f32 %v220, 1e-05
  %v237 = vadd.f32 %v221, 1e-05
  %v238 = vadd.f32 %v222, 1e-05
  %v239 = vadd.f32 %v223, 1e-05
  %v240 = vadd.f32 %v224, 1e-05
  %v241 = vadd.f32 %v225, 1e-05
  %v242 = vadd.f32 %v226, 1e-05
  %v243 = vadd.f32 %v227, 1e-05
  %v244 = vadd.f32 %v228, 1e-05
  %v245 = vadd.f32 %v229, 1e-05
  %v246 = vadd.f32 %v230, 1e-05
  %v247 = vadd.f32 %v231, 1e-05
  %v248 = vadd.f32 %v232, 1e-05
  %v249 = vrsqrt.pop %v233
  %v250 = vmul.f32 %v249, %v233
  %v251 = vmul.f32 %v250, %v249
  %v252 = vmul.f32 0.5, %v251
  %v253 = vsub.f32 1.5, %v252
  %v254 = vmul.f32 %v249, %v253
  %vm255 = vweird.f32 %v233
  %vm256 = vweird.f32 %v249
  %vm257 = vmor %vm255, %vm256
  %v258 = vsel %vm257, %v249, %v254
  %v259 = vrsqrt.pop %v234
  %v260 = vmul.f32 %v259, %v234
  %v261 = vmul.f32 %v260, %v259
  %v262 = vmul.f32 0.5, %v261
  %v263 = vsub.f32 1.5, %v262
  %v264 = vmul.f32 %v259, %v263
  %vm265 = vweird.f32 %v234
  %vm266 = vweird.f32 %v259
  %vm267 = vmor %vm265, %vm266
  %v268 = vsel %vm267, %v259, %v264
  %v269 = vrsqrt.pop %v235
  %v270 = vmul.f32 %v269, %v235
  %v271 = vmul.f32 %v270, %v269
  %v272 = vmul.f32 0.5, %v271
  %v273 = vsub.f32 1.5, %v272
  %v274 = vmul.f32 %v269, %v273
  %vm275 = vweird.f32 %v235
  %vm276 = vweird.f32 %v269
  %vm277 = vmor %vm275, %vm276
  %v278 = vsel %vm277, %v269, %v274
  %v279 = vrsqrt.pop %v236
  %v280 = vmul.f32 %v279, %v236
  %v281 = vmul.f32 %v280, %v279
  %v282 = vmul.f32 0.5, %v281
  %v283 = vsub.f32 1.5, %v282
  %v284 = vmul.f32 %v279, %v283
  %vm285 = vweird.f32 %v236
  %vm286 = vweird.f32 %v279
  %vm287 = vmor %vm285, %vm286
  %v288 = vsel %vm287, %v279, %v284
  %v289 = vrsqrt.pop %v237
  %v290 = vmul.f32 %v289, %v237
  %v291 = vmul.f32 %v290, %v289
  %v292 = vmul.f32 0.5, %v291
  %v293 = vsub.f32 1.5, %v292
  %v294 = vmul.f32 %v289, %v293
  %vm295 = vweird.f32 %v237
  %vm296 = vweird.f32 %v289
  %vm297 = vmor %vm295, %vm296
  %v298 = vsel %vm297, %v289, %v294
  %v299 = vrsqrt.pop %v238
  %v300 = vmul.f32 %v299, %v238
  %v301 = vmul.f32 %v300, %v299
  %v302 = vmul.f32 0.5, %v301
  %v303 = vsub.f32 1.5, %v302
  %v304 = vmul.f32 %v299, %v303
  %vm305 = vweird.f32 %v238
  %vm306 = vweird.f32 %v299
  %vm307 = vmor %vm305, %vm306
  %v308 = vsel %vm307, %v299, %v304
  %v309 = vrsqrt.pop %v239
  %v310 = vmul.f32 %v309, %v239
  %v311 = vmul.f32 %v310, %v309
  %v312 = vmul.f32 0.5, %v311
  %v313 = vsub.f32 1.5, %v312
  %v314 = vmul.f32 %v309, %v313
  %vm315 = vweird.f32 %v239
  %vm316 = vweird.f32 %v309
  %vm317 = vmor %vm315, %vm316
  %v318 = vsel %vm317, %v309, %v314
  %v319 = vrsqrt.pop %v240
  %v320 = vmul.f32 %v319, %v240
  %v321 = vmul.f32 %v320, %v319
  %v322 = vmul.f32 0.5, %v321
  %v323 = vsub.f32 1.5, %v322
  %v324 = vmul.f32 %v319, %v323
  %vm325 = vweird.f32 %v240
  %vm326 = vweird.f32 %v319
  %vm327 = vmor %vm325, %vm326
  %v328 = vsel %vm327, %v319, %v324
  %v329 = vrsqrt.pop %v241
  %v330 = vmul.f32 %v329, %v241
  %v331 = vmul.f32 %v330, %v329
  %v332 = vmul.f32 0.5, %v331
  %v333 = vsub.f32 1.5, %v332
  %v334 = vmul.f32 %v329, %v333
  %vm335 = vweird.f32 %v241
  %vm336 = vweird.f32 %v329
  %vm337 = vmor %vm335, %vm336
  %v338 = vsel %vm337, %v329, %v334
  %v339 = vrsqrt.pop %v242
  %v340 = vmul.f32 %v339, %v242
  %v341 = vmul.f32 %v340, %v339
  %v342 = vmul.f32 0.5, %v341
  %v343 = vsub.f32 1.5, %v342
  %v344 = vmul.f32 %v339, %v343
  %vm345 = vweird.f32 %v242
  %vm346 = vweird.f32 %v339
  %vm347 = vmor %vm345, %vm346
  %v348 = vsel %vm347, %v339, %v344
  %v349 = vrsqrt.pop %v243
  %v350 = vmul.f32 %v349, %v243
  %v351 = vmul.f32 %v350, %v349
  %v352 = vmul.f32 0.5, %v351
  %v353 = vsub.f32 1.5, %v352
  %v354 = vmul.f32 %v349, %v353
  %vm355 = vweird.f32 %v243
  %vm356 = vweird.f32 %v349
  %vm357 = vmor %vm355, %vm356
  %v358 = vsel %vm357, %v349, %v354
  %v359 = vrsqrt.pop %v244
  %v360 = vmul.f32 %v359, %v244
  %v361 = vmul.f32 %v360, %v359
  %v362 = vmul.f32 0.5, %v361
  %v363 = vsub.f32 1.5, %v362
  %v364 = vmul.f32 %v359, %v363
  %vm365 = vweird.f32 %v244
  %vm366 = vweird.f32 %v359
  %vm367 = vmor %vm365, %vm366
  %v368 = vsel %vm367, %v359, %v364
  %v369 = vrsqrt.pop %v245
  %v370 = vmul.f32 %v369, %v245
  %v371 = vmul.f32 %v370, %v369
  %v372 = vmul.f32 0.5, %v371
  %v373 = vsub.f32 1.5, %v372
  %v374 = vmul.f32 %v369, %v373
  %vm375 = vweird.f32 %v245
  %vm376 = vweird.f32 %v369
  %vm377 = vmor %vm375, %vm376
  %v378 = vsel %vm377, %v369, %v374
  %v379 = vrsqrt.pop %v246
  %v380 = vmul.f32 %v379, %v246
  %v381 = vmul.f32 %v380, %v379
  %v382 = vmul.f32 0.5, %v381
  %v383 = vsub.f32 1.5, %v382
  %v384 = vmul.f32 %v379, %v383
  %vm385 = vweird.f32 %v246
  %vm386 = vweird.f32 %v379
  %vm387 = vmor %vm385, %vm386
  %v388 = vsel %vm387, %v379, %v384
  %v389 = vrsqrt.pop %v247
  %v390 = vmul.f32 %v389, %v247
  %v391 = vmul.f32 %v390, %v389
  %v392 = vmul.f32 0.5, %v391
  %v393 = vsub.f32 1.5, %v392
  %v394 = vmul.f32 %v389, %v393
  %vm395 = vweird.f32 %v247
  %vm396 = vweird.f32 %v389
  %vm397 = vmor %vm395, %vm396
  %v398 = vsel %vm397, %v389, %v394
  %v399 = vrsqrt.pop %v248
  %v400 = vmul.f32 %v399, %v248
  %v401 = vmul.f32 %v400, %v399
  %v402 = vmul.f32 0.5, %v401
  %v403 = vsub.f32 1.5, %v402
  %v404 = vmul.f32 %v399, %v403
  %vm405 = vweird.f32 %v248
  %vm406 = vweird.f32 %v399
  %vm407 = vmor %vm405, %vm406
  %v408 = vsel %vm407, %v399, %v404
  %v409 = vmul.f32 %v137, %v258
  %v410 = vmul.f32 %v138, %v268
  %v411 = vmul.f32 %v139, %v278
  %v412 = vmul.f32 %v140, %v288
  %v413 = vmul.f32 %v141, %v298
  %v414 = vmul.f32 %v142, %v308
  %v415 = vmul.f32 %v143, %v318
  %v416 = vmul.f32 %v144, %v328
  %v417 = vmul.f32 %v145, %v338
  %v418 = vmul.f32 %v146, %v348
  %v419 = vmul.f32 %v147, %v358
  %v420 = vmul.f32 %v148, %v368
  %v421 = vmul.f32 %v149, %v378
  %v422 = vmul.f32 %v150, %v388
  %v423 = vmul.f32 %v151, %v398
  %v424 = vmul.f32 %v152, %v408
  %v425 = vld [vmem:[%s2] sm:$0x1]
  %v427 = vperm.slane %v425, 0
  %v429 = vmul.f32 %v409, %v427
  %v430 = vmul.f32 %v410, %v427
  %v431 = vmul.f32 %v411, %v427
  %v432 = vmul.f32 %v412, %v427
  %v433 = vmul.f32 %v413, %v427
  %v434 = vmul.f32 %v414, %v427
  %v435 = vmul.f32 %v415, %v427
  %v436 = vmul.f32 %v416, %v427
  %v437 = vmul.f32 %v417, %v427
  %v438 = vmul.f32 %v418, %v427
  %v439 = vmul.f32 %v419, %v427
  %v440 = vmul.f32 %v420, %v427
  %v441 = vmul.f32 %v421, %v427
  %v442 = vmul.f32 %v422, %v427
  %v443 = vmul.f32 %v423, %v427
  %v444 = vmul.f32 %v424, %v427
  %v445 = vld [vmem:[%s3] sm:$0x1]
  %v447 = vperm.slane %v445, 0
  %v449 = vadd.f32 %v429, %v447
  %v450 = vadd.f32 %v430, %v447
  %v451 = vadd.f32 %v431, %v447
  %v452 = vadd.f32 %v432, %v447
  %v453 = vadd.f32 %v433, %v447
  %v454 = vadd.f32 %v434, %v447
  %v455 = vadd.f32 %v435, %v447
  %v456 = vadd.f32 %v436, %v447
  %v457 = vadd.f32 %v437, %v447
  %v458 = vadd.f32 %v438, %v447
  %v459 = vadd.f32 %v439, %v447
  %v460 = vadd.f32 %v440, %v447
  %v461 = vadd.f32 %v441, %v447
  %v462 = vadd.f32 %v442, %v447
  %v463 = vadd.f32 %v443, %v447
  %v464 = vadd.f32 %v444, %v447
  %465 = vst.msk [vmem:[%s4] sm:$0xff] %vm65, %v449
  %466 = vst.msk [vmem:[%s4 + $0x8] sm:$0xff] %vm65, %v450
  %467 = vst.msk [vmem:[%s4 + $0x10] sm:$0xff] %vm65, %v451
  %468 = vst.msk [vmem:[%s4 + $0x18] sm:$0xff] %vm65, %v452
  %469 = vst.msk [vmem:[%s4 + $0x20] sm:$0xff] %vm65, %v453
  %470 = vst.msk [vmem:[%s4 + $0x28] sm:$0xff] %vm65, %v454
  %471 = vst.msk [vmem:[%s4 + $0x30] sm:$0xff] %vm65, %v455
  %472 = vst.msk [vmem:[%s4 + $0x38] sm:$0xff] %vm65, %v456
  %473 = vst.msk [vmem:[%s4 + $0x40] sm:$0xff] %vm65, %v457
  %474 = vst.msk [vmem:[%s4 + $0x48] sm:$0xff] %vm65, %v458
  %475 = vst.msk [vmem:[%s4 + $0x50] sm:$0xff] %vm65, %v459
  %476 = vst.msk [vmem:[%s4 + $0x58] sm:$0xff] %vm65, %v460
  %477 = vst.msk [vmem:[%s4 + $0x60] sm:$0xff] %vm65, %v461
  %478 = vst.msk [vmem:[%s4 + $0x68] sm:$0xff] %vm65, %v462
  %479 = vst.msk [vmem:[%s4 + $0x70] sm:$0xff] %vm65, %v463
  %480 = vst.msk [vmem:[%s4 + $0x78] sm:$0xff] %vm65, %v464
  // Predicated region
  $region18: #{detr_forward.56} parent=0 // pred_check
    _
  $region19: #{detr_forward.56} parent=0 // pred_check_branch
    %482 = sbr.rel (0) target = $region21
  $region20: #{detr_forward.56} parent=0 // pred_region
    _
  $region21: #{detr_forward.56} parent=0 // pred_fallthru
    _
  // Predicated region
  $region22: #{detr_forward.56} parent=0 // pred_check
    _
  $region23: #{detr_forward.56} parent=0 // pred_check_branch
    %484 = sbr.rel (0) target = $region25
  $region24: #{detr_forward.56} parent=0 // pred_region
    _
  $region25: #{detr_forward.56} parent=0 // pred_fallthru
    _

// kernel: detr_forward.72
$region0: #{detr_forward.72}
  #allocation0 [shape = 'u32[]', space=smem, size = 0x4, offset = 0x4, fixed_abs, tag = 'smem constant byte address 0x4 - core index']
  #allocation1 [shape = 'u32[72,128]{1,0:T(1,128)}', space=vmem, size = 0x9000, scoped, tag = 'internal scratch']
  %s0 = inlined_call_operand.vmem [shape: f32[16,32], index: 0, kind: input, shape index: {}]
  %s1 = inlined_call_operand.vmem [shape: f32[16,32], index: 1, kind: input, shape index: {}]
  %s2 = inlined_call_operand.vmem [shape: f32[1,32], index: 2, kind: input, shape index: {}]
  %s3 = inlined_call_operand.vmem [shape: f32[1,32], index: 3, kind: input, shape index: {}]
  %s4 = inlined_call_operand.vmem [shape: f32[16,32], index: 4, kind: output, shape index: {}]
  %s5 = sld [smem:[#allocation0]]
  $region26: #{detr_forward.72} parent=0
    _
  %s7 = ssub.s32 1, %s5
  %s8 = scalar_select 0, %s7, %s5
  // Predicated region
  $region2: #{detr_forward.72} parent=0 // pred_check
    _
  $region3: #{detr_forward.72} parent=0 // pred_check_branch
    %10 = sbr.rel (0) target = $region5
  $region4: #{detr_forward.72} parent=0 // pred_region
    _
  $region5: #{detr_forward.72} parent=0 // pred_fallthru
    _
  // Predicated region
  $region6: #{detr_forward.72} parent=0 // pred_check
    _
  $region7: #{detr_forward.72} parent=0 // pred_check_branch
    %12 = sbr.rel (0) target = $region9
  $region8: #{detr_forward.72} parent=0 // pred_region
    _
  $region9: #{detr_forward.72} parent=0 // pred_fallthru
    _
  // Predicated region
  $region10: #{detr_forward.72} parent=0 // pred_check
    _
  $region11: #{detr_forward.72} parent=0 // pred_check_branch
    %14 = sbr.rel (0) target = $region13
  $region12: #{detr_forward.72} parent=0 // pred_region
    _
  $region13: #{detr_forward.72} parent=0 // pred_fallthru
    _
  // Predicated region
  $region14: #{detr_forward.72} parent=0 // pred_check
    _
  $region15: #{detr_forward.72} parent=0 // pred_check_branch
    %16 = sbr.rel (0) target = $region17
  $region16: #{detr_forward.72} parent=0 // pred_region
    _
  $region17: #{detr_forward.72} parent=0 // pred_fallthru
    _
  %v17 = vld [vmem:[%s0] sm:$0xff]
  %v18 = vld [vmem:[%s0 + $0x8] sm:$0xff]
  %v19 = vld [vmem:[%s1] sm:$0xff]
  %v20 = vld [vmem:[%s1 + $0x8] sm:$0xff]
  %v21 = vadd.f32 %v17, %v19
  %v22 = vadd.f32 %v18, %v20
  %vm23 = vcmask 261120
  %v24 = vsel %vm23, %v21, 0.0
  %25 = vadd.xlane.f32.xlu0 %v24
  %v26 = vpop.xlane.xlu0 %25
  %v27 = vsel %vm23, %v22, 0.0
  %28 = vadd.xlane.f32.xlu0 %v27
  %v29 = vpop.xlane.xlu0 %28
  %v30 = vrcp.pop 32.0
  %v31 = vmul.f32 32.0, %v30
  %v32 = vsub.f32 1.0, %v31
  %v33 = vmul.f32 %v30, %v32
  %v34 = vadd.f32 %v30, %v33
  %vm35 = vweird.f32 %v30
  %v36 = vsel %vm35, %v30, %v34
  %v37 = vmul.f32 %v26, %v36
  %v38 = vmul.f32 %v29, %v36
  %v39 = vsub.f32 %v21, %v37
  %v40 = vsub.f32 %v22, %v38
  %v41 = vmul.f32 %v39, %v39
  %v42 = vmul.f32 %v40, %v40
  %v43 = vsel %vm23, %v41, 0.0
  %44 = vadd.xlane.f32.xlu0 %v43
  %v45 = vpop.xlane.xlu0 %44
  %v46 = vsel %vm23, %v42, 0.0
  %47 = vadd.xlane.f32.xlu0 %v46
  %v48 = vpop.xlane.xlu0 %47
  %v49 = vmul.f32 %v45, %v36
  %v50 = vmul.f32 %v48, %v36
  %v51 = vadd.f32 %v49, 1e-05
  %v52 = vadd.f32 %v50, 1e-05
  %v53 = vrsqrt.pop %v51
  %v54 = vmul.f32 %v53, %v51
  %v55 = vmul.f32 %v54, %v53
  %v56 = vmul.f32 0.5, %v55
  %v57 = vsub.f32 1.5, %v56
  %v58 = vmul.f32 %v53, %v57
  %vm59 = vweird.f32 %v51
  %vm60 = vweird.f32 %v53
  %vm61 = vmor %vm59, %vm60
  %v62 = vsel %vm61, %v53, %v58
  %v63 = vrsqrt.pop %v52
  %v64 = vmul.f32 %v63, %v52
  %v65 = vmul.f32 %v64, %v63
  %v66 = vmul.f32 0.5, %v65
  %v67 = vsub.f32 1.5, %v66
  %v68 = vmul.f32 %v63, %v67
  %vm69 = vweird.f32 %v52
  %vm70 = vweird.f32 %v63
  %vm71 = vmor %vm69, %vm70
  %v72 = vsel %vm71, %v63, %v68
  %v73 = vmul.f32 %v39, %v62
  %v74 = vmul.f32 %v40, %v72
  %v75 = vld [vmem:[%s2] sm:$0x1]
  %v77 = vperm.slane %v75, 0
  %v79 = vmul.f32 %v73, %v77
  %v80 = vmul.f32 %v74, %v77
  %v81 = vld [vmem:[%s3] sm:$0x1]
  %v83 = vperm.slane %v81, 0
  %v85 = vadd.f32 %v79, %v83
  %v86 = vadd.f32 %v80, %v83
  %87 = vst.msk [vmem:[%s4] sm:$0xff] %vm23, %v85
  %88 = vst.msk [vmem:[%s4 + $0x8] sm:$0xff] %vm23, %v86
  // Predicated region
  $region18: #{detr_forward.72} parent=0 // pred_check
    _
  $region19: #{detr_forward.72} parent=0 // pred_check_branch
    %90 = sbr.rel (0) target = $region21
  $region20: #{detr_forward.72} parent=0 // pred_region
    _
  $region21: #{detr_forward.72} parent=0 // pred_fallthru
    _
  // Predicated region
  $region22: #{detr_forward.72} parent=0 // pred_check
    _
  $region23: #{detr_forward.72} parent=0 // pred_check_branch
    %92 = sbr.rel (0) target = $region25
  $region24: #{detr_forward.72} parent=0 // pred_region
    _
  $region25: #{detr_forward.72} parent=0 // pred_fallthru
    _

// kernel: detr_forward.70
$region0: #{detr_forward.70}
  #allocation0 [shape = 'u32[]', space=smem, size = 0x4, offset = 0x4, fixed_abs, tag = 'smem constant byte address 0x4 - core index']
  #allocation1 [shape = 'u32[72,128]{1,0:T(1,128)}', space=vmem, size = 0x9000, scoped, tag = 'internal scratch']
  %s0 = inlined_call_operand.vmem [shape: bf16[2,4,8,8], index: 0, kind: input, shape index: {}]
  %s1 = inlined_call_operand.vmem [shape: bf16[2,4,8,8], index: 1, kind: input, shape index: {}]
  %s2 = inlined_call_operand.vmem [shape: bf16[2,4,8,8], index: 2, kind: input, shape index: {}]
  %s3 = inlined_call_operand.vmem [shape: bf16[2,4,8,8], index: 3, kind: output, shape index: {}]
  %s4 = sld [smem:[#allocation0]]
  $region45: #{detr_forward.70} parent=0
    _
  %s6 = ssub.s32 1, %s4
  %s7 = scalar_select 0, %s6, %s4
  loop: start=0, step=1, limit=4
  $region2: #{detr_forward.70} parent=0 // loop_pre_header
    _
  $region3: #{detr_forward.70} parent=0 // loop_header
    %s9 = sphi 0, %s13
    %p10 = scmp.ge.s32.totalorder %s9, 4
    %s19 = sphi 0, %s21
    %s22 = sphi 0, %s19
    %s23 = sphi 0, %s22
    %s39 = sphi 0, %s23
    %s45 = sphi 0, %s47
    %s48 = sphi 0, %s45
    %s49 = sphi 0, %s48
    %s65 = sphi 0, %s49
    %s71 = sphi 0, %s73
    %s74 = sphi 0, %s71
    %s75 = sphi 0, %s74
    %s91 = sphi 0, %s75
    %s97 = sphi 0, %s99
    %s100 = sphi 0, %s97
    %s101 = sphi 0, %s100
    %s117 = sphi 0, %s101
  $region4: #{detr_forward.70} parent=0 // loop_header_branch
    %12 = sbr.rel (%p10) target = $region8
  $region5: #{detr_forward.70} parent=0 // loop_body
    %s14 = ssub.s32 %s9, 1
    %s15 = ssub.s32 %s9, 2
    %s16 = sadd.s32 %s9, 1
    %s17 = ssub.s32 %s9, %s16
    %p18 = scmp.eq.s32.totalorder %s17, 0
    %s20 = sadd.s32 %s19, 1
    %s21 = scalar_select %p18, %s19, %s20
    %p24 = pneg %p18
    %p25 = scmp.eq.s32.totalorder %s9, 1
    %p26 = por %p24, %p25
    %p27 = scmp.ne.s32.totalorder %s19, %s22
    %p28 = scmp.eq.s32.totalorder %s9, 0
    %p29 = por %p27, %p28
    %p30 = scmp.ne.s32.totalorder %s19, %s22
    %p31 = scmp.eq.s32.totalorder %s14, 1
    %p32 = por %p30, %p31
    %p33 = scmp.ne.s32.totalorder %s22, %s23
    %p34 = scmp.eq.s32.totalorder %s14, 0
    %p35 = por %p33, %p34
    %p36 = scmp.ne.s32.totalorder %s22, %s23
    %p37 = scmp.eq.s32.totalorder %s15, 1
    %p38 = por %p36, %p37
    %p40 = scmp.ne.s32.totalorder %s23, %s39
    %p41 = scmp.eq.s32.totalorder %s15, 0
    %p42 = por %p40, %p41
    %s43 = ssub.s32 %s9, %s16
    %p44 = scmp.eq.s32.totalorder %s43, 0
    %s46 = sadd.s32 %s45, 1
    %s47 = scalar_select %p44, %s45, %s46
    %p50 = pneg %p44
    %p51 = scmp.eq.s32.totalorder %s9, 1
    %p52 = por %p50, %p51
    %p53 = scmp.ne.s32.totalorder %s45, %s48
    %p54 = scmp.eq.s32.totalorder %s9, 0
    %p55 = por %p53, %p54
    %p56 = scmp.ne.s32.totalorder %s45, %s48
    %p57 = scmp.eq.s32.totalorder %s14, 1
    %p58 = por %p56, %p57
    %p59 = scmp.ne.s32.totalorder %s48, %s49
    %p60 = scmp.eq.s32.totalorder %s14, 0
    %p61 = por %p59, %p60
    %p62 = scmp.ne.s32.totalorder %s48, %s49
    %p63 = scmp.eq.s32.totalorder %s15, 1
    %p64 = por %p62, %p63
    %p66 = scmp.ne.s32.totalorder %s49, %s65
    %p67 = scmp.eq.s32.totalorder %s15, 0
    %p68 = por %p66, %p67
    %s69 = ssub.s32 %s9, %s16
    %p70 = scmp.eq.s32.totalorder %s69, 0
    %s72 = sadd.s32 %s71, 1
    %s73 = scalar_select %p70, %s71, %s72
    %p76 = pneg %p70
    %p77 = scmp.eq.s32.totalorder %s9, 1
    %p78 = por %p76, %p77
    %p79 = scmp.ne.s32.totalorder %s71, %s74
    %p80 = scmp.eq.s32.totalorder %s9, 0
    %p81 = por %p79, %p80
    %p82 = scmp.ne.s32.totalorder %s71, %s74
    %p83 = scmp.eq.s32.totalorder %s14, 1
    %p84 = por %p82, %p83
    %p85 = scmp.ne.s32.totalorder %s74, %s75
    %p86 = scmp.eq.s32.totalorder %s14, 0
    %p87 = por %p85, %p86
    %p88 = scmp.ne.s32.totalorder %s74, %s75
    %p89 = scmp.eq.s32.totalorder %s15, 1
    %p90 = por %p88, %p89
    %p92 = scmp.ne.s32.totalorder %s75, %s91
    %p93 = scmp.eq.s32.totalorder %s15, 0
    %p94 = por %p92, %p93
    %s95 = ssub.s32 %s9, %s16
    %p96 = scmp.eq.s32.totalorder %s95, 0
    %s98 = sadd.s32 %s97, 1
    %s99 = scalar_select %p96, %s97, %s98
    %p102 = pneg %p96
    %p103 = scmp.eq.s32.totalorder %s9, 1
    %p104 = por %p102, %p103
    %p105 = scmp.ne.s32.totalorder %s97, %s100
    %p106 = scmp.eq.s32.totalorder %s9, 0
    %p107 = por %p105, %p106
    %p108 = scmp.ne.s32.totalorder %s97, %s100
    %p109 = scmp.eq.s32.totalorder %s14, 1
    %p110 = por %p108, %p109
    %p111 = scmp.ne.s32.totalorder %s100, %s101
    %p112 = scmp.eq.s32.totalorder %s14, 0
    %p113 = por %p111, %p112
    %p114 = scmp.ne.s32.totalorder %s100, %s101
    %p115 = scmp.eq.s32.totalorder %s15, 1
    %p116 = por %p114, %p115
    %p118 = scmp.ne.s32.totalorder %s101, %s117
    %p119 = scmp.eq.s32.totalorder %s15, 0
    %p120 = por %p118, %p119
    %p121 = scmp.le.s32.totalorder 1, %s9
    %p122 = scmp.lt.s32.totalorder %s9, 3
    %p123 = pnand %p121, %p122
    %p124 = pneg %p123
    // Predicated region
    $region9: #{detr_forward.70} parent=5 // pred_check
      _
    $region10: #{detr_forward.70} parent=5 // pred_check_branch
      %126 = sbr.rel (%p123) target = $region12
    $region11: #{detr_forward.70} parent=5 // pred_region
      %s127 = ssub.s32 %s9, 1
    $region12: #{detr_forward.70} parent=5 // pred_fallthru
      _
    %p128 = scmp.lt.s32.totalorder %s9, 2
    // Predicated region
    $region13: #{detr_forward.70} parent=5 // pred_check
      %p129 = pneg %p128
    $region14: #{detr_forward.70} parent=5 // pred_check_branch
      %131 = sbr.rel (%p129) target = $region16
    $region15: #{detr_forward.70} parent=5 // pred_region
      // Predicated region
      $region17: #{detr_forward.70} parent=15 // pred_check
        %p132 = pneg %p29
      $region18: #{detr_forward.70} parent=15 // pred_check_branch
        %134 = sbr.rel (%p132) target = $region20
      $region19: #{detr_forward.70} parent=15 // pred_region
        %p135 = scmp.lt.s32.totalorder %s9, 1
        %s136 = scalar_select %p135, %s9, 1
        %s137 = smul.addr %s136, 4
        %s138 = smul.addr %s137, 4
        %s139 = scalar_lea.vmem %s0, %s138
      $region20: #{detr_forward.70} parent=15 // pred_fallthru
        _
      // Predicated region
      $region21: #{detr_forward.70} parent=15 // pred_check
        %p140 = pneg %p55
      $region22: #{detr_forward.70} parent=15 // pred_check_branch
        %142 = sbr.rel (%p140) target = $region24
      $region23: #{detr_forward.70} parent=15 // pred_region
        %p143 = scmp.lt.s32.totalorder %s9, 1
        %s144 = scalar_select %p143, %s9, 1
        %s145 = smul.addr %s144, 4
        %s146 = smul.addr %s145, 4
        %s147 = scalar_lea.vmem %s1, %s146
      $region24: #{detr_forward.70} parent=15 // pred_fallthru
        _
      // Predicated region
      $region25: #{detr_forward.70} parent=15 // pred_check
        %p148 = pneg %p81
      $region26: #{detr_forward.70} parent=15 // pred_check_branch
        %150 = sbr.rel (%p148) target = $region28
      $region27: #{detr_forward.70} parent=15 // pred_region
        %p151 = scmp.lt.s32.totalorder %s9, 1
        %s152 = scalar_select %p151, %s9, 1
        %s153 = smul.addr %s152, 4
        %s154 = smul.addr %s153, 4
        %s155 = scalar_lea.vmem %s2, %s154
      $region28: #{detr_forward.70} parent=15 // pred_fallthru
        _
    $region16: #{detr_forward.70} parent=5 // pred_fallthru
      _
    %p156 = scmp.le.s32.totalorder 1, %s9
    %p157 = scmp.lt.s32.totalorder %s9, 3
    %p158 = pnand %p156, %p157
    %p159 = pneg %p158
    // Predicated region
    $region29: #{detr_forward.70} parent=5 // pred_check
      _
    $region30: #{detr_forward.70} parent=5 // pred_check_branch
      %161 = sbr.rel (%p158) target = $region32
    $region31: #{detr_forward.70} parent=5 // pred_region
      %s162 = ssub.s32 %s9, 1
      %p163 = scmp.lt.s32.totalorder %s14, 1
      %s164 = scalar_select %p163, %s14, 1
      %s165 = smul.addr %s164, 4
      %s166 = smul.addr %s165, 4
      %s167 = scalar_lea.vmem %s0, %s166
      %p168 = pneg %p35
      %p169 = pneg %p32
      %p170 = scmp.lt.s32.totalorder %s14, 1
      %s171 = scalar_select %p170, %s14, 1
      %s172 = smul.addr %s171, 4
      %s173 = smul.addr %s172, 4
      %s174 = scalar_lea.vmem %s1, %s173
      %p175 = pneg %p61
      %p176 = pneg %p58
      %p177 = scmp.lt.s32.totalorder %s14, 1
      %s178 = scalar_select %p177, %s14, 1
      %s179 = smul.addr %s178, 4
      %s180 = smul.addr %s179, 4
      %s181 = scalar_lea.vmem %s2, %s180
      %p182 = pneg %p87
      %p183 = pneg %p84
      %p184 = pneg %p113
      %p185 = pneg %p110
      %p186 = scmp.lt.s32.totalorder %s14, 1
      %s187 = scalar_select %p186, %s14, 1
      %s188 = smul.addr %s187, 4
      %s189 = smul.addr %s188, 4
      %s190 = scalar_lea.vmem %s3, %s189
      %p191 = scmp.lt.s32.totalorder %s14, 1
      %s192 = scalar_select %p191, %s14, 1
      %s193 = smul.addr %s192, 4
      %s194 = smul.addr %s193, 4
      %s195 = scalar_lea.vmem %s0, %s194
      %p196 = scmp.lt.s32.totalorder %s14, 1
      %s197 = scalar_select %p196, %s14, 1
      %s198 = smul.addr %s197, 4
      %s199 = smul.addr %s198, 4
      %s200 = scalar_lea.vmem %s1, %s199
      %p201 = scmp.lt.s32.totalorder %s14, 1
      %s202 = scalar_select %p201, %s14, 1
      %s203 = smul.addr %s202, 4
      %s204 = smul.addr %s203, 4
      %s205 = scalar_lea.vmem %s2, %s204
      %p206 = scmp.lt.s32.totalorder %s14, 1
      %s207 = scalar_select %p206, %s14, 1
      %s208 = smul.addr %s207, 4
      %s209 = smul.addr %s208, 4
      %s210 = scalar_lea.vmem %s3, %s209
      %v212 = vld [vmem:[%s195] sm:$0xf]
      %v213 = vld [vmem:[%s195 + $0x4] sm:$0xf]
      %v214 = vld [vmem:[%s195 + $0x8] sm:$0xf]
      %v215 = vld [vmem:[%s195 + $0xc] sm:$0xf]
      %v216 = vunpack.c.l.bf16 %v212
      %v217 = vunpack.c.l.bf16 %v213
      %v218 = vunpack.c.l.bf16 %v214
      %v219 = vunpack.c.l.bf16 %v215
      %v220 = vmul.f32 %v216, 0.35351563
      %v221 = vmul.f32 %v217, 0.35351563
      %v222 = vmul.f32 %v218, 0.35351563
      %v223 = vmul.f32 %v219, 0.35351563
      %v224 = vpack.c.bf16 %v220, %v220
      %v225 = vpack.c.bf16 %v221, %v221
      %v226 = vpack.c.bf16 %v222, %v222
      %v227 = vpack.c.bf16 %v223, %v223
      %v228 = vld [vmem:[%s200] sm:$0xf]
      %v229 = vld [vmem:[%s200 + $0x4] sm:$0xf]
      %v230 = vld [vmem:[%s200 + $0x8] sm:$0xf]
      %v231 = vld [vmem:[%s200 + $0xc] sm:$0xf]
      %v232 = vld [vmem:[%s205] sm:$0xf]
      %v233 = vld [vmem:[%s205 + $0x4] sm:$0xf]
      %v234 = vld [vmem:[%s205 + $0x8] sm:$0xf]
      %v235 = vld [vmem:[%s205 + $0xc] sm:$0xf]
      %vm236 = vcmask 64512
      %v238 = vsel %vm236, %v224, 0
      %v241 = vsel %vm236, %v228, 0
      %243 = vmatpush.bf16.xpose.msra.mxu0 0
      %244 = vmatpush.bf16.xpose.msra.mxu0 0
      %245 = vmatpush.bf16.xpose.msra.mxu0 0
      %246 = vmatpush.bf16.xpose.msra.mxu0 0
      %247 = vmatpush.bf16.xpose.msra.mxu0 0
      %248 = vmatpush.bf16.xpose.msra.mxu0 0
      %249 = vmatpush.bf16.xpose.msra.mxu0 0
      %250 = vmatpush.bf16.xpose.msra.mxu0 %v241
      %251 = vmatmul.bf16.gmra.mxu0 %v238
      %v252 = vpop.f32.mrf.mxu0
      %v253 = vadd.f32 0.0, %v252
      %v254 = vpop.f32.mrf.mxu0
      %255 = vdwg.mxu0
      %v257 = vsel %vm236, %v225, 0
      %v260 = vsel %vm236, %v229, 0
      %262 = vmatpush.bf16.xpose.msra.mxu0 0
      %263 = vmatpush.bf16.xpose.msra.mxu0 0
      %264 = vmatpush.bf16.xpose.msra.mxu0 0
      %265 = vmatpush.bf16.xpose.msra.mxu0 0
      %266 = vmatpush.bf16.xpose.msra.mxu0 0
      %267 = vmatpush.bf16.xpose.msra.mxu0 0
      %268 = vmatpush.bf16.xpose.msra.mxu0 0
      %269 = vmatpush.bf16.xpose.msra.mxu0 %v260
      %270 = vmatmul.bf16.gmra.mxu0 %v257
      %v271 = vpop.f32.mrf.mxu0
      %v272 = vadd.f32 0.0, %v271
      %v273 = vpop.f32.mrf.mxu0
      %274 = vdwg.mxu0
      %v276 = vsel %vm236, %v226, 0
      %v279 = vsel %vm236, %v230, 0
      %281 = vmatpush.bf16.xpose.msra.mxu0 0
      %282 = vmatpush.bf16.xpose.msra.mxu0 0
      %283 = vmatpush.bf16.xpose.msra.mxu0 0
      %284 = vmatpush.bf16.xpose.msra.mxu0 0
      %285 = vmatpush.bf16.xpose.msra.mxu0 0
      %286 = vmatpush.bf16.xpose.msra.mxu0 0
      %287 = vmatpush.bf16.xpose.msra.mxu0 0
      %288 = vmatpush.bf16.xpose.msra.mxu0 %v279
      %289 = vmatmul.bf16.gmra.mxu0 %v276
      %v290 = vpop.f32.mrf.mxu0
      %v291 = vadd.f32 0.0, %v290
      %v292 = vpop.f32.mrf.mxu0
      %293 = vdwg.mxu0
      %v295 = vsel %vm236, %v227, 0
      %v298 = vsel %vm236, %v231, 0
      %300 = vmatpush.bf16.xpose.msra.mxu0 0
      %301 = vmatpush.bf16.xpose.msra.mxu0 0
      %302 = vmatpush.bf16.xpose.msra.mxu0 0
      %303 = vmatpush.bf16.xpose.msra.mxu0 0
      %304 = vmatpush.bf16.xpose.msra.mxu0 0
      %305 = vmatpush.bf16.xpose.msra.mxu0 0
      %306 = vmatpush.bf16.xpose.msra.mxu0 0
      %307 = vmatpush.bf16.xpose.msra.mxu0 %v298
      %308 = vmatmul.bf16.gmra.mxu0 %v295
      %v309 = vpop.f32.mrf.mxu0
      %v310 = vadd.f32 0.0, %v309
      %v311 = vpop.f32.mrf.mxu0
      %312 = vdwg.mxu0
      %v313 = vsel %vm236, %v253, -inf
      %314 = vmax.xlane.f32.xlu0 %v313
      %v315 = vpop.xlane.xlu0 %314
      %v316 = vsel %vm236, %v272, -inf
      %317 = vmax.xlane.f32.xlu0 %v316
      %v318 = vpop.xlane.xlu0 %317
      %v319 = vsel %vm236, %v291, -inf
      %320 = vmax.xlane.f32.xlu0 %v319
      %v321 = vpop.xlane.xlu0 %320
      %v322 = vsel %vm236, %v310, -inf
      %323 = vmax.xlane.f32.xlu0 %v322
      %v324 = vpop.xlane.xlu0 %323
      %v325 = vsub.f32 %v253, %v315
      %v326 = vsub.f32 %v272, %v318
      %v327 = vsub.f32 %v291, %v321
      %v328 = vsub.f32 %v310, %v324
      %v329 = vmul.f32 %v325, 1.442695
      %v330 = vpow.pop %v329
      %v331 = vmul.f32 %v326, 1.442695
      %v332 = vpow.pop %v331
      %v333 = vmul.f32 %v327, 1.442695
      %v334 = vpow.pop %v333
      %v335 = vmul.f32 %v328, 1.442695
      %v336 = vpow.pop %v335
      %v337 = vsel %vm236, %v330, 0.0
      %338 = vadd.xlane.f32.xlu0 %v337
      %v339 = vpop.xlane.xlu0 %338
      %v340 = vsel %vm236, %v332, 0.0
      %341 = vadd.xlane.f32.xlu0 %v340
      %v342 = vpop.xlane.xlu0 %341
      %v343 = vsel %vm236, %v334, 0.0
      %344 = vadd.xlane.f32.xlu0 %v343
      %v345 = vpop.xlane.xlu0 %344
      %v346 = vsel %vm236, %v336, 0.0
      %347 = vadd.xlane.f32.xlu0 %v346
      %v348 = vpop.xlane.xlu0 %347
      %v349 = vpack.c.bf16 %v330, %v330
      %v350 = vpack.c.bf16 %v332, %v332
      %v351 = vpack.c.bf16 %v334, %v334
      %v352 = vpack.c.bf16 %v336, %v336
      %v354 = vsel %vm236, %v349, 0
      %vm356 = vcmask 1043456
      %v358 = vsel %vm356, %v232, 0
      %360 = vmatpush.bf16.msra.mxu0 0
      %361 = vmatpush.bf16.msra.mxu0 0
      %362 = vmatpush.bf16.msra.mxu0 0
      %363 = vmatpush.bf16.msra.mxu0 0
      %364 = vmatpush.bf16.msra.mxu0 0
      %365 = vmatpush.bf16.msra.mxu0 0
      %366 = vmatpush.bf16.msra.mxu0 0
      %367 = vmatpush.bf16.msra.mxu0 %v358
      %368 = vmatmul.bf16.gmra.mxu0 %v354
      %v369 = vpop.f32.mrf.mxu0
      %v370 = vadd.f32 0.0, %v369
      %v371 = vpop.f32.mrf.mxu0
      %372 = vdwg.mxu0
      %v374 = vsel %vm236, %v350, 0
      %v377 = vsel %vm356, %v233, 0
      %379 = vmatpush.bf16.msra.mxu0 0
      %380 = vmatpush.bf16.msra.mxu0 0
      %381 = vmatpush.bf16.msra.mxu0 0
      %382 = vmatpush.bf16.msra.mxu0 0
      %383 = vmatpush.bf16.msra.mxu0 0
      %384 = vmatpush.bf16.msra.mxu0 0
      %385 = vmatpush.bf16.msra.mxu0 0
      %386 = vmatpush.bf16.msra.mxu0 %v377
      %387 = vmatmul.bf16.gmra.mxu0 %v374
      %v388 = vpop.f32.mrf.mxu0
      %v389 = vadd.f32 0.0, %v388
      %v390 = vpop.f32.mrf.mxu0
      %391 = vdwg.mxu0
      %v393 = vsel %vm236, %v351, 0
      %v396 = vsel %vm356, %v234, 0
      %398 = vmatpush.bf16.msra.mxu0 0
      %399 = vmatpush.bf16.msra.mxu0 0
      %400 = vmatpush.bf16.msra.mxu0 0
      %401 = vmatpush.bf16.msra.mxu0 0
      %402 = vmatpush.bf16.msra.mxu0 0
      %403 = vmatpush.bf16.msra.mxu0 0
      %404 = vmatpush.bf16.msra.mxu0 0
      %405 = vmatpush.bf16.msra.mxu0 %v396
      %406 = vmatmul.bf16.gmra.mxu0 %v393
      %v407 = vpop.f32.mrf.mxu0
      %v408 = vadd.f32 0.0, %v407
      %v409 = vpop.f32.mrf.mxu0
      %410 = vdwg.mxu0
      %v412 = vsel %vm236, %v352, 0
      %v415 = vsel %vm356, %v235, 0
      %417 = vmatpush.bf16.msra.mxu0 0
      %418 = vmatpush.bf16.msra.mxu0 0
      %419 = vmatpush.bf16.msra.mxu0 0
      %420 = vmatpush.bf16.msra.mxu0 0
      %421 = vmatpush.bf16.msra.mxu0 0
      %422 = vmatpush.bf16.msra.mxu0 0
      %423 = vmatpush.bf16.msra.mxu0 0
      %424 = vmatpush.bf16.msra.mxu0 %v415
      %425 = vmatmul.bf16.gmra.mxu0 %v412
      %v426 = vpop.f32.mrf.mxu0
      %v427 = vadd.f32 0.0, %v426
      %v428 = vpop.f32.mrf.mxu0
      %429 = vdwg.mxu0
      %v430 = vrcp.pop %v339
      %v431 = vrcp.pop %v342
      %v432 = vrcp.pop %v345
      %v433 = vrcp.pop %v348
      %v434 = vmul.f32 %v370, %v430
      %v435 = vmul.f32 %v389, %v431
      %v436 = vmul.f32 %v408, %v432
      %v437 = vmul.f32 %v427, %v433
      %v438 = vpack.c.bf16 %v434, %v434
      %v439 = vpack.c.bf16 %v435, %v435
      %v440 = vpack.c.bf16 %v436, %v436
      %v441 = vpack.c.bf16 %v437, %v437
      %vm442 = vcmask 60416
      %443 = vst.msk [vmem:[%s210] sm:$0xf] %vm442, %v438
      %444 = vst.msk [vmem:[%s210 + $0x4] sm:$0xf] %vm442, %v439
      %445 = vst.msk [vmem:[%s210 + $0x8] sm:$0xf] %vm442, %v440
      %446 = vst.msk [vmem:[%s210 + $0xc] sm:$0xf] %vm442, %v441
      %p447 = scmp.lt.s32.totalorder %s14, 1
      %s448 = scalar_select %p447, %s14, 1
      %s449 = smul.addr %s448, 4
      %s450 = smul.addr %s449, 4
      %s451 = scalar_lea.vmem %s3, %s450
      // Predicated region
      $region33: #{detr_forward.70} parent=31 // pred_check
        %p452 = pneg %p110
      $region34: #{detr_forward.70} parent=31 // pred_check_branch
        %454 = sbr.rel (%p452) target = $region36
      $region35: #{detr_forward.70} parent=31 // pred_region
        _
      $region36: #{detr_forward.70} parent=31 // pred_fallthru
        _
    $region32: #{detr_forward.70} parent=5 // pred_fallthru
      _
    %p455 = scmp.le.s32.totalorder 2, %s9
    // Predicated region
    $region37: #{detr_forward.70} parent=5 // pred_check
      %p456 = pneg %p455
    $region38: #{detr_forward.70} parent=5 // pred_check_branch
      %458 = sbr.rel (%p456) target = $region40
    $region39: #{detr_forward.70} parent=5 // pred_region
      %s459 = ssub.s32 %s9, 2
      // Predicated region
      $region41: #{detr_forward.70} parent=39 // pred_check
        %p460 = pneg %p116
      $region42: #{detr_forward.70} parent=39 // pred_check_branch
        %462 = sbr.rel (%p460) target = $region44
      $region43: #{detr_forward.70} parent=39 // pred_region
        %p463 = scmp.lt.s32.totalorder %s15, 1
        %s464 = scalar_select %p463, %s15, 1
        %s465 = smul.addr %s464, 4
        %s466 = smul.addr %s465, 4
        %s467 = scalar_lea.vmem %s3, %s466
      $region44: #{detr_forward.70} parent=39 // pred_fallthru
        _
    $region40: #{detr_forward.70} parent=5 // pred_fallthru
      _
  $region6: #{detr_forward.70} parent=0 // loop_footer
    %s13 = sadd.s32 1, %s9
  $region7: #{detr_forward.70} parent=0 // loop_footer_branch
    %8 = sbr.rel target = $region3
  $region8: #{detr_forward.70} parent=0 // loop_exit
    _

// kernel: detr_forward.76
$region0: #{detr_forward.76}
  #allocation0 [shape = 'u32[]', space=smem, size = 0x4, offset = 0x4, fixed_abs, tag = 'smem constant byte address 0x4 - core index']
  #allocation1 [shape = 'u32[72,128]{1,0:T(1,128)}', space=vmem, size = 0x9000, scoped, tag = 'internal scratch']
  %s0 = inlined_call_operand.vmem [shape: bf16[2,4,8,8], index: 0, kind: input, shape index: {}]
  %s1 = inlined_call_operand.vmem [shape: bf16[2,4,64,8], index: 1, kind: input, shape index: {}]
  %s2 = inlined_call_operand.vmem [shape: bf16[2,4,64,8], index: 2, kind: input, shape index: {}]
  %s3 = inlined_call_operand.vmem [shape: bf16[2,4,8,8], index: 3, kind: output, shape index: {}]
  %s4 = sld [smem:[#allocation0]]
  $region45: #{detr_forward.76} parent=0
    _
  %s6 = ssub.s32 1, %s4
  %s7 = scalar_select 0, %s6, %s4
  loop: start=0, step=1, limit=4
  $region2: #{detr_forward.76} parent=0 // loop_pre_header
    _
  $region3: #{detr_forward.76} parent=0 // loop_header
    %s9 = sphi 0, %s13
    %p10 = scmp.ge.s32.totalorder %s9, 4
    %s19 = sphi 0, %s21
    %s22 = sphi 0, %s19
    %s23 = sphi 0, %s22
    %s39 = sphi 0, %s23
    %s45 = sphi 0, %s47
    %s48 = sphi 0, %s45
    %s49 = sphi 0, %s48
    %s65 = sphi 0, %s49
    %s71 = sphi 0, %s73
    %s74 = sphi 0, %s71
    %s75 = sphi 0, %s74
    %s91 = sphi 0, %s75
    %s97 = sphi 0, %s99
    %s100 = sphi 0, %s97
    %s101 = sphi 0, %s100
    %s117 = sphi 0, %s101
  $region4: #{detr_forward.76} parent=0 // loop_header_branch
    %12 = sbr.rel (%p10) target = $region8
  $region5: #{detr_forward.76} parent=0 // loop_body
    %s14 = ssub.s32 %s9, 1
    %s15 = ssub.s32 %s9, 2
    %s16 = sadd.s32 %s9, 1
    %s17 = ssub.s32 %s9, %s16
    %p18 = scmp.eq.s32.totalorder %s17, 0
    %s20 = sadd.s32 %s19, 1
    %s21 = scalar_select %p18, %s19, %s20
    %p24 = pneg %p18
    %p25 = scmp.eq.s32.totalorder %s9, 1
    %p26 = por %p24, %p25
    %p27 = scmp.ne.s32.totalorder %s19, %s22
    %p28 = scmp.eq.s32.totalorder %s9, 0
    %p29 = por %p27, %p28
    %p30 = scmp.ne.s32.totalorder %s19, %s22
    %p31 = scmp.eq.s32.totalorder %s14, 1
    %p32 = por %p30, %p31
    %p33 = scmp.ne.s32.totalorder %s22, %s23
    %p34 = scmp.eq.s32.totalorder %s14, 0
    %p35 = por %p33, %p34
    %p36 = scmp.ne.s32.totalorder %s22, %s23
    %p37 = scmp.eq.s32.totalorder %s15, 1
    %p38 = por %p36, %p37
    %p40 = scmp.ne.s32.totalorder %s23, %s39
    %p41 = scmp.eq.s32.totalorder %s15, 0
    %p42 = por %p40, %p41
    %s43 = ssub.s32 %s9, %s16
    %p44 = scmp.eq.s32.totalorder %s43, 0
    %s46 = sadd.s32 %s45, 1
    %s47 = scalar_select %p44, %s45, %s46
    %p50 = pneg %p44
    %p51 = scmp.eq.s32.totalorder %s9, 1
    %p52 = por %p50, %p51
    %p53 = scmp.ne.s32.totalorder %s45, %s48
    %p54 = scmp.eq.s32.totalorder %s9, 0
    %p55 = por %p53, %p54
    %p56 = scmp.ne.s32.totalorder %s45, %s48
    %p57 = scmp.eq.s32.totalorder %s14, 1
    %p58 = por %p56, %p57
    %p59 = scmp.ne.s32.totalorder %s48, %s49
    %p60 = scmp.eq.s32.totalorder %s14, 0
    %p61 = por %p59, %p60
    %p62 = scmp.ne.s32.totalorder %s48, %s49
    %p63 = scmp.eq.s32.totalorder %s15, 1
    %p64 = por %p62, %p63
    %p66 = scmp.ne.s32.totalorder %s49, %s65
    %p67 = scmp.eq.s32.totalorder %s15, 0
    %p68 = por %p66, %p67
    %s69 = ssub.s32 %s9, %s16
    %p70 = scmp.eq.s32.totalorder %s69, 0
    %s72 = sadd.s32 %s71, 1
    %s73 = scalar_select %p70, %s71, %s72
    %p76 = pneg %p70
    %p77 = scmp.eq.s32.totalorder %s9, 1
    %p78 = por %p76, %p77
    %p79 = scmp.ne.s32.totalorder %s71, %s74
    %p80 = scmp.eq.s32.totalorder %s9, 0
    %p81 = por %p79, %p80
    %p82 = scmp.ne.s32.totalorder %s71, %s74
    %p83 = scmp.eq.s32.totalorder %s14, 1
    %p84 = por %p82, %p83
    %p85 = scmp.ne.s32.totalorder %s74, %s75
    %p86 = scmp.eq.s32.totalorder %s14, 0
    %p87 = por %p85, %p86
    %p88 = scmp.ne.s32.totalorder %s74, %s75
    %p89 = scmp.eq.s32.totalorder %s15, 1
    %p90 = por %p88, %p89
    %p92 = scmp.ne.s32.totalorder %s75, %s91
    %p93 = scmp.eq.s32.totalorder %s15, 0
    %p94 = por %p92, %p93
    %s95 = ssub.s32 %s9, %s16
    %p96 = scmp.eq.s32.totalorder %s95, 0
    %s98 = sadd.s32 %s97, 1
    %s99 = scalar_select %p96, %s97, %s98
    %p102 = pneg %p96
    %p103 = scmp.eq.s32.totalorder %s9, 1
    %p104 = por %p102, %p103
    %p105 = scmp.ne.s32.totalorder %s97, %s100
    %p106 = scmp.eq.s32.totalorder %s9, 0
    %p107 = por %p105, %p106
    %p108 = scmp.ne.s32.totalorder %s97, %s100
    %p109 = scmp.eq.s32.totalorder %s14, 1
    %p110 = por %p108, %p109
    %p111 = scmp.ne.s32.totalorder %s100, %s101
    %p112 = scmp.eq.s32.totalorder %s14, 0
    %p113 = por %p111, %p112
    %p114 = scmp.ne.s32.totalorder %s100, %s101
    %p115 = scmp.eq.s32.totalorder %s15, 1
    %p116 = por %p114, %p115
    %p118 = scmp.ne.s32.totalorder %s101, %s117
    %p119 = scmp.eq.s32.totalorder %s15, 0
    %p120 = por %p118, %p119
    %p121 = scmp.le.s32.totalorder 1, %s9
    %p122 = scmp.lt.s32.totalorder %s9, 3
    %p123 = pnand %p121, %p122
    %p124 = pneg %p123
    // Predicated region
    $region9: #{detr_forward.76} parent=5 // pred_check
      _
    $region10: #{detr_forward.76} parent=5 // pred_check_branch
      %126 = sbr.rel (%p123) target = $region12
    $region11: #{detr_forward.76} parent=5 // pred_region
      %s127 = ssub.s32 %s9, 1
    $region12: #{detr_forward.76} parent=5 // pred_fallthru
      _
    %p128 = scmp.lt.s32.totalorder %s9, 2
    // Predicated region
    $region13: #{detr_forward.76} parent=5 // pred_check
      %p129 = pneg %p128
    $region14: #{detr_forward.76} parent=5 // pred_check_branch
      %131 = sbr.rel (%p129) target = $region16
    $region15: #{detr_forward.76} parent=5 // pred_region
      // Predicated region
      $region17: #{detr_forward.76} parent=15 // pred_check
        %p132 = pneg %p29
      $region18: #{detr_forward.76} parent=15 // pred_check_branch
        %134 = sbr.rel (%p132) target = $region20
      $region19: #{detr_forward.76} parent=15 // pred_region
        %p135 = scmp.lt.s32.totalorder %s9, 1
        %s136 = scalar_select %p135, %s9, 1
        %s137 = smul.addr %s136, 4
        %s138 = smul.addr %s137, 4
        %s139 = scalar_lea.vmem %s0, %s138
      $region20: #{detr_forward.76} parent=15 // pred_fallthru
        _
      // Predicated region
      $region21: #{detr_forward.76} parent=15 // pred_check
        %p140 = pneg %p55
      $region22: #{detr_forward.76} parent=15 // pred_check_branch
        %142 = sbr.rel (%p140) target = $region24
      $region23: #{detr_forward.76} parent=15 // pred_region
        %p143 = scmp.lt.s32.totalorder %s9, 1
        %s144 = scalar_select %p143, %s9, 1
        %s145 = smul.addr %s144, 32
        %s146 = smul.addr %s145, 4
        %s147 = scalar_lea.vmem %s1, %s146
      $region24: #{detr_forward.76} parent=15 // pred_fallthru
        _
      // Predicated region
      $region25: #{detr_forward.76} parent=15 // pred_check
        %p148 = pneg %p81
      $region26: #{detr_forward.76} parent=15 // pred_check_branch
        %150 = sbr.rel (%p148) target = $region28
      $region27: #{detr_forward.76} parent=15 // pred_region
        %p151 = scmp.lt.s32.totalorder %s9, 1
        %s152 = scalar_select %p151, %s9, 1
        %s153 = smul.addr %s152, 32
        %s154 = smul.addr %s153, 4
        %s155 = scalar_lea.vmem %s2, %s154
      $region28: #{detr_forward.76} parent=15 // pred_fallthru
        _
    $region16: #{detr_forward.76} parent=5 // pred_fallthru
      _
    %p156 = scmp.le.s32.totalorder 1, %s9
    %p157 = scmp.lt.s32.totalorder %s9, 3
    %p158 = pnand %p156, %p157
    %p159 = pneg %p158
    // Predicated region
    $region29: #{detr_forward.76} parent=5 // pred_check
      _
    $region30: #{detr_forward.76} parent=5 // pred_check_branch
      %161 = sbr.rel (%p158) target = $region32
    $region31: #{detr_forward.76} parent=5 // pred_region
      %s162 = ssub.s32 %s9, 1
      %p163 = scmp.lt.s32.totalorder %s14, 1
      %s164 = scalar_select %p163, %s14, 1
      %s165 = smul.addr %s164, 4
      %s166 = smul.addr %s165, 4
      %s167 = scalar_lea.vmem %s0, %s166
      %p168 = pneg %p35
      %p169 = pneg %p32
      %p170 = scmp.lt.s32.totalorder %s14, 1
      %s171 = scalar_select %p170, %s14, 1
      %s172 = smul.addr %s171, 32
      %s173 = smul.addr %s172, 4
      %s174 = scalar_lea.vmem %s1, %s173
      %p175 = pneg %p61
      %p176 = pneg %p58
      %p177 = scmp.lt.s32.totalorder %s14, 1
      %s178 = scalar_select %p177, %s14, 1
      %s179 = smul.addr %s178, 32
      %s180 = smul.addr %s179, 4
      %s181 = scalar_lea.vmem %s2, %s180
      %p182 = pneg %p87
      %p183 = pneg %p84
      %p184 = pneg %p113
      %p185 = pneg %p110
      %p186 = scmp.lt.s32.totalorder %s14, 1
      %s187 = scalar_select %p186, %s14, 1
      %s188 = smul.addr %s187, 4
      %s189 = smul.addr %s188, 4
      %s190 = scalar_lea.vmem %s3, %s189
      %p191 = scmp.lt.s32.totalorder %s14, 1
      %s192 = scalar_select %p191, %s14, 1
      %s193 = smul.addr %s192, 4
      %s194 = smul.addr %s193, 4
      %s195 = scalar_lea.vmem %s0, %s194
      %p196 = scmp.lt.s32.totalorder %s14, 1
      %s197 = scalar_select %p196, %s14, 1
      %s198 = smul.addr %s197, 32
      %s199 = smul.addr %s198, 4
      %s200 = scalar_lea.vmem %s1, %s199
      %p201 = scmp.lt.s32.totalorder %s14, 1
      %s202 = scalar_select %p201, %s14, 1
      %s203 = smul.addr %s202, 32
      %s204 = smul.addr %s203, 4
      %s205 = scalar_lea.vmem %s2, %s204
      %p206 = scmp.lt.s32.totalorder %s14, 1
      %s207 = scalar_select %p206, %s14, 1
      %s208 = smul.addr %s207, 4
      %s209 = smul.addr %s208, 4
      %s210 = scalar_lea.vmem %s3, %s209
      %v212 = vld [vmem:[%s195] sm:$0xf]
      %v213 = vld [vmem:[%s195 + $0x4] sm:$0xf]
      %v214 = vld [vmem:[%s195 + $0x8] sm:$0xf]
      %v215 = vld [vmem:[%s195 + $0xc] sm:$0xf]
      %v216 = vunpack.c.l.bf16 %v212
      %v217 = vunpack.c.l.bf16 %v213
      %v218 = vunpack.c.l.bf16 %v214
      %v219 = vunpack.c.l.bf16 %v215
      %v220 = vmul.f32 %v216, 0.35351563
      %v221 = vmul.f32 %v217, 0.35351563
      %v222 = vmul.f32 %v218, 0.35351563
      %v223 = vmul.f32 %v219, 0.35351563
      %v224 = vpack.c.bf16 %v220, %v220
      %v225 = vpack.c.bf16 %v221, %v221
      %v226 = vpack.c.bf16 %v222, %v222
      %v227 = vpack.c.bf16 %v223, %v223
      %v228 = vld [vmem:[%s200] sm:$0xf]
      %v229 = vld [vmem:[%s200 + $0x4] sm:$0xf]
      %v230 = vld [vmem:[%s200 + $0x8] sm:$0xf]
      %v231 = vld [vmem:[%s200 + $0xc] sm:$0xf]
      %v232 = vld [vmem:[%s200 + $0x10] sm:$0xf]
      %v233 = vld [vmem:[%s200 + $0x14] sm:$0xf]
      %v234 = vld [vmem:[%s200 + $0x18] sm:$0xf]
      %v235 = vld [vmem:[%s200 + $0x1c] sm:$0xf]
      %v236 = vld [vmem:[%s200 + $0x20] sm:$0xf]
      %v237 = vld [vmem:[%s200 + $0x24] sm:$0xf]
      %v238 = vld [vmem:[%s200 + $0x28] sm:$0xf]
      %v239 = vld [vmem:[%s200 + $0x2c] sm:$0xf]
      %v240 = vld [vmem:[%s200 + $0x30] sm:$0xf]
      %v241 = vld [vmem:[%s200 + $0x34] sm:$0xf]
      %v242 = vld [vmem:[%s200 + $0x38] sm:$0xf]
      %v243 = vld [vmem:[%s200 + $0x3c] sm:$0xf]
      %v244 = vld [vmem:[%s200 + $0x40] sm:$0xf]
      %v245 = vld [vmem:[%s200 + $0x44] sm:$0xf]
      %v246 = vld [vmem:[%s200 + $0x48] sm:$0xf]
      %v247 = vld [vmem:[%s200 + $0x4c] sm:$0xf]
      %v248 = vld [vmem:[%s200 + $0x50] sm:$0xf]
      %v249 = vld [vmem:[%s200 + $0x54] sm:$0xf]
      %v250 = vld [vmem:[%s200 + $0x58] sm:$0xf]
      %v251 = vld [vmem:[%s200 + $0x5c] sm:$0xf]
      %v252 = vld [vmem:[%s200 + $0x60] sm:$0xf]
      %v253 = vld [vmem:[%s200 + $0x64] sm:$0xf]
      %v254 = vld [vmem:[%s200 + $0x68] sm:$0xf]
      %v255 = vld [vmem:[%s200 + $0x6c] sm:$0xf]
      %v256 = vld [vmem:[%s200 + $0x70] sm:$0xf]
      %v257 = vld [vmem:[%s200 + $0x74] sm:$0xf]
      %v258 = vld [vmem:[%s200 + $0x78] sm:$0xf]
      %v259 = vld [vmem:[%s200 + $0x7c] sm:$0xf]
      %v260 = vld [vmem:[%s205] sm:$0xf]
      %v261 = vld [vmem:[%s205 + $0x4] sm:$0xf]
      %v262 = vld [vmem:[%s205 + $0x8] sm:$0xf]
      %v263 = vld [vmem:[%s205 + $0xc] sm:$0xf]
      %v264 = vld [vmem:[%s205 + $0x10] sm:$0xf]
      %v265 = vld [vmem:[%s205 + $0x14] sm:$0xf]
      %v266 = vld [vmem:[%s205 + $0x18] sm:$0xf]
      %v267 = vld [vmem:[%s205 + $0x1c] sm:$0xf]
      %v268 = vld [vmem:[%s205 + $0x20] sm:$0xf]
      %v269 = vld [vmem:[%s205 + $0x24] sm:$0xf]
      %v270 = vld [vmem:[%s205 + $0x28] sm:$0xf]
      %v271 = vld [vmem:[%s205 + $0x2c] sm:$0xf]
      %v272 = vld [vmem:[%s205 + $0x30] sm:$0xf]
      %v273 = vld [vmem:[%s205 + $0x34] sm:$0xf]
      %v274 = vld [vmem:[%s205 + $0x38] sm:$0xf]
      %v275 = vld [vmem:[%s205 + $0x3c] sm:$0xf]
      %v276 = vld [vmem:[%s205 + $0x40] sm:$0xf]
      %v277 = vld [vmem:[%s205 + $0x44] sm:$0xf]
      %v278 = vld [vmem:[%s205 + $0x48] sm:$0xf]
      %v279 = vld [vmem:[%s205 + $0x4c] sm:$0xf]
      %v280 = vld [vmem:[%s205 + $0x50] sm:$0xf]
      %v281 = vld [vmem:[%s205 + $0x54] sm:$0xf]
      %v282 = vld [vmem:[%s205 + $0x58] sm:$0xf]
      %v283 = vld [vmem:[%s205 + $0x5c] sm:$0xf]
      %v284 = vld [vmem:[%s205 + $0x60] sm:$0xf]
      %v285 = vld [vmem:[%s205 + $0x64] sm:$0xf]
      %v286 = vld [vmem:[%s205 + $0x68] sm:$0xf]
      %v287 = vld [vmem:[%s205 + $0x6c] sm:$0xf]
      %v288 = vld [vmem:[%s205 + $0x70] sm:$0xf]
      %v289 = vld [vmem:[%s205 + $0x74] sm:$0xf]
      %v290 = vld [vmem:[%s205 + $0x78] sm:$0xf]
      %v291 = vld [vmem:[%s205 + $0x7c] sm:$0xf]
      %v300 = vunpack.c.l.b16 %v228
      %v301 = vunpack.c.l.b16 %v229
      %v302 = vunpack.c.l.b16 %v230
      %v303 = vunpack.c.l.b16 %v231
      %v304 = vunpack.c.l.b16 %v232
      %v305 = vunpack.c.l.b16 %v233
      %v306 = vunpack.c.l.b16 %v234
      %v307 = vunpack.c.l.b16 %v235
      %v308 = vpack.c.b16 %v301, %v300
      %v309 = vpack.c.b16 %v303, %v302
      %v310 = vpack.c.b16 %v305, %v304
      %v311 = vpack.c.b16 %v307, %v306
      %vm312 = vcmask 64512
      %v314 = vsel %vm312, %v224, 0
      %v317 = vsel %vm312, %v308, 0
      %v320 = vsel %vm312, %v309, 0
      %v323 = vsel %vm312, %v310, 0
      %v326 = vsel %vm312, %v311, 0
      %328 = vmatpush.bf16.xpose.msra.mxu0 0
      %329 = vmatpush.bf16.xpose.msra.mxu0 0
      %330 = vmatpush.bf16.xpose.msra.mxu0 0
      %331 = vmatpush.bf16.xpose.msra.mxu0 0
      %332 = vmatpush.bf16.xpose.msra.mxu0 %v326
      %333 = vmatpush.bf16.xpose.msra.mxu0 %v323
      %334 = vmatpush.bf16.xpose.msra.mxu0 %v320
      %335 = vmatpush.bf16.xpose.msra.mxu0 %v317
      %336 = vmatmul.bf16.gmra.mxu0 %v314
      %v337 = vpop.f32.mrf.mxu0
      %v338 = vadd.f32 0.0, %v337
      %v339 = vpop.f32.mrf.mxu0
      %340 = vdwg.mxu0
      %v349 = vunpack.c.l.b16 %v236
      %v350 = vunpack.c.l.b16 %v237
      %v351 = vunpack.c.l.b16 %v238
      %v352 = vunpack.c.l.b16 %v239
      %v353 = vunpack.c.l.b16 %v240
      %v354 = vunpack.c.l.b16 %v241
      %v355 = vunpack.c.l.b16 %v242
      %v356 = vunpack.c.l.b16 %v243
      %v357 = vpack.c.b16 %v350, %v349
      %v358 = vpack.c.b16 %v352, %v351
      %v359 = vpack.c.b16 %v354, %v353
      %v360 = vpack.c.b16 %v356, %v355
      %v362 = vsel %vm312, %v225, 0
      %v365 = vsel %vm312, %v357, 0
      %v368 = vsel %vm312, %v358, 0
      %v371 = vsel %vm312, %v359, 0
      %v374 = vsel %vm312, %v360, 0
      %376 = vmatpush.bf16.xpose.msra.mxu0 0
      %377 = vmatpush.bf16.xpose.msra.mxu0 0
      %378 = vmatpush.bf16.xpose.msra.mxu0 0
      %379 = vmatpush.bf16.xpose.msra.mxu0 0
      %380 = vmatpush.bf16.xpose.msra.mxu0 %v374
      %381 = vmatpush.bf16.xpose.msra.mxu0 %v371
      %382 = vmatpush.bf16.xpose.msra.mxu0 %v368
      %383 = vmatpush.bf16.xpose.msra.mxu0 %v365
      %384 = vmatmul.bf16.gmra.mxu0 %v362
      %v385 = vpop.f32.mrf.mxu0
      %v386 = vadd.f32 0.0, %v385
      %v387 = vpop.f32.mrf.mxu0
      %388 = vdwg.mxu0
      %v397 = vunpack.c.l.b16 %v244
      %v398 = vunpack.c.l.b16 %v245
      %v399 = vunpack.c.l.b16 %v246
      %v400 = vunpack.c.l.b16 %v247
      %v401 = vunpack.c.l.b16 %v248
      %v402 = vunpack.c.l.b16 %v249
      %v403 = vunpack.c.l.b16 %v250
      %v404 = vunpack.c.l.b16 %v251
      %v405 = vpack.c.b16 %v398, %v397
      %v406 = vpack.c.b16 %v400, %v399
      %v407 = vpack.c.b16 %v402, %v401
      %v408 = vpack.c.b16 %v404, %v403
      %v410 = vsel %vm312, %v226, 0
      %v413 = vsel %vm312, %v405, 0
      %v416 = vsel %vm312, %v406, 0
      %v419 = vsel %vm312, %v407, 0
      %v422 = vsel %vm312, %v408, 0
      %424 = vmatpush.bf16.xpose.msra.mxu0 0
      %425 = vmatpush.bf16.xpose.msra.mxu0 0
      %426 = vmatpush.bf16.xpose.msra.mxu0 0
      %427 = vmatpush.bf16.xpose.msra.mxu0 0
      %428 = vmatpush.bf16.xpose.msra.mxu0 %v422
      %429 = vmatpush.bf16.xpose.msra.mxu0 %v419
      %430 = vmatpush.bf16.xpose.msra.mxu0 %v416
      %431 = vmatpush.bf16.xpose.msra.mxu0 %v413
      %432 = vmatmul.bf16.gmra.mxu0 %v410
      %v433 = vpop.f32.mrf.mxu0
      %v434 = vadd.f32 0.0, %v433
      %v435 = vpop.f32.mrf.mxu0
      %436 = vdwg.mxu0
      %v445 = vunpack.c.l.b16 %v252
      %v446 = vunpack.c.l.b16 %v253
      %v447 = vunpack.c.l.b16 %v254
      %v448 = vunpack.c.l.b16 %v255
      %v449 = vunpack.c.l.b16 %v256
      %v450 = vunpack.c.l.b16 %v257
      %v451 = vunpack.c.l.b16 %v258
      %v452 = vunpack.c.l.b16 %v259
      %v453 = vpack.c.b16 %v446, %v445
      %v454 = vpack.c.b16 %v448, %v447
      %v455 = vpack.c.b16 %v450, %v449
      %v456 = vpack.c.b16 %v452, %v451
      %v458 = vsel %vm312, %v227, 0
      %v461 = vsel %vm312, %v453, 0
      %v464 = vsel %vm312, %v454, 0
      %v467 = vsel %vm312, %v455, 0
      %v470 = vsel %vm312, %v456, 0
      %472 = vmatpush.bf16.xpose.msra.mxu0 0
      %473 = vmatpush.bf16.xpose.msra.mxu0 0
      %474 = vmatpush.bf16.xpose.msra.mxu0 0
      %475 = vmatpush.bf16.xpose.msra.mxu0 0
      %476 = vmatpush.bf16.xpose.msra.mxu0 %v470
      %477 = vmatpush.bf16.xpose.msra.mxu0 %v467
      %478 = vmatpush.bf16.xpose.msra.mxu0 %v464
      %479 = vmatpush.bf16.xpose.msra.mxu0 %v461
      %480 = vmatmul.bf16.gmra.mxu0 %v458
      %v481 = vpop.f32.mrf.mxu0
      %v482 = vadd.f32 0.0, %v481
      %v483 = vpop.f32.mrf.mxu0
      %484 = vdwg.mxu0
      %vm485 = vcmask 523264
      %v486 = vsel %vm485, %v338, -inf
      %487 = vmax.xlane.f32.xlu0 %v486
      %v488 = vpop.xlane.xlu0 %487
      %v489 = vsel %vm485, %v386, -inf
      %490 = vmax.xlane.f32.xlu0 %v489
      %v491 = vpop.xlane.xlu0 %490
      %v492 = vsel %vm485, %v434, -inf
      %493 = vmax.xlane.f32.xlu0 %v492
      %v494 = vpop.xlane.xlu0 %493
      %v495 = vsel %vm485, %v482, -inf
      %496 = vmax.xlane.f32.xlu0 %v495
      %v497 = vpop.xlane.xlu0 %496
      %v498 = vsub.f32 %v338, %v488
      %v499 = vsub.f32 %v386, %v491
      %v500 = vsub.f32 %v434, %v494
      %v501 = vsub.f32 %v482, %v497
      %v502 = vmul.f32 %v498, 1.442695
      %v503 = vpow.pop %v502
      %v504 = vmul.f32 %v499, 1.442695
      %v505 = vpow.pop %v504
      %v506 = vmul.f32 %v500, 1.442695
      %v507 = vpow.pop %v506
      %v508 = vmul.f32 %v501, 1.442695
      %v509 = vpow.pop %v508
      %v510 = vsel %vm485, %v503, 0.0
      %511 = vadd.xlane.f32.xlu0 %v510
      %v512 = vpop.xlane.xlu0 %511
      %v513 = vsel %vm485, %v505, 0.0
      %514 = vadd.xlane.f32.xlu0 %v513
      %v515 = vpop.xlane.xlu0 %514
      %v516 = vsel %vm485, %v507, 0.0
      %517 = vadd.xlane.f32.xlu0 %v516
      %v518 = vpop.xlane.xlu0 %517
      %v519 = vsel %vm485, %v509, 0.0
      %520 = vadd.xlane.f32.xlu0 %v519
      %v521 = vpop.xlane.xlu0 %520
      %v522 = vpack.c.bf16 %v503, %v503
      %v523 = vpack.c.bf16 %v505, %v505
      %v524 = vpack.c.bf16 %v507, %v507
      %v525 = vpack.c.bf16 %v509, %v509
      %v534 = vunpack.c.l.b16 %v260
      %v535 = vunpack.c.l.b16 %v261
      %v536 = vunpack.c.l.b16 %v262
      %v537 = vunpack.c.l.b16 %v263
      %v538 = vunpack.c.l.b16 %v264
      %v539 = vunpack.c.l.b16 %v265
      %v540 = vunpack.c.l.b16 %v266
      %v541 = vunpack.c.l.b16 %v267
      %v542 = vpack.c.b16 %v535, %v534
      %v543 = vpack.c.b16 %v537, %v536
      %v544 = vpack.c.b16 %v539, %v538
      %v545 = vpack.c.b16 %v541, %v540
      %v551 = vsel %vm485, %v522, 0
      %553 = vmatpush.bf16.msra.mxu0 0
      %554 = vmatpush.bf16.msra.mxu0 0
      %555 = vmatpush.bf16.msra.mxu0 0
      %556 = vmatpush.bf16.msra.mxu0 0
      %557 = vmatpush.bf16.msra.mxu0 %v545
      %558 = vmatpush.bf16.msra.mxu0 %v544
      %559 = vmatpush.bf16.msra.mxu0 %v543
      %560 = vmatpush.bf16.msra.mxu0 %v542
      %561 = vmatmul.bf16.gmra.mxu0 %v551
      %v562 = vpop.f32.mrf.mxu0
      %v563 = vadd.f32 0.0, %v562
      %v564 = vpop.f32.mrf.mxu0
      %565 = vdwg.mxu0
      %v574 = vunpack.c.l.b16 %v268
      %v575 = vunpack.c.l.b16 %v269
      %v576 = vunpack.c.l.b16 %v270
      %v577 = vunpack.c.l.b16 %v271
      %v578 = vunpack.c.l.b16 %v272
      %v579 = vunpack.c.l.b16 %v273
      %v580 = vunpack.c.l.b16 %v274
      %v581 = vunpack.c.l.b16 %v275
      %v582 = vpack.c.b16 %v575, %v574
      %v583 = vpack.c.b16 %v577, %v576
      %v584 = vpack.c.b16 %v579, %v578
      %v585 = vpack.c.b16 %v581, %v580
      %v591 = vsel %vm485, %v523, 0
      %593 = vmatpush.bf16.msra.mxu0 0
      %594 = vmatpush.bf16.msra.mxu0 0
      %595 = vmatpush.bf16.msra.mxu0 0
      %596 = vmatpush.bf16.msra.mxu0 0
      %597 = vmatpush.bf16.msra.mxu0 %v585
      %598 = vmatpush.bf16.msra.mxu0 %v584
      %599 = vmatpush.bf16.msra.mxu0 %v583
      %600 = vmatpush.bf16.msra.mxu0 %v582
      %601 = vmatmul.bf16.gmra.mxu0 %v591
      %v602 = vpop.f32.mrf.mxu0
      %v603 = vadd.f32 0.0, %v602
      %v604 = vpop.f32.mrf.mxu0
      %605 = vdwg.mxu0
      %v614 = vunpack.c.l.b16 %v276
      %v615 = vunpack.c.l.b16 %v277
      %v616 = vunpack.c.l.b16 %v278
      %v617 = vunpack.c.l.b16 %v279
      %v618 = vunpack.c.l.b16 %v280
      %v619 = vunpack.c.l.b16 %v281
      %v620 = vunpack.c.l.b16 %v282
      %v621 = vunpack.c.l.b16 %v283
      %v622 = vpack.c.b16 %v615, %v614
      %v623 = vpack.c.b16 %v617, %v616
      %v624 = vpack.c.b16 %v619, %v618
      %v625 = vpack.c.b16 %v621, %v620
      %v631 = vsel %vm485, %v524, 0
      %633 = vmatpush.bf16.msra.mxu0 0
      %634 = vmatpush.bf16.msra.mxu0 0
      %635 = vmatpush.bf16.msra.mxu0 0
      %636 = vmatpush.bf16.msra.mxu0 0
      %637 = vmatpush.bf16.msra.mxu0 %v625
      %638 = vmatpush.bf16.msra.mxu0 %v624
      %639 = vmatpush.bf16.msra.mxu0 %v623
      %640 = vmatpush.bf16.msra.mxu0 %v622
      %641 = vmatmul.bf16.gmra.mxu0 %v631
      %v642 = vpop.f32.mrf.mxu0
      %v643 = vadd.f32 0.0, %v642
      %v644 = vpop.f32.mrf.mxu0
      %645 = vdwg.mxu0
      %v654 = vunpack.c.l.b16 %v284
      %v655 = vunpack.c.l.b16 %v285
      %v656 = vunpack.c.l.b16 %v286
      %v657 = vunpack.c.l.b16 %v287
      %v658 = vunpack.c.l.b16 %v288
      %v659 = vunpack.c.l.b16 %v289
      %v660 = vunpack.c.l.b16 %v290
      %v661 = vunpack.c.l.b16 %v291
      %v662 = vpack.c.b16 %v655, %v654
      %v663 = vpack.c.b16 %v657, %v656
      %v664 = vpack.c.b16 %v659, %v658
      %v665 = vpack.c.b16 %v661, %v660
      %v671 = vsel %vm485, %v525, 0
      %673 = vmatpush.bf16.msra.mxu0 0
      %674 = vmatpush.bf16.msra.mxu0 0
      %675 = vmatpush.bf16.msra.mxu0 0
      %676 = vmatpush.bf16.msra.mxu0 0
      %677 = vmatpush.bf16.msra.mxu0 %v665
      %678 = vmatpush.bf16.msra.mxu0 %v664
      %679 = vmatpush.bf16.msra.mxu0 %v663
      %680 = vmatpush.bf16.msra.mxu0 %v662
      %681 = vmatmul.bf16.gmra.mxu0 %v671
      %v682 = vpop.f32.mrf.mxu0
      %v683 = vadd.f32 0.0, %v682
      %v684 = vpop.f32.mrf.mxu0
      %685 = vdwg.mxu0
      %v686 = vrcp.pop %v512
      %v687 = vrcp.pop %v515
      %v688 = vrcp.pop %v518
      %v689 = vrcp.pop %v521
      %v690 = vmul.f32 %v563, %v686
      %v691 = vmul.f32 %v603, %v687
      %v692 = vmul.f32 %v643, %v688
      %v693 = vmul.f32 %v683, %v689
      %v694 = vpack.c.bf16 %v690, %v690
      %v695 = vpack.c.bf16 %v691, %v691
      %v696 = vpack.c.bf16 %v692, %v692
      %v697 = vpack.c.bf16 %v693, %v693
      %vm698 = vcmask 60416
      %699 = vst.msk [vmem:[%s210] sm:$0xf] %vm698, %v694
      %700 = vst.msk [vmem:[%s210 + $0x4] sm:$0xf] %vm698, %v695
      %701 = vst.msk [vmem:[%s210 + $0x8] sm:$0xf] %vm698, %v696
      %702 = vst.msk [vmem:[%s210 + $0xc] sm:$0xf] %vm698, %v697
      %p703 = scmp.lt.s32.totalorder %s14, 1
      %s704 = scalar_select %p703, %s14, 1
      %s705 = smul.addr %s704, 4
      %s706 = smul.addr %s705, 4
      %s707 = scalar_lea.vmem %s3, %s706
      // Predicated region
      $region33: #{detr_forward.76} parent=31 // pred_check
        %p708 = pneg %p110
      $region34: #{detr_forward.76} parent=31 // pred_check_branch
        %710 = sbr.rel (%p708) target = $region36
      $region35: #{detr_forward.76} parent=31 // pred_region
        _
      $region36: #{detr_forward.76} parent=31 // pred_fallthru
        _
    $region32: #{detr_forward.76} parent=5 // pred_fallthru
      _
    %p711 = scmp.le.s32.totalorder 2, %s9
    // Predicated region
    $region37: #{detr_forward.76} parent=5 // pred_check
      %p712 = pneg %p711
    $region38: #{detr_forward.76} parent=5 // pred_check_branch
      %714 = sbr.rel (%p712) target = $region40
    $region39: #{detr_forward.76} parent=5 // pred_region
      %s715 = ssub.s32 %s9, 2
      // Predicated region
      $region41: #{detr_forward.76} parent=39 // pred_check
        %p716 = pneg %p116
      $region42: #{detr_forward.76} parent=39 // pred_check_branch
        %718 = sbr.rel (%p716) target = $region44
      $region43: #{detr_forward.76} parent=39 // pred_region
        %p719 = scmp.lt.s32.totalorder %s15, 1
        %s720 = scalar_select %p719, %s15, 1
        %s721 = smul.addr %s720, 4
        %s722 = smul.addr %s721, 4
        %s723 = scalar_lea.vmem %s3, %s722
      $region44: #{detr_forward.76} parent=39 // pred_fallthru
        _
    $region40: #{detr_forward.76} parent=5 // pred_fallthru
      _
  $region6: #{detr_forward.76} parent=0 // loop_footer
    %s13 = sadd.s32 1, %s9
  $region7: #{detr_forward.76} parent=0 // loop_footer_branch
    %8 = sbr.rel target = $region3
  $region8: #{detr_forward.76} parent=0 // loop_exit
    _

// kernel: detr_forward.97
$region0: #{detr_forward.97}
  #allocation0 [shape = 'u32[]', space=smem, size = 0x4, offset = 0x4, fixed_abs, tag = 'smem constant byte address 0x4 - core index']
  #allocation1 [shape = 'u32[72,128]{1,0:T(1,128)}', space=vmem, size = 0x9000, scoped, tag = 'internal scratch']
  %s0 = inlined_call_operand.vmem [shape: f32[16,32], index: 0, kind: input, shape index: {}]
  %s1 = inlined_call_operand.vmem [shape: f32[1,32], index: 1, kind: input, shape index: {}]
  %s2 = inlined_call_operand.vmem [shape: f32[1,32], index: 2, kind: input, shape index: {}]
  %s3 = inlined_call_operand.vmem [shape: f32[16,32], index: 3, kind: output, shape index: {}]
  %s4 = sld [smem:[#allocation0]]
  $region22: #{detr_forward.97} parent=0
    _
  %s6 = ssub.s32 1, %s4
  %s7 = scalar_select 0, %s6, %s4
  // Predicated region
  $region2: #{detr_forward.97} parent=0 // pred_check
    _
  $region3: #{detr_forward.97} parent=0 // pred_check_branch
    %9 = sbr.rel (0) target = $region5
  $region4: #{detr_forward.97} parent=0 // pred_region
    _
  $region5: #{detr_forward.97} parent=0 // pred_fallthru
    _
  // Predicated region
  $region6: #{detr_forward.97} parent=0 // pred_check
    _
  $region7: #{detr_forward.97} parent=0 // pred_check_branch
    %11 = sbr.rel (0) target = $region9
  $region8: #{detr_forward.97} parent=0 // pred_region
    _
  $region9: #{detr_forward.97} parent=0 // pred_fallthru
    _
  // Predicated region
  $region10: #{detr_forward.97} parent=0 // pred_check
    _
  $region11: #{detr_forward.97} parent=0 // pred_check_branch
    %13 = sbr.rel (0) target = $region13
  $region12: #{detr_forward.97} parent=0 // pred_region
    _
  $region13: #{detr_forward.97} parent=0 // pred_fallthru
    _
  %v14 = vld [vmem:[%s0] sm:$0xff]
  %v15 = vld [vmem:[%s0 + $0x8] sm:$0xff]
  %vm16 = vcmask 261120
  %v17 = vsel %vm16, %v14, 0.0
  %18 = vadd.xlane.f32.xlu0 %v17
  %v19 = vpop.xlane.xlu0 %18
  %v20 = vsel %vm16, %v15, 0.0
  %21 = vadd.xlane.f32.xlu0 %v20
  %v22 = vpop.xlane.xlu0 %21
  %v23 = vrcp.pop 32.0
  %v24 = vmul.f32 32.0, %v23
  %v25 = vsub.f32 1.0, %v24
  %v26 = vmul.f32 %v23, %v25
  %v27 = vadd.f32 %v23, %v26
  %vm28 = vweird.f32 %v23
  %v29 = vsel %vm28, %v23, %v27
  %v30 = vmul.f32 %v19, %v29
  %v31 = vmul.f32 %v22, %v29
  %v32 = vsub.f32 %v14, %v30
  %v33 = vsub.f32 %v15, %v31
  %v34 = vmul.f32 %v32, %v32
  %v35 = vmul.f32 %v33, %v33
  %v36 = vsel %vm16, %v34, 0.0
  %37 = vadd.xlane.f32.xlu0 %v36
  %v38 = vpop.xlane.xlu0 %37
  %v39 = vsel %vm16, %v35, 0.0
  %40 = vadd.xlane.f32.xlu0 %v39
  %v41 = vpop.xlane.xlu0 %40
  %v42 = vmul.f32 %v38, %v29
  %v43 = vmul.f32 %v41, %v29
  %v44 = vadd.f32 %v42, 1e-05
  %v45 = vadd.f32 %v43, 1e-05
  %v46 = vrsqrt.pop %v44
  %v47 = vmul.f32 %v46, %v44
  %v48 = vmul.f32 %v47, %v46
  %v49 = vmul.f32 0.5, %v48
  %v50 = vsub.f32 1.5, %v49
  %v51 = vmul.f32 %v46, %v50
  %vm52 = vweird.f32 %v44
  %vm53 = vweird.f32 %v46
  %vm54 = vmor %vm52, %vm53
  %v55 = vsel %vm54, %v46, %v51
  %v56 = vrsqrt.pop %v45
  %v57 = vmul.f32 %v56, %v45
  %v58 = vmul.f32 %v57, %v56
  %v59 = vmul.f32 0.5, %v58
  %v60 = vsub.f32 1.5, %v59
  %v61 = vmul.f32 %v56, %v60
  %vm62 = vweird.f32 %v45
  %vm63 = vweird.f32 %v56
  %vm64 = vmor %vm62, %vm63
  %v65 = vsel %vm64, %v56, %v61
  %v66 = vmul.f32 %v32, %v55
  %v67 = vmul.f32 %v33, %v65
  %v68 = vld [vmem:[%s1] sm:$0x1]
  %v70 = vperm.slane %v68, 0
  %v72 = vmul.f32 %v66, %v70
  %v73 = vmul.f32 %v67, %v70
  %v74 = vld [vmem:[%s2] sm:$0x1]
  %v76 = vperm.slane %v74, 0
  %v78 = vadd.f32 %v72, %v76
  %v79 = vadd.f32 %v73, %v76
  %80 = vst.msk [vmem:[%s3] sm:$0xff] %vm16, %v78
  %81 = vst.msk [vmem:[%s3 + $0x8] sm:$0xff] %vm16, %v79
  // Predicated region
  $region14: #{detr_forward.97} parent=0 // pred_check
    _
  $region15: #{detr_forward.97} parent=0 // pred_check_branch
    %83 = sbr.rel (0) target = $region17
  $region16: #{detr_forward.97} parent=0 // pred_region
    _
  $region17: #{detr_forward.97} parent=0 // pred_fallthru
    _
  // Predicated region
  $region18: #{detr_forward.97} parent=0 // pred_check
    _
  $region19: #{detr_forward.97} parent=0 // pred_check_branch
    %85 = sbr.rel (0) target = $region21
  $region20: #{detr_forward.97} parent=0 // pred_region
    _
  $region21: #{detr_forward.97} parent=0 // pred_fallthru
    _

// kernel: detr_forward.101
$region0: #{detr_forward.101}
  #allocation0 [shape = 'u32[]', space=smem, size = 0x4, offset = 0x4, fixed_abs, tag = 'smem constant byte address 0x4 - core index']
  #allocation1 [shape = 'u32[72,128]{1,0:T(1,128)}', space=vmem, size = 0x9000, scoped, tag = 'internal scratch']
  #allocation2 [shape = 'f32[128,128]{1,0:T(8,128)}', space=vmem, size = 0x10000, scoped, tag = 'scratch operand']
  %s0 = inlined_call_operand.vmem [shape: bf16[128,128], index: 0, kind: input, shape index: {}]
  %s1 = inlined_call_operand.vmem [shape: bf16[128,128], index: 1, kind: input, shape index: {}]
  %s2 = inlined_call_operand.vmem [shape: f32[1,128], index: 2, kind: input, shape index: {}]
  %s3 = inlined_call_operand.vmem [shape: f32[128,128], index: 3, kind: output, shape index: {}]
  %s4 = sld [smem:[#allocation0]]
  $region30: #{detr_forward.101} parent=0
    _
  %s6 = ssub.s32 1, %s4
  %s7 = scalar_select 0, %s6, %s4
  // Predicated region
  $region2: #{detr_forward.101} parent=0 // pred_check
    _
  $region3: #{detr_forward.101} parent=0 // pred_check_branch
    %9 = sbr.rel (0) target = $region5
  $region4: #{detr_forward.101} parent=0 // pred_region
    _
  $region5: #{detr_forward.101} parent=0 // pred_fallthru
    _
  // Predicated region
  $region6: #{detr_forward.101} parent=0 // pred_check
    _
  $region7: #{detr_forward.101} parent=0 // pred_check_branch
    %11 = sbr.rel (0) target = $region9
  $region8: #{detr_forward.101} parent=0 // pred_region
    _
  $region9: #{detr_forward.101} parent=0 // pred_fallthru
    _
  // Predicated region
  $region10: #{detr_forward.101} parent=0 // pred_check
    _
  $region11: #{detr_forward.101} parent=0 // pred_check_branch
    %13 = sbr.rel (0) target = $region13
  $region12: #{detr_forward.101} parent=0 // pred_region
    _
  $region13: #{detr_forward.101} parent=0 // pred_fallthru
    _
  %p14 = scmp.eq.s32.totalorder 0, 0
  // Predicated region
  $region14: #{detr_forward.101} parent=0 // pred_check
    %p15 = pneg %p14
  $region15: #{detr_forward.101} parent=0 // pred_check_branch
    %17 = sbr.rel (%p15) target = $region17
  $region16: #{detr_forward.101} parent=0 // pred_region
    %18 = vst [vmem:[#allocation2] sm:$0xff] 0.0
    %19 = vst [vmem:[#allocation2 + $0x8] sm:$0xff] 0.0
    %20 = vst [vmem:[#allocation2 + $0x10] sm:$0xff] 0.0
    %21 = vst [vmem:[#allocation2 + $0x18] sm:$0xff] 0.0
    %22 = vst [vmem:[#allocation2 + $0x20] sm:$0xff] 0.0
    %23 = vst [vmem:[#allocation2 + $0x28] sm:$0xff] 0.0
    %24 = vst [vmem:[#allocation2 + $0x30] sm:$0xff] 0.0
    %25 = vst [vmem:[#allocation2 + $0x38] sm:$0xff] 0.0
    %26 = vst [vmem:[#allocation2 + $0x40] sm:$0xff] 0.0
    %27 = vst [vmem:[#allocation2 + $0x48] sm:$0xff] 0.0
    %28 = vst [vmem:[#allocation2 + $0x50] sm:$0xff] 0.0
    %29 = vst [vmem:[#allocation2 + $0x58] sm:$0xff] 0.0
    %30 = vst [vmem:[#allocation2 + $0x60] sm:$0xff] 0.0
    %31 = vst [vmem:[#allocation2 + $0x68] sm:$0xff] 0.0
    %32 = vst [vmem:[#allocation2 + $0x70] sm:$0xff] 0.0
    %33 = vst [vmem:[#allocation2 + $0x78] sm:$0xff] 0.0
  $region17: #{detr_forward.101} parent=0 // pred_fallthru
    _
  %v34 = vld [vmem:[#allocation2] sm:$0xff]
  %v35 = vld [vmem:[#allocation2 + $0x8] sm:$0xff]
  %v36 = vld [vmem:[#allocation2 + $0x10] sm:$0xff]
  %v37 = vld [vmem:[#allocation2 + $0x18] sm:$0xff]
  %v38 = vld [vmem:[#allocation2 + $0x20] sm:$0xff]
  %v39 = vld [vmem:[#allocation2 + $0x28] sm:$0xff]
  %v40 = vld [vmem:[#allocation2 + $0x30] sm:$0xff]
  %v41 = vld [vmem:[#allocation2 + $0x38] sm:$0xff]
  %v42 = vld [vmem:[#allocation2 + $0x40] sm:$0xff]
  %v43 = vld [vmem:[#allocation2 + $0x48] sm:$0xff]
  %v44 = vld [vmem:[#allocation2 + $0x50] sm:$0xff]
  %v45 = vld [vmem:[#allocation2 + $0x58] sm:$0xff]
  %v46 = vld [vmem:[#allocation2 + $0x60] sm:$0xff]
  %v47 = vld [vmem:[#allocation2 + $0x68] sm:$0xff]
  %v48 = vld [vmem:[#allocation2 + $0x70] sm:$0xff]
  %v49 = vld [vmem:[#allocation2 + $0x78] sm:$0xff]
  %v50 = vld [vmem:[%s0] sm:$0xf]
  %v51 = vld [vmem:[%s0 + $0x4] sm:$0xf]
  %v52 = vld [vmem:[%s0 + $0x8] sm:$0xf]
  %v53 = vld [vmem:[%s0 + $0xc] sm:$0xf]
  %v54 = vld [vmem:[%s0 + $0x10] sm:$0xf]
  %v55 = vld [vmem:[%s0 + $0x14] sm:$0xf]
  %v56 = vld [vmem:[%s0 + $0x18] sm:$0xf]
  %v57 = vld [vmem:[%s0 + $0x1c] sm:$0xf]
  %v58 = vld [vmem:[%s0 + $0x20] sm:$0xf]
  %v59 = vld [vmem:[%s0 + $0x24] sm:$0xf]
  %v60 = vld [vmem:[%s0 + $0x28] sm:$0xf]
  %v61 = vld [vmem:[%s0 + $0x2c] sm:$0xf]
  %v62 = vld [vmem:[%s0 + $0x30] sm:$0xf]
  %v63 = vld [vmem:[%s0 + $0x34] sm:$0xf]
  %v64 = vld [vmem:[%s0 + $0x38] sm:$0xf]
  %v65 = vld [vmem:[%s0 + $0x3c] sm:$0xf]
  %v66 = vld [vmem:[%s1] sm:$0xf]
  %v67 = vld [vmem:[%s1 + $0x4] sm:$0xf]
  %v68 = vld [vmem:[%s1 + $0x8] sm:$0xf]
  %v69 = vld [vmem:[%s1 + $0xc] sm:$0xf]
  %v70 = vld [vmem:[%s1 + $0x10] sm:$0xf]
  %v71 = vld [vmem:[%s1 + $0x14] sm:$0xf]
  %v72 = vld [vmem:[%s1 + $0x18] sm:$0xf]
  %v73 = vld [vmem:[%s1 + $0x1c] sm:$0xf]
  %v74 = vld [vmem:[%s1 + $0x20] sm:$0xf]
  %v75 = vld [vmem:[%s1 + $0x24] sm:$0xf]
  %v76 = vld [vmem:[%s1 + $0x28] sm:$0xf]
  %v77 = vld [vmem:[%s1 + $0x2c] sm:$0xf]
  %v78 = vld [vmem:[%s1 + $0x30] sm:$0xf]
  %v79 = vld [vmem:[%s1 + $0x34] sm:$0xf]
  %v80 = vld [vmem:[%s1 + $0x38] sm:$0xf]
  %v81 = vld [vmem:[%s1 + $0x3c] sm:$0xf]
  %v98 = vunpack.c.l.b16 %v50
  %v99 = vunpack.c.l.b16 %v51
  %v100 = vunpack.c.l.b16 %v52
  %v101 = vunpack.c.l.b16 %v53
  %v102 = vunpack.c.l.b16 %v54
  %v103 = vunpack.c.l.b16 %v55
  %v104 = vunpack.c.l.b16 %v56
  %v105 = vunpack.c.l.b16 %v57
  %v106 = vunpack.c.l.b16 %v58
  %v107 = vunpack.c.l.b16 %v59
  %v108 = vunpack.c.l.b16 %v60
  %v109 = vunpack.c.l.b16 %v61
  %v110 = vunpack.c.l.b16 %v62
  %v111 = vunpack.c.l.b16 %v63
  %v112 = vunpack.c.l.b16 %v64
  %v113 = vunpack.c.l.b16 %v65
  %v114 = vpack.c.b16 %v99, %v98
  %v115 = vpack.c.b16 %v101, %v100
  %v116 = vpack.c.b16 %v103, %v102
  %v117 = vpack.c.b16 %v105, %v104
  %v118 = vpack.c.b16 %v107, %v106
  %v119 = vpack.c.b16 %v109, %v108
  %v120 = vpack.c.b16 %v111, %v110
  %v121 = vpack.c.b16 %v113, %v112
  %v146 = vunpack.c.l.b16 %v66
  %v147 = vunpack.c.l.b16 %v67
  %v148 = vunpack.c.l.b16 %v68
  %v149 = vunpack.c.l.b16 %v69
  %v150 = vunpack.c.l.b16 %v70
  %v151 = vunpack.c.l.b16 %v71
  %v152 = vunpack.c.l.b16 %v72
  %v153 = vunpack.c.l.b16 %v73
  %v154 = vunpack.c.l.b16 %v74
  %v155 = vunpack.c.l.b16 %v75
  %v156 = vunpack.c.l.b16 %v76
  %v157 = vunpack.c.l.b16 %v77
  %v158 = vunpack.c.l.b16 %v78
  %v159 = vunpack.c.l.b16 %v79
  %v160 = vunpack.c.l.b16 %v80
  %v161 = vunpack.c.l.b16 %v81
  %v162 = vpack.c.b16 %v147, %v146
  %v163 = vpack.c.b16 %v149, %v148
  %v164 = vpack.c.b16 %v151, %v150
  %v165 = vpack.c.b16 %v153, %v152
  %v166 = vpack.c.b16 %v155, %v154
  %v167 = vpack.c.b16 %v157, %v156
  %v168 = vpack.c.b16 %v159, %v158
  %v169 = vpack.c.b16 %v161, %v160
  %178 = vmatpush.bf16.msra.mxu0 %v169
  %179 = vmatpush.bf16.msra.mxu0 %v168
  %180 = vmatpush.bf16.msra.mxu0 %v167
  %181 = vmatpush.bf16.msra.mxu0 %v166
  %182 = vmatpush.bf16.msra.mxu0 %v165
  %183 = vmatpush.bf16.msra.mxu0 %v164
  %184 = vmatpush.bf16.msra.mxu0 %v163
  %185 = vmatpush.bf16.msra.mxu0 %v162
  %186 = vmatmul.bf16.gmra.mxu0 %v114
  %v187 = vpop.f32.mrf.mxu0
  %v188 = vadd.f32 0.0, %v187
  %v189 = vpop.f32.mrf.mxu0
  %v190 = vadd.f32 0.0, %v189
  %191 = vmatmul.bf16.gmra.mxu0 %v115
  %v192 = vpop.f32.mrf.mxu0
  %v193 = vadd.f32 0.0, %v192
  %v194 = vpop.f32.mrf.mxu0
  %v195 = vadd.f32 0.0, %v194
  %196 = vmatmul.bf16.gmra.mxu0 %v116
  %v197 = vpop.f32.mrf.mxu0
  %v198 = vadd.f32 0.0, %v197
  %v199 = vpop.f32.mrf.mxu0
  %v200 = vadd.f32 0.0, %v199
  %201 = vmatmul.bf16.gmra.mxu0 %v117
  %v202 = vpop.f32.mrf.mxu0
  %v203 = vadd.f32 0.0, %v202
  %v204 = vpop.f32.mrf.mxu0
  %v205 = vadd.f32 0.0, %v204
  %206 = vmatmul.bf16.gmra.mxu0 %v118
  %v207 = vpop.f32.mrf.mxu0
  %v208 = vadd.f32 0.0, %v207
  %v209 = vpop.f32.mrf.mxu0
  %v210 = vadd.f32 0.0, %v209
  %211 = vmatmul.bf16.gmra.mxu0 %v119
  %v212 = vpop.f32.mrf.mxu0
  %v213 = vadd.f32 0.0, %v212
  %v214 = vpop.f32.mrf.mxu0
  %v215 = vadd.f32 0.0, %v214
  %216 = vmatmul.bf16.gmra.mxu0 %v120
  %v217 = vpop.f32.mrf.mxu0
  %v218 = vadd.f32 0.0, %v217
  %v219 = vpop.f32.mrf.mxu0
  %v220 = vadd.f32 0.0, %v219
  %221 = vmatmul.bf16.gmra.mxu0 %v121
  %v222 = vpop.f32.mrf.mxu0
  %v223 = vadd.f32 0.0, %v222
  %v224 = vpop.f32.mrf.mxu0
  %v225 = vadd.f32 0.0, %v224
  %226 = vdwg.mxu0
  %v227 = vadd.f32 %v34, %v188
  %v228 = vadd.f32 %v35, %v190
  %v229 = vadd.f32 %v36, %v193
  %v230 = vadd.f32 %v37, %v195
  %v231 = vadd.f32 %v38, %v198
  %v232 = vadd.f32 %v39, %v200
  %v233 = vadd.f32 %v40, %v203
  %v234 = vadd.f32 %v41, %v205
  %v235 = vadd.f32 %v42, %v208
  %v236 = vadd.f32 %v43, %v210
  %v237 = vadd.f32 %v44, %v213
  %v238 = vadd.f32 %v45, %v215
  %v239 = vadd.f32 %v46, %v218
  %v240 = vadd.f32 %v47, %v220
  %v241 = vadd.f32 %v48, %v223
  %v242 = vadd.f32 %v49, %v225
  %243 = vst [vmem:[#allocation2] sm:$0xff] %v227
  %244 = vst [vmem:[#allocation2 + $0x8] sm:$0xff] %v228
  %245 = vst [vmem:[#allocation2 + $0x10] sm:$0xff] %v229
  %246 = vst [vmem:[#allocation2 + $0x18] sm:$0xff] %v230
  %247 = vst [vmem:[#allocation2 + $0x20] sm:$0xff] %v231
  %248 = vst [vmem:[#allocation2 + $0x28] sm:$0xff] %v232
  %249 = vst [vmem:[#allocation2 + $0x30] sm:$0xff] %v233
  %250 = vst [vmem:[#allocation2 + $0x38] sm:$0xff] %v234
  %251 = vst [vmem:[#allocation2 + $0x40] sm:$0xff] %v235
  %252 = vst [vmem:[#allocation2 + $0x48] sm:$0xff] %v236
  %253 = vst [vmem:[#allocation2 + $0x50] sm:$0xff] %v237
  %254 = vst [vmem:[#allocation2 + $0x58] sm:$0xff] %v238
  %255 = vst [vmem:[#allocation2 + $0x60] sm:$0xff] %v239
  %256 = vst [vmem:[#allocation2 + $0x68] sm:$0xff] %v240
  %257 = vst [vmem:[#allocation2 + $0x70] sm:$0xff] %v241
  %258 = vst [vmem:[#allocation2 + $0x78] sm:$0xff] %v242
  // Predicated region
  $region18: #{detr_forward.101} parent=0 // pred_check
    %p259 = pneg %p14
  $region19: #{detr_forward.101} parent=0 // pred_check_branch
    %261 = sbr.rel (%p259) target = $region21
  $region20: #{detr_forward.101} parent=0 // pred_region
    %v262 = vld [vmem:[#allocation2] sm:$0xff]
    %v263 = vld [vmem:[#allocation2 + $0x8] sm:$0xff]
    %v264 = vld [vmem:[#allocation2 + $0x10] sm:$0xff]
    %v265 = vld [vmem:[#allocation2 + $0x18] sm:$0xff]
    %v266 = vld [vmem:[#allocation2 + $0x20] sm:$0xff]
    %v267 = vld [vmem:[#allocation2 + $0x28] sm:$0xff]
    %v268 = vld [vmem:[#allocation2 + $0x30] sm:$0xff]
    %v269 = vld [vmem:[#allocation2 + $0x38] sm:$0xff]
    %v270 = vld [vmem:[#allocation2 + $0x40] sm:$0xff]
    %v271 = vld [vmem:[#allocation2 + $0x48] sm:$0xff]
    %v272 = vld [vmem:[#allocation2 + $0x50] sm:$0xff]
    %v273 = vld [vmem:[#allocation2 + $0x58] sm:$0xff]
    %v274 = vld [vmem:[#allocation2 + $0x60] sm:$0xff]
    %v275 = vld [vmem:[#allocation2 + $0x68] sm:$0xff]
    %v276 = vld [vmem:[#allocation2 + $0x70] sm:$0xff]
    %v277 = vld [vmem:[#allocation2 + $0x78] sm:$0xff]
    %v278 = vld [vmem:[%s2] sm:$0x1]
    %v280 = vperm.slane %v278, 0
    %v282 = vadd.f32 %v262, %v280
    %v283 = vadd.f32 %v263, %v280
    %v284 = vadd.f32 %v264, %v280
    %v285 = vadd.f32 %v265, %v280
    %v286 = vadd.f32 %v266, %v280
    %v287 = vadd.f32 %v267, %v280
    %v288 = vadd.f32 %v268, %v280
    %v289 = vadd.f32 %v269, %v280
    %v290 = vadd.f32 %v270, %v280
    %v291 = vadd.f32 %v271, %v280
    %v292 = vadd.f32 %v272, %v280
    %v293 = vadd.f32 %v273, %v280
    %v294 = vadd.f32 %v274, %v280
    %v295 = vadd.f32 %v275, %v280
    %v296 = vadd.f32 %v276, %v280
    %v297 = vadd.f32 %v277, %v280
    %v298 = vsub.f32 0.0, %v282
    %v299 = vsub.f32 0.0, %v283
    %v300 = vsub.f32 0.0, %v284
    %v301 = vsub.f32 0.0, %v285
    %v302 = vsub.f32 0.0, %v286
    %v303 = vsub.f32 0.0, %v287
    %v304 = vsub.f32 0.0, %v288
    %v305 = vsub.f32 0.0, %v289
    %v306 = vsub.f32 0.0, %v290
    %v307 = vsub.f32 0.0, %v291
    %v308 = vsub.f32 0.0, %v292
    %v309 = vsub.f32 0.0, %v293
    %v310 = vsub.f32 0.0, %v294
    %v311 = vsub.f32 0.0, %v295
    %v312 = vsub.f32 0.0, %v296
    %v313 = vsub.f32 0.0, %v297
    %v314 = vmul.f32 %v298, 1.442695
    %v315 = vpow.pop %v314
    %v316 = vmul.f32 %v299, 1.442695
    %v317 = vpow.pop %v316
    %v318 = vmul.f32 %v300, 1.442695
    %v319 = vpow.pop %v318
    %v320 = vmul.f32 %v301, 1.442695
    %v321 = vpow.pop %v320
    %v322 = vmul.f32 %v302, 1.442695
    %v323 = vpow.pop %v322
    %v324 = vmul.f32 %v303, 1.442695
    %v325 = vpow.pop %v324
    %v326 = vmul.f32 %v304, 1.442695
    %v327 = vpow.pop %v326
    %v328 = vmul.f32 %v305, 1.442695
    %v329 = vpow.pop %v328
    %v330 = vmul.f32 %v306, 1.442695
    %v331 = vpow.pop %v330
    %v332 = vmul.f32 %v307, 1.442695
    %v333 = vpow.pop %v332
    %v334 = vmul.f32 %v308, 1.442695
    %v335 = vpow.pop %v334
    %v336 = vmul.f32 %v309, 1.442695
    %v337 = vpow.pop %v336
    %v338 = vmul.f32 %v310, 1.442695
    %v339 = vpow.pop %v338
    %v340 = vmul.f32 %v311, 1.442695
    %v341 = vpow.pop %v340
    %v342 = vmul.f32 %v312, 1.442695
    %v343 = vpow.pop %v342
    %v344 = vmul.f32 %v313, 1.442695
    %v345 = vpow.pop %v344
    %v346 = vadd.f32 %v315, 1.0
    %v347 = vadd.f32 %v317, 1.0
    %v348 = vadd.f32 %v319, 1.0
    %v349 = vadd.f32 %v321, 1.0
    %v350 = vadd.f32 %v323, 1.0
    %v351 = vadd.f32 %v325, 1.0
    %v352 = vadd.f32 %v327, 1.0
    %v353 = vadd.f32 %v329, 1.0
    %v354 = vadd.f32 %v331, 1.0
    %v355 = vadd.f32 %v333, 1.0
    %v356 = vadd.f32 %v335, 1.0
    %v357 = vadd.f32 %v337, 1.0
    %v358 = vadd.f32 %v339, 1.0
    %v359 = vadd.f32 %v341, 1.0
    %v360 = vadd.f32 %v343, 1.0
    %v361 = vadd.f32 %v345, 1.0
    %v362 = vrcp.pop %v346
    %v363 = vmul.f32 %v346, %v362
    %v364 = vsub.f32 1.0, %v363
    %v365 = vmul.f32 %v362, %v364
    %v366 = vadd.f32 %v362, %v365
    %vm367 = vweird.f32 %v346
    %vm368 = vweird.f32 %v362
    %vm369 = vmor %vm367, %vm368
    %v370 = vsel %vm369, %v362, %v366
    %v371 = vand.u32 2147483647, %v346
    %vm372 = vcmp.eq.f32.partialorder %v371, 8.507059e+37
    %v373 = vand.u32 %v346, 2147483648
    %v374 = vor.u32 1.1754944e-38, %v373
    %v375 = vsel %vm372, %v374, %v370
    %v376 = vmul.f32 1.0, %v375
    %v377 = vrcp.pop %v347
    %v378 = vmul.f32 %v347, %v377
    %v379 = vsub.f32 1.0, %v378
    %v380 = vmul.f32 %v377, %v379
    %v381 = vadd.f32 %v377, %v380
    %vm382 = vweird.f32 %v347
    %vm383 = vweird.f32 %v377
    %vm384 = vmor %vm382, %vm383
    %v385 = vsel %vm384, %v377, %v381
    %v386 = vand.u32 2147483647, %v347
    %vm387 = vcmp.eq.f32.partialorder %v386, 8.507059e+37
    %v388 = vand.u32 %v347, 2147483648
    %v389 = vor.u32 1.1754944e-38, %v388
    %v390 = vsel %vm387, %v389, %v385
    %v391 = vmul.f32 1.0, %v390
    %v392 = vrcp.pop %v348
    %v393 = vmul.f32 %v348, %v392
    %v394 = vsub.f32 1.0, %v393
    %v395 = vmul.f32 %v392, %v394
    %v396 = vadd.f32 %v392, %v395
    %vm397 = vweird.f32 %v348
    %vm398 = vweird.f32 %v392
    %vm399 = vmor %vm397, %vm398
    %v400 = vsel %vm399, %v392, %v396
    %v401 = vand.u32 2147483647, %v348
    %vm402 = vcmp.eq.f32.partialorder %v401, 8.507059e+37
    %v403 = vand.u32 %v348, 2147483648
    %v404 = vor.u32 1.1754944e-38, %v403
    %v405 = vsel %vm402, %v404, %v400
    %v406 = vmul.f32 1.0, %v405
    %v407 = vrcp.pop %v349
    %v408 = vmul.f32 %v349, %v407
    %v409 = vsub.f32 1.0, %v408
    %v410 = vmul.f32 %v407, %v409
    %v411 = vadd.f32 %v407, %v410
    %vm412 = vweird.f32 %v349
    %vm413 = vweird.f32 %v407
    %vm414 = vmor %vm412, %vm413
    %v415 = vsel %vm414, %v407, %v411
    %v416 = vand.u32 2147483647, %v349
    %vm417 = vcmp.eq.f32.partialorder %v416, 8.507059e+37
    %v418 = vand.u32 %v349, 2147483648
    %v419 = vor.u32 1.1754944e-38, %v418
    %v420 = vsel %vm417, %v419, %v415
    %v421 = vmul.f32 1.0, %v420
    %v422 = vrcp.pop %v350
    %v423 = vmul.f32 %v350, %v422
    %v424 = vsub.f32 1.0, %v423
    %v425 = vmul.f32 %v422, %v424
    %v426 = vadd.f32 %v422, %v425
    %vm427 = vweird.f32 %v350
    %vm428 = vweird.f32 %v422
    %vm429 = vmor %vm427, %vm428
    %v430 = vsel %vm429, %v422, %v426
    %v431 = vand.u32 2147483647, %v350
    %vm432 = vcmp.eq.f32.partialorder %v431, 8.507059e+37
    %v433 = vand.u32 %v350, 2147483648
    %v434 = vor.u32 1.1754944e-38, %v433
    %v435 = vsel %vm432, %v434, %v430
    %v436 = vmul.f32 1.0, %v435
    %v437 = vrcp.pop %v351
    %v438 = vmul.f32 %v351, %v437
    %v439 = vsub.f32 1.0, %v438
    %v440 = vmul.f32 %v437, %v439
    %v441 = vadd.f32 %v437, %v440
    %vm442 = vweird.f32 %v351
    %vm443 = vweird.f32 %v437
    %vm444 = vmor %vm442, %vm443
    %v445 = vsel %vm444, %v437, %v441
    %v446 = vand.u32 2147483647, %v351
    %vm447 = vcmp.eq.f32.partialorder %v446, 8.507059e+37
    %v448 = vand.u32 %v351, 2147483648
    %v449 = vor.u32 1.1754944e-38, %v448
    %v450 = vsel %vm447, %v449, %v445
    %v451 = vmul.f32 1.0, %v450
    %v452 = vrcp.pop %v352
    %v453 = vmul.f32 %v352, %v452
    %v454 = vsub.f32 1.0, %v453
    %v455 = vmul.f32 %v452, %v454
    %v456 = vadd.f32 %v452, %v455
    %vm457 = vweird.f32 %v352
    %vm458 = vweird.f32 %v452
    %vm459 = vmor %vm457, %vm458
    %v460 = vsel %vm459, %v452, %v456
    %v461 = vand.u32 2147483647, %v352
    %vm462 = vcmp.eq.f32.partialorder %v461, 8.507059e+37
    %v463 = vand.u32 %v352, 2147483648
    %v464 = vor.u32 1.1754944e-38, %v463
    %v465 = vsel %vm462, %v464, %v460
    %v466 = vmul.f32 1.0, %v465
    %v467 = vrcp.pop %v353
    %v468 = vmul.f32 %v353, %v467
    %v469 = vsub.f32 1.0, %v468
    %v470 = vmul.f32 %v467, %v469
    %v471 = vadd.f32 %v467, %v470
    %vm472 = vweird.f32 %v353
    %vm473 = vweird.f32 %v467
    %vm474 = vmor %vm472, %vm473
    %v475 = vsel %vm474, %v467, %v471
    %v476 = vand.u32 2147483647, %v353
    %vm477 = vcmp.eq.f32.partialorder %v476, 8.507059e+37
    %v478 = vand.u32 %v353, 2147483648
    %v479 = vor.u32 1.1754944e-38, %v478
    %v480 = vsel %vm477, %v479, %v475
    %v481 = vmul.f32 1.0, %v480
    %v482 = vrcp.pop %v354
    %v483 = vmul.f32 %v354, %v482
    %v484 = vsub.f32 1.0, %v483
    %v485 = vmul.f32 %v482, %v484
    %v486 = vadd.f32 %v482, %v485
    %vm487 = vweird.f32 %v354
    %vm488 = vweird.f32 %v482
    %vm489 = vmor %vm487, %vm488
    %v490 = vsel %vm489, %v482, %v486
    %v491 = vand.u32 2147483647, %v354
    %vm492 = vcmp.eq.f32.partialorder %v491, 8.507059e+37
    %v493 = vand.u32 %v354, 2147483648
    %v494 = vor.u32 1.1754944e-38, %v493
    %v495 = vsel %vm492, %v494, %v490
    %v496 = vmul.f32 1.0, %v495
    %v497 = vrcp.pop %v355
    %v498 = vmul.f32 %v355, %v497
    %v499 = vsub.f32 1.0, %v498
    %v500 = vmul.f32 %v497, %v499
    %v501 = vadd.f32 %v497, %v500
    %vm502 = vweird.f32 %v355
    %vm503 = vweird.f32 %v497
    %vm504 = vmor %vm502, %vm503
    %v505 = vsel %vm504, %v497, %v501
    %v506 = vand.u32 2147483647, %v355
    %vm507 = vcmp.eq.f32.partialorder %v506, 8.507059e+37
    %v508 = vand.u32 %v355, 2147483648
    %v509 = vor.u32 1.1754944e-38, %v508
    %v510 = vsel %vm507, %v509, %v505
    %v511 = vmul.f32 1.0, %v510
    %v512 = vrcp.pop %v356
    %v513 = vmul.f32 %v356, %v512
    %v514 = vsub.f32 1.0, %v513
    %v515 = vmul.f32 %v512, %v514
    %v516 = vadd.f32 %v512, %v515
    %vm517 = vweird.f32 %v356
    %vm518 = vweird.f32 %v512
    %vm519 = vmor %vm517, %vm518
    %v520 = vsel %vm519, %v512, %v516
    %v521 = vand.u32 2147483647, %v356
    %vm522 = vcmp.eq.f32.partialorder %v521, 8.507059e+37
    %v523 = vand.u32 %v356, 2147483648
    %v524 = vor.u32 1.1754944e-38, %v523
    %v525 = vsel %vm522, %v524, %v520
    %v526 = vmul.f32 1.0, %v525
    %v527 = vrcp.pop %v357
    %v528 = vmul.f32 %v357, %v527
    %v529 = vsub.f32 1.0, %v528
    %v530 = vmul.f32 %v527, %v529
    %v531 = vadd.f32 %v527, %v530
    %vm532 = vweird.f32 %v357
    %vm533 = vweird.f32 %v527
    %vm534 = vmor %vm532, %vm533
    %v535 = vsel %vm534, %v527, %v531
    %v536 = vand.u32 2147483647, %v357
    %vm537 = vcmp.eq.f32.partialorder %v536, 8.507059e+37
    %v538 = vand.u32 %v357, 2147483648
    %v539 = vor.u32 1.1754944e-38, %v538
    %v540 = vsel %vm537, %v539, %v535
    %v541 = vmul.f32 1.0, %v540
    %v542 = vrcp.pop %v358
    %v543 = vmul.f32 %v358, %v542
    %v544 = vsub.f32 1.0, %v543
    %v545 = vmul.f32 %v542, %v544
    %v546 = vadd.f32 %v542, %v545
    %vm547 = vweird.f32 %v358
    %vm548 = vweird.f32 %v542
    %vm549 = vmor %vm547, %vm548
    %v550 = vsel %vm549, %v542, %v546
    %v551 = vand.u32 2147483647, %v358
    %vm552 = vcmp.eq.f32.partialorder %v551, 8.507059e+37
    %v553 = vand.u32 %v358, 2147483648
    %v554 = vor.u32 1.1754944e-38, %v553
    %v555 = vsel %vm552, %v554, %v550
    %v556 = vmul.f32 1.0, %v555
    %v557 = vrcp.pop %v359
    %v558 = vmul.f32 %v359, %v557
    %v559 = vsub.f32 1.0, %v558
    %v560 = vmul.f32 %v557, %v559
    %v561 = vadd.f32 %v557, %v560
    %vm562 = vweird.f32 %v359
    %vm563 = vweird.f32 %v557
    %vm564 = vmor %vm562, %vm563
    %v565 = vsel %vm564, %v557, %v561
    %v566 = vand.u32 2147483647, %v359
    %vm567 = vcmp.eq.f32.partialorder %v566, 8.507059e+37
    %v568 = vand.u32 %v359, 2147483648
    %v569 = vor.u32 1.1754944e-38, %v568
    %v570 = vsel %vm567, %v569, %v565
    %v571 = vmul.f32 1.0, %v570
    %v572 = vrcp.pop %v360
    %v573 = vmul.f32 %v360, %v572
    %v574 = vsub.f32 1.0, %v573
    %v575 = vmul.f32 %v572, %v574
    %v576 = vadd.f32 %v572, %v575
    %vm577 = vweird.f32 %v360
    %vm578 = vweird.f32 %v572
    %vm579 = vmor %vm577, %vm578
    %v580 = vsel %vm579, %v572, %v576
    %v581 = vand.u32 2147483647, %v360
    %vm582 = vcmp.eq.f32.partialorder %v581, 8.507059e+37
    %v583 = vand.u32 %v360, 2147483648
    %v584 = vor.u32 1.1754944e-38, %v583
    %v585 = vsel %vm582, %v584, %v580
    %v586 = vmul.f32 1.0, %v585
    %v587 = vrcp.pop %v361
    %v588 = vmul.f32 %v361, %v587
    %v589 = vsub.f32 1.0, %v588
    %v590 = vmul.f32 %v587, %v589
    %v591 = vadd.f32 %v587, %v590
    %vm592 = vweird.f32 %v361
    %vm593 = vweird.f32 %v587
    %vm594 = vmor %vm592, %vm593
    %v595 = vsel %vm594, %v587, %v591
    %v596 = vand.u32 2147483647, %v361
    %vm597 = vcmp.eq.f32.partialorder %v596, 8.507059e+37
    %v598 = vand.u32 %v361, 2147483648
    %v599 = vor.u32 1.1754944e-38, %v598
    %v600 = vsel %vm597, %v599, %v595
    %v601 = vmul.f32 1.0, %v600
    %602 = vst [vmem:[%s3] sm:$0xff] %v376
    %603 = vst [vmem:[%s3 + $0x8] sm:$0xff] %v391
    %604 = vst [vmem:[%s3 + $0x10] sm:$0xff] %v406
    %605 = vst [vmem:[%s3 + $0x18] sm:$0xff] %v421
    %606 = vst [vmem:[%s3 + $0x20] sm:$0xff] %v436
    %607 = vst [vmem:[%s3 + $0x28] sm:$0xff] %v451
    %608 = vst [vmem:[%s3 + $0x30] sm:$0xff] %v466
    %609 = vst [vmem:[%s3 + $0x38] sm:$0xff] %v481
    %610 = vst [vmem:[%s3 + $0x40] sm:$0xff] %v496
    %611 = vst [vmem:[%s3 + $0x48] sm:$0xff] %v511
    %612 = vst [vmem:[%s3 + $0x50] sm:$0xff] %v526
    %613 = vst [vmem:[%s3 + $0x58] sm:$0xff] %v541
    %614 = vst [vmem:[%s3 + $0x60] sm:$0xff] %v556
    %615 = vst [vmem:[%s3 + $0x68] sm:$0xff] %v571
    %616 = vst [vmem:[%s3 + $0x70] sm:$0xff] %v586
    %617 = vst [vmem:[%s3 + $0x78] sm:$0xff] %v601
  $region21: #{detr_forward.101} parent=0 // pred_fallthru
    _
  // Predicated region
  $region22: #{detr_forward.101} parent=0 // pred_check
    _
  $region23: #{detr_forward.101} parent=0 // pred_check_branch
    %619 = sbr.rel (0) target = $region25
  $region24: #{detr_forward.101} parent=0 // pred_region
    _
  $region25: #{detr_forward.101} parent=0 // pred_fallthru
    _
  // Predicated region
  $region26: #{detr_forward.101} parent=0 // pred_check
    _
  $region27: #{detr_forward.101} parent=0 // pred_check_branch
    %621 = sbr.rel (0) target = $region29
  $region28: #{detr_forward.101} parent=0 // pred_region
    _
  $region29: #{detr_forward.101} parent=0 // pred_fallthru
    _

</llo_original>
